<compile_context>
chip_gen: v6e
topology: v6e:2x2x1
jax: 0.10.0
libtpu: 0.0.40
codegen_flags: <defaults>
</compile_context>

<pallas_src>
from functools import partial

import jax
import jax.numpy as jnp
from jax import lax
from jax.experimental import pallas as pl
from jax.experimental.pallas import tpu as pltpu


def _sigmoid(x):
    # sigmoid(x) == 0.5 * (tanh(x/2) + 1): a single EUP transcendental per
    # sigmoid instead of an exp + reciprocal expansion.
    return 0.5 * (jnp.tanh(0.5 * x) + 1.0)


# -----------------------------------------------------------------------------
# One full LSTM stack (+ fused dropout [+ FC head]) per pallas_call.
# Grid iterates over time chunks; all `stacked` layers are processed per chunk.
# Gate order matches PyTorch: i, f, g, o.
# -----------------------------------------------------------------------------
def _lstm_stack_kernel(*refs, stacked, hidden, batch, t_chunk, mode):
    """refs layout:
      inputs : x_chunk, (w_ih, w_hh, bias) * stacked, mask,
               [fc_w, fc_b]                       (mode == "final" only)
      output : y_chunk (mode == "seq")  or  fc_out (mode == "final")
      scratch: h_state (stacked,B,H), c_state (stacked,B,H),
               xp (t_chunk*B, 4H), act (t_chunk, B, H)
    """
    H, B = hidden, batch
    n_in = 1 + 3 * stacked + 1 + (2 if mode == "final" else 0)
    in_refs = refs[:n_in]
    out_ref = refs[n_in]
    h_scr, c_scr, xp_scr, act_scr = refs[n_in + 1:]

    x_ref = in_refs[0]
    mask_ref = in_refs[1 + 3 * stacked]

    ck = pl.program_id(0)

    @pl.when(ck == 0)
    def _init():
        h_scr[...] = jnp.zeros_like(h_scr)
        c_scr[...] = jnp.zeros_like(c_scr)

    h_top = None
    for l in range(stacked):
        w_ih = in_refs[1 + 3 * l][...]            # (in_l, 4H)
        w_hh = in_refs[2 + 3 * l][...]            # (H,   4H)
        bias = in_refs[3 + 3 * l][...]            # (1,   4H)

        # Layer input for this chunk: raw x for layer 0, previous layer's
        # chunk output (kept in VMEM scratch, never touching HBM) otherwise.
        lin = x_ref[...] if l == 0 else act_scr[...]      # (t_chunk, B, in_l)
        in_dim = lin.shape[-1]

        # Hoisted input projection for the whole chunk: one MXU matmul with
        # M = t_chunk * B rows, outside the latency-critical recurrence.
        xp_scr[...] = (
            jnp.dot(lin.reshape(t_chunk * B, in_dim), w_ih,
                    preferred_element_type=jnp.float32)
            + bias)

        is_last = l == stacked - 1

        def step(s, carry, w_hh=w_hh, is_last=is_last):
            h_prev, c_prev = carry
            gates = xp_scr[pl.ds(s * B, B), :] + jnp.dot(
                h_prev, w_hh, preferred_element_type=jnp.float32)   # (B, 4H)
            i_g = _sigmoid(gates[:, 0 * H:1 * H])
            f_g = _sigmoid(gates[:, 1 * H:2 * H])
            g_g = jnp.tanh(gates[:, 2 * H:3 * H])
            o_g = _sigmoid(gates[:, 3 * H:4 * H])
            c_new = f_g * c_prev + i_g * g_g
            h_new = o_g * jnp.tanh(c_new)
            if is_last and mode == "seq":
                # Fused MC dropout on the stack output (pre-scaled keep mask).
                out_ref[s] = (h_new * mask_ref[s]).astype(out_ref.dtype)
            elif not is_last:
                act_scr[s] = h_new
            # mode == "final", last layer: only the final h is consumed.
            return h_new, c_new

        h_fin, c_fin = lax.fori_loop(0, t_chunk, step,
                                     (h_scr[l], c_scr[l]), unroll=True)
        h_scr[l] = h_fin
        c_scr[l] = c_fin
        h_top = h_fin

    if mode == "final":
        fcw_ref = in_refs[2 + 3 * stacked]
        fcb_ref = in_refs[3 + 3 * stacked]

        @pl.when(ck == pl.num_programs(0) - 1)
        def _epilogue():
            # Last-step MC dropout + FC head, fused: avoids a full (T,B,H)
            # dropout pass, the h[-1] HBM round-trip and a separate FC kernel.
            h_drop = h_top * mask_ref[...]
            out_ref[...] = (
                jnp.dot(h_drop, fcw_ref[...],
                        preferred_element_type=jnp.float32)
                + fcb_ref[...]).astype(out_ref.dtype)


def _largest_chunk(t, cap=16):
    c = min(t, cap)
    while t % c:
        c -= 1
    return c


def _run_lstm_stack(x_tbi, layers, mask, *, mode, fc_w_t=None, fc_b=None,
                    t_chunk_cap=16):
    """x_tbi: (T, B, in0) time-major.  Returns (T, B, H) ["seq"] or (B, out) ["final"]."""
    T, B, in0 = x_tbi.shape
    H = layers[0]["w_hh_t"].shape[0]
    stacked = len(layers)
    t_chunk = _largest_chunk(T, t_chunk_cap)
    n_chunks = T // t_chunk

    chunk_map = lambda ck: (ck, 0, 0)     # time-chunked blocks
    const2_map = lambda ck: (0, 0)        # weights / small tensors, resident

    args = [x_tbi]
    in_specs = [pl.BlockSpec((t_chunk, B, in0), chunk_map)]
    for l, layer in enumerate(layers):
        in_l = in0 if l == 0 else H
        args += [layer["w_ih_t"], layer["w_hh_t"], layer["bias"]]
        in_specs += [
            pl.BlockSpec((in_l, 4 * H), const2_map),
            pl.BlockSpec((H, 4 * H), const2_map),
            pl.BlockSpec((1, 4 * H), const2_map),
        ]

    args.append(mask)
    if mode == "seq":
        in_specs.append(pl.BlockSpec((t_chunk, B, H), chunk_map))
        out_specs = pl.BlockSpec((t_chunk, B, H), chunk_map)
        out_shape = jax.ShapeDtypeStruct((T, B, H), jnp.float32)
    else:
        out_len = fc_w_t.shape[1]
        in_specs.append(pl.BlockSpec((B, H), const2_map))        # last-step mask
        args += [fc_w_t, fc_b]
        in_specs += [pl.BlockSpec((H, out_len), const2_map),
                     pl.BlockSpec((1, out_len), const2_map)]
        out_specs = pl.BlockSpec((B, out_len), const2_map)
        out_shape = jax.ShapeDtypeStruct((B, out_len), jnp.float32)

    kernel = partial(_lstm_stack_kernel, stacked=stacked, hidden=H,
                     batch=B, t_chunk=t_chunk, mode=mode)

    return pl.pallas_call(
        kernel,
        out_shape=out_shape,
        grid_spec=pltpu.PrefetchScalarGridSpec(
            num_scalar_prefetch=0,
            grid=(n_chunks,),
            in_specs=in_specs,
            out_specs=out_specs,
            scratch_shapes=[
                pltpu.VMEM((stacked, B, H), jnp.float32),        # h per layer
                pltpu.VMEM((stacked, B, H), jnp.float32),        # c per layer
                pltpu.VMEM((t_chunk * B, 4 * H), jnp.float32),   # hoisted x-proj
                pltpu.VMEM((t_chunk, B, H), jnp.float32),        # inter-layer act
            ]),
        compiler_params=pltpu.CompilerParams(
            dimension_semantics=("arbitrary",),        # carried recurrence
            vmem_limit_bytes=64 * 1024 * 1024),        # headroom for larger H
    )(*args)


# -----------------------------------------------------------------------------
# Parameter construction (PyTorch-style uniform(-1/sqrt(H), 1/sqrt(H))).
# -----------------------------------------------------------------------------
def _init_lstm_stack(key, input_size, hidden_size, num_layers):
    layers = []
    bound = 1.0 / (hidden_size ** 0.5)
    for layer_idx in range(num_layers):
        in_sz = input_size if layer_idx == 0 else hidden_size
        key, k1, k2, k3, k4 = jax.random.split(key, 5)
        w_ih = jax.random.uniform(k1, (4 * hidden_size, in_sz),
                                  jnp.float32, -bound, bound)
        w_hh = jax.random.uniform(k2, (4 * hidden_size, hidden_size),
                                  jnp.float32, -bound, bound)
        b_ih = jax.random.uniform(k3, (4 * hidden_size,),
                                  jnp.float32, -bound, bound)
        b_hh = jax.random.uniform(k4, (4 * hidden_size,),
                                  jnp.float32, -bound, bound)
        layers.append({
            "w_ih_t": w_ih.T,                              # (in, 4H)
            "w_hh_t": w_hh.T,                              # (H, 4H)
            "bias": (b_ih + b_hh)[None, :],                # (1, 4H)
        })
    return layers, key


def init_params(key, n_features, output_length, hidden1, hidden2, stacked):
    lstm1, key = _init_lstm_stack(key, n_features, hidden1, stacked)
    lstm2, key = _init_lstm_stack(key, hidden1, hidden2, stacked)
    bound = 1.0 / (hidden2 ** 0.5)
    key, kw, kb = jax.random.split(key, 3)
    fc_w = jax.random.uniform(kw, (output_length, hidden2),
                              jnp.float32, -bound, bound)
    fc_b = jax.random.uniform(kb, (output_length,),
                              jnp.float32, -bound, bound)
    return {
        "lstm1": lstm1,
        "lstm2": lstm2,
        "fc_w_t": fc_w.T,                                  # (H2, out_len)
        "fc_b": fc_b[None, :],                             # (1, out_len)
    }


# -----------------------------------------------------------------------------
# BayesianLSTM forward: lstm1 stack -> dropout -> lstm2 stack -> dropout(last)
# -> fc.  Exactly two pallas_calls.
# -----------------------------------------------------------------------------
def bayesian_lstm_forward(params, x_bti, dropout_key, dropout_p=0.5):
    """x_bti: (batch, seq, n_features) -> (batch, output_length)."""
    B, T, _ = x_bti.shape
    # Single tiny transpose of the raw input (negligible vs. hidden-state
    # traffic); every inter-layer activation is produced time-major by the
    # kernels, so no further transposes occur.
    x_tbi = jnp.transpose(x_bti, (1, 0, 2)).astype(jnp.float32)

    H1 = params["lstm1"][0]["w_hh_t"].shape[0]
    H2 = params["lstm2"][0]["w_hh_t"].shape[0]

    k1, k2 = jax.random.split(dropout_key)
    scale = 1.0 / (1.0 - dropout_p)
    # Pre-scaled inverted dropout masks (MC dropout, training=True).  The
    # second mask covers only the last time step -- the only one consumed
    # downstream, so the result distribution is identical to F.dropout on the
    # full sequence followed by output[:, -1, :].
    # TODO(synk): switch to in-kernel pltpu.prng_random_bits once the hardware
    # PRNG has an interpret/CPU lowering; built host-side for portability.
    mask1 = (jax.random.uniform(k1, (T, B, H1)) >= dropout_p
             ).astype(jnp.float32) * scale
    mask2 = (jax.random.uniform(k2, (B, H2)) >= dropout_p
             ).astype(jnp.float32) * scale

    h1 = _run_lstm_stack(x_tbi, params["lstm1"], mask1, mode="seq")
    y_pred = _run_lstm_stack(h1, params["lstm2"], mask2, mode="final",
                             fc_w_t=params["fc_w_t"], fc_b=params["fc_b"])
    return y_pred                                          # (batch, output_length)


if __name__ == "__main__":
    # Small, module-consistent shapes.
    batch = 2
    seq_len = 8
    n_features = 4
    hidden1 = 32
    hidden2 = 32
    stacked = 2
    output_length = 2

    key = jax.random.PRNGKey(0)
    key, kx, kdrop = jax.random.split(key, 3)
    x = jax.random.normal(kx, (batch, seq_len, n_features), dtype=jnp.float32)

    params = init_params(key, n_features, output_length, hidden1, hidden2, stacked)

    y = bayesian_lstm_forward(params, x, dropout_key=kdrop)
    y = jax.block_until_ready(y)

    assert y.shape == (batch, output_length), y.shape
    assert bool(jnp.all(jnp.isfinite(y)))
    print("KERNEL_OK")
</pallas_src>

<mosaic_0001>
module attributes {stable_mosaic.version = 11 : i64} {
  func.func @_lstm_stack_kernel(%arg0: i32, %arg1: memref<8x2x4xf32, #tpu.memory_space<vmem>>, %arg2: memref<4x128xf32, #tpu.memory_space<vmem>>, %arg3: memref<32x128xf32, #tpu.memory_space<vmem>>, %arg4: memref<1x128xf32, #tpu.memory_space<vmem>>, %arg5: memref<32x128xf32, #tpu.memory_space<vmem>>, %arg6: memref<32x128xf32, #tpu.memory_space<vmem>>, %arg7: memref<1x128xf32, #tpu.memory_space<vmem>>, %arg8: memref<8x2x32xf32, #tpu.memory_space<vmem>>, %arg9: memref<8x2x32xf32, #tpu.memory_space<vmem>>, %arg10: memref<2x2x32xf32, #tpu.memory_space<vmem>>, %arg11: memref<2x2x32xf32, #tpu.memory_space<vmem>>, %arg12: memref<16x128xf32, #tpu.memory_space<vmem>>, %arg13: memref<8x2x32xf32, #tpu.memory_space<vmem>>) attributes {dimension_semantics = [#tpu.dimension_semantics<arbitrary>], iteration_bounds = array<i64: 1>, scalar_prefetch = 0 : i64, scratch_operands = 4 : i64, tpu.core_type = #tpu.core_type<tc>, window_params = [{transform_indices = @transform_0, window_bounds = array<i64: 8, 2, 4>}, {pipeline_mode = #tpu.pipeline_mode<synchronous>, transform_indices = @transform_1, window_bounds = array<i64: 4, 128>}, {pipeline_mode = #tpu.pipeline_mode<synchronous>, transform_indices = @transform_2, window_bounds = array<i64: 32, 128>}, {pipeline_mode = #tpu.pipeline_mode<synchronous>, transform_indices = @transform_3, window_bounds = array<i64: 1, 128>}, {pipeline_mode = #tpu.pipeline_mode<synchronous>, transform_indices = @transform_4, window_bounds = array<i64: 32, 128>}, {pipeline_mode = #tpu.pipeline_mode<synchronous>, transform_indices = @transform_5, window_bounds = array<i64: 32, 128>}, {pipeline_mode = #tpu.pipeline_mode<synchronous>, transform_indices = @transform_6, window_bounds = array<i64: 1, 128>}, {transform_indices = @transform_7, window_bounds = array<i64: 8, 2, 32>}, {transform_indices = @transform_8, window_bounds = array<i64: 8, 2, 32>}]} {
    %c0_i32 = arith.constant 0 : i32
    %0 = arith.cmpi eq, %arg0, %c0_i32 : i32
    %1 = arith.extui %0 : i1 to i32
    %c0_i32_0 = arith.constant 0 : i32
    %2 = arith.cmpi ne, %1, %c0_i32_0 : i32
    scf.if %2 {
      %cst_296 = arith.constant 0.000000e+00 : f32
      %713 = vector.broadcast %cst_296 : f32 to vector<2x2x32xf32>
      %c0_297 = arith.constant 0 : index
      %c0_298 = arith.constant 0 : index
      %c0_299 = arith.constant 0 : index
      %714 = vector.load %arg10[%c0_297, %c0_298, %c0_299] : memref<2x2x32xf32, #tpu.memory_space<vmem>>, vector<2x2x32xf32>
      tpu.vector_store %arg10[%c0_297, %c0_298, %c0_299], %713 {strides = array<i32>} : memref<2x2x32xf32, #tpu.memory_space<vmem>>, vector<2x2x32xf32>,
      %cst_300 = arith.constant 0.000000e+00 : f32
      %715 = vector.broadcast %cst_300 : f32 to vector<2x2x32xf32>
      %c0_301 = arith.constant 0 : index
      %c0_302 = arith.constant 0 : index
      %c0_303 = arith.constant 0 : index
      %716 = vector.load %arg11[%c0_301, %c0_302, %c0_303] : memref<2x2x32xf32, #tpu.memory_space<vmem>>, vector<2x2x32xf32>
      tpu.vector_store %arg11[%c0_301, %c0_302, %c0_303], %715 {strides = array<i32>} : memref<2x2x32xf32, #tpu.memory_space<vmem>>, vector<2x2x32xf32>,
    } else {
    }
    %c0 = arith.constant 0 : index
    %c0_1 = arith.constant 0 : index
    %3 = vector.load %arg2[%c0, %c0_1] : memref<4x128xf32, #tpu.memory_space<vmem>>, vector<4x128xf32>
    %c0_2 = arith.constant 0 : index
    %c0_3 = arith.constant 0 : index
    %4 = vector.load %arg3[%c0_2, %c0_3] : memref<32x128xf32, #tpu.memory_space<vmem>>, vector<32x128xf32>
    %c0_4 = arith.constant 0 : index
    %c0_5 = arith.constant 0 : index
    %5 = vector.load %arg4[%c0_4, %c0_5] : memref<1x128xf32, #tpu.memory_space<vmem>>, vector<1x128xf32>
    %c0_6 = arith.constant 0 : index
    %c0_7 = arith.constant 0 : index
    %c0_8 = arith.constant 0 : index
    %6 = vector.load %arg1[%c0_6, %c0_7, %c0_8] : memref<8x2x4xf32, #tpu.memory_space<vmem>>, vector<8x2x4xf32>
    %7 = vector.shape_cast %6 : vector<8x2x4xf32> to vector<16x4xf32>
    %cst = arith.constant dense<0.000000e+00> : vector<16x128xf32>
    %8 = tpu.matmul %7, %3, %cst {dimension_numbers = #tpu.dot_dimension_numbers<[1], [0], [0], [1], [0, 0, 1, 1], [], []>} : vector<16x4xf32>, vector<4x128xf32>, vector<16x128xf32> -> vector<16x128xf32>
    %9 = vector.broadcast %5 : vector<1x128xf32> to vector<16x128xf32>
    %10 = arith.addf %8, %9 : vector<16x128xf32>
    %c0_9 = arith.constant 0 : index
    %c0_10 = arith.constant 0 : index
    %11 = vector.load %arg12[%c0_9, %c0_10] : memref<16x128xf32, #tpu.memory_space<vmem>>, vector<16x128xf32>
    tpu.vector_store %arg12[%c0_9, %c0_10], %10 {strides = array<i32>} : memref<16x128xf32, #tpu.memory_space<vmem>>, vector<16x128xf32>,
    %c0_11 = arith.constant 0 : index
    %c0_12 = arith.constant 0 : index
    %c0_13 = arith.constant 0 : index
    %12 = vector.load %arg10[%c0_11, %c0_12, %c0_13] : memref<2x2x32xf32, #tpu.memory_space<vmem>>, vector<1x2x32xf32>
    %13 = vector.shape_cast %12 : vector<1x2x32xf32> to vector<2x32xf32>
    %c0_14 = arith.constant 0 : index
    %c0_15 = arith.constant 0 : index
    %c0_16 = arith.constant 0 : index
    %14 = vector.load %arg11[%c0_14, %c0_15, %c0_16] : memref<2x2x32xf32, #tpu.memory_space<vmem>>, vector<1x2x32xf32>
    %15 = vector.shape_cast %14 : vector<1x2x32xf32> to vector<2x32xf32>
    %c0_i32_17 = arith.constant 0 : i32
    %c2_i32 = arith.constant 2 : i32
    %16 = arith.muli %c0_i32_17, %c2_i32 : i32
    %17 = arith.index_cast %16 : i32 to index
    %c0_18 = arith.constant 0 : index
    %18 = vector.load %arg12[%17, %c0_18] : memref<16x128xf32, #tpu.memory_space<vmem>>, vector<2x128xf32>
    %cst_19 = arith.constant dense<0.000000e+00> : vector<2x128xf32>
    %19 = tpu.matmul %13, %4, %cst_19 {dimension_numbers = #tpu.dot_dimension_numbers<[1], [0], [0], [1], [0, 0, 1, 1], [], []>} : vector<2x32xf32>, vector<32x128xf32>, vector<2x128xf32> -> vector<2x128xf32>
    %20 = arith.addf %18, %19 : vector<2x128xf32>
    %21 = vector.extract_strided_slice %20 {offsets = [0, 0], sizes = [2, 32], strides = [1, 1]} : vector<2x128xf32> to vector<2x32xf32>
    %cst_20 = arith.constant 5.000000e-01 : f32
    %22 = vector.broadcast %cst_20 : f32 to vector<2x32xf32>
    %23 = arith.mulf %22, %21 : vector<2x32xf32>
    %24 = math.tanh %23 : vector<2x32xf32>
    %cst_21 = arith.constant 1.000000e+00 : f32
    %25 = vector.broadcast %cst_21 : f32 to vector<2x32xf32>
    %26 = arith.addf %24, %25 : vector<2x32xf32>
    %cst_22 = arith.constant 5.000000e-01 : f32
    %27 = vector.broadcast %cst_22 : f32 to vector<2x32xf32>
    %28 = arith.mulf %27, %26 : vector<2x32xf32>
    %29 = vector.extract_strided_slice %20 {offsets = [0, 32], sizes = [2, 32], strides = [1, 1]} : vector<2x128xf32> to vector<2x32xf32>
    %cst_23 = arith.constant 5.000000e-01 : f32
    %30 = vector.broadcast %cst_23 : f32 to vector<2x32xf32>
    %31 = arith.mulf %30, %29 : vector<2x32xf32>
    %32 = math.tanh %31 : vector<2x32xf32>
    %cst_24 = arith.constant 1.000000e+00 : f32
    %33 = vector.broadcast %cst_24 : f32 to vector<2x32xf32>
    %34 = arith.addf %32, %33 : vector<2x32xf32>
    %cst_25 = arith.constant 5.000000e-01 : f32
    %35 = vector.broadcast %cst_25 : f32 to vector<2x32xf32>
    %36 = arith.mulf %35, %34 : vector<2x32xf32>
    %37 = vector.extract_strided_slice %20 {offsets = [0, 64], sizes = [2, 32], strides = [1, 1]} : vector<2x128xf32> to vector<2x32xf32>
    %38 = math.tanh %37 : vector<2x32xf32>
    %39 = vector.extract_strided_slice %20 {offsets = [0, 96], sizes = [2, 32], strides = [1, 1]} : vector<2x128xf32> to vector<2x32xf32>
    %cst_26 = arith.constant 5.000000e-01 : f32
    %40 = vector.broadcast %cst_26 : f32 to vector<2x32xf32>
    %41 = arith.mulf %40, %39 : vector<2x32xf32>
    %42 = math.tanh %41 : vector<2x32xf32>
    %cst_27 = arith.constant 1.000000e+00 : f32
    %43 = vector.broadcast %cst_27 : f32 to vector<2x32xf32>
    %44 = arith.addf %42, %43 : vector<2x32xf32>
    %cst_28 = arith.constant 5.000000e-01 : f32
    %45 = vector.broadcast %cst_28 : f32 to vector<2x32xf32>
    %46 = arith.mulf %45, %44 : vector<2x32xf32>
    %47 = arith.mulf %36, %15 : vector<2x32xf32>
    %48 = arith.mulf %28, %38 : vector<2x32xf32>
    %49 = arith.addf %47, %48 : vector<2x32xf32>
    %50 = math.tanh %49 : vector<2x32xf32>
    %51 = arith.mulf %46, %50 : vector<2x32xf32>
    %52 = arith.index_cast %c0_i32_17 : i32 to index
    %c0_29 = arith.constant 0 : index
    %c0_30 = arith.constant 0 : index
    %53 = vector.load %arg13[%52, %c0_29, %c0_30] : memref<8x2x32xf32, #tpu.memory_space<vmem>>, vector<1x2x32xf32>
    %54 = vector.shape_cast %53 : vector<1x2x32xf32> to vector<2x32xf32>
    %55 = vector.shape_cast %51 : vector<2x32xf32> to vector<1x2x32xf32>
    tpu.vector_store %arg13[%52, %c0_29, %c0_30], %55 {strides = array<i32>} : memref<8x2x32xf32, #tpu.memory_space<vmem>>, vector<1x2x32xf32>,
    %c1_i32 = arith.constant 1 : i32
    %c2_i32_31 = arith.constant 2 : i32
    %56 = arith.muli %c1_i32, %c2_i32_31 : i32
    %57 = arith.index_cast %56 : i32 to index
    %c0_32 = arith.constant 0 : index
    %58 = vector.load %arg12[%57, %c0_32] : memref<16x128xf32, #tpu.memory_space<vmem>>, vector<2x128xf32>
    %cst_33 = arith.constant dense<0.000000e+00> : vector<2x128xf32>
    %59 = tpu.matmul %51, %4, %cst_33 {dimension_numbers = #tpu.dot_dimension_numbers<[1], [0], [0], [1], [0, 0, 1, 1], [], []>} : vector<2x32xf32>, vector<32x128xf32>, vector<2x128xf32> -> vector<2x128xf32>
    %60 = arith.addf %58, %59 : vector<2x128xf32>
    %61 = vector.extract_strided_slice %60 {offsets = [0, 0], sizes = [2, 32], strides = [1, 1]} : vector<2x128xf32> to vector<2x32xf32>
    %cst_34 = arith.constant 5.000000e-01 : f32
    %62 = vector.broadcast %cst_34 : f32 to vector<2x32xf32>
    %63 = arith.mulf %62, %61 : vector<2x32xf32>
    %64 = math.tanh %63 : vector<2x32xf32>
    %cst_35 = arith.constant 1.000000e+00 : f32
    %65 = vector.broadcast %cst_35 : f32 to vector<2x32xf32>
    %66 = arith.addf %64, %65 : vector<2x32xf32>
    %cst_36 = arith.constant 5.000000e-01 : f32
    %67 = vector.broadcast %cst_36 : f32 to vector<2x32xf32>
    %68 = arith.mulf %67, %66 : vector<2x32xf32>
    %69 = vector.extract_strided_slice %60 {offsets = [0, 32], sizes = [2, 32], strides = [1, 1]} : vector<2x128xf32> to vector<2x32xf32>
    %cst_37 = arith.constant 5.000000e-01 : f32
    %70 = vector.broadcast %cst_37 : f32 to vector<2x32xf32>
    %71 = arith.mulf %70, %69 : vector<2x32xf32>
    %72 = math.tanh %71 : vector<2x32xf32>
    %cst_38 = arith.constant 1.000000e+00 : f32
    %73 = vector.broadcast %cst_38 : f32 to vector<2x32xf32>
    %74 = arith.addf %72, %73 : vector<2x32xf32>
    %cst_39 = arith.constant 5.000000e-01 : f32
    %75 = vector.broadcast %cst_39 : f32 to vector<2x32xf32>
    %76 = arith.mulf %75, %74 : vector<2x32xf32>
    %77 = vector.extract_strided_slice %60 {offsets = [0, 64], sizes = [2, 32], strides = [1, 1]} : vector<2x128xf32> to vector<2x32xf32>
    %78 = math.tanh %77 : vector<2x32xf32>
    %79 = vector.extract_strided_slice %60 {offsets = [0, 96], sizes = [2, 32], strides = [1, 1]} : vector<2x128xf32> to vector<2x32xf32>
    %cst_40 = arith.constant 5.000000e-01 : f32
    %80 = vector.broadcast %cst_40 : f32 to vector<2x32xf32>
    %81 = arith.mulf %80, %79 : vector<2x32xf32>
    %82 = math.tanh %81 : vector<2x32xf32>
    %cst_41 = arith.constant 1.000000e+00 : f32
    %83 = vector.broadcast %cst_41 : f32 to vector<2x32xf32>
    %84 = arith.addf %82, %83 : vector<2x32xf32>
    %cst_42 = arith.constant 5.000000e-01 : f32
    %85 = vector.broadcast %cst_42 : f32 to vector<2x32xf32>
    %86 = arith.mulf %85, %84 : vector<2x32xf32>
    %87 = arith.mulf %76, %49 : vector<2x32xf32>
    %88 = arith.mulf %68, %78 : vector<2x32xf32>
    %89 = arith.addf %87, %88 : vector<2x32xf32>
    %90 = math.tanh %89 : vector<2x32xf32>
    %91 = arith.mulf %86, %90 : vector<2x32xf32>
    %92 = arith.index_cast %c1_i32 : i32 to index
    %c0_43 = arith.constant 0 : index
    %c0_44 = arith.constant 0 : index
    %93 = vector.load %arg13[%92, %c0_43, %c0_44] : memref<8x2x32xf32, #tpu.memory_space<vmem>>, vector<1x2x32xf32>
    %94 = vector.shape_cast %93 : vector<1x2x32xf32> to vector<2x32xf32>
    %95 = vector.shape_cast %91 : vector<2x32xf32> to vector<1x2x32xf32>
    tpu.vector_store %arg13[%92, %c0_43, %c0_44], %95 {strides = array<i32>} : memref<8x2x32xf32, #tpu.memory_space<vmem>>, vector<1x2x32xf32>,
    %c2_i32_45 = arith.constant 2 : i32
    %c2_i32_46 = arith.constant 2 : i32
    %96 = arith.muli %c2_i32_45, %c2_i32_46 : i32
    %97 = arith.index_cast %96 : i32 to index
    %c0_47 = arith.constant 0 : index
    %98 = vector.load %arg12[%97, %c0_47] : memref<16x128xf32, #tpu.memory_space<vmem>>, vector<2x128xf32>
    %cst_48 = arith.constant dense<0.000000e+00> : vector<2x128xf32>
    %99 = tpu.matmul %91, %4, %cst_48 {dimension_numbers = #tpu.dot_dimension_numbers<[1], [0], [0], [1], [0, 0, 1, 1], [], []>} : vector<2x32xf32>, vector<32x128xf32>, vector<2x128xf32> -> vector<2x128xf32>
    %100 = arith.addf %98, %99 : vector<2x128xf32>
    %101 = vector.extract_strided_slice %100 {offsets = [0, 0], sizes = [2, 32], strides = [1, 1]} : vector<2x128xf32> to vector<2x32xf32>
    %cst_49 = arith.constant 5.000000e-01 : f32
    %102 = vector.broadcast %cst_49 : f32 to vector<2x32xf32>
    %103 = arith.mulf %102, %101 : vector<2x32xf32>
    %104 = math.tanh %103 : vector<2x32xf32>
    %cst_50 = arith.constant 1.000000e+00 : f32
    %105 = vector.broadcast %cst_50 : f32 to vector<2x32xf32>
    %106 = arith.addf %104, %105 : vector<2x32xf32>
    %cst_51 = arith.constant 5.000000e-01 : f32
    %107 = vector.broadcast %cst_51 : f32 to vector<2x32xf32>
    %108 = arith.mulf %107, %106 : vector<2x32xf32>
    %109 = vector.extract_strided_slice %100 {offsets = [0, 32], sizes = [2, 32], strides = [1, 1]} : vector<2x128xf32> to vector<2x32xf32>
    %cst_52 = arith.constant 5.000000e-01 : f32
    %110 = vector.broadcast %cst_52 : f32 to vector<2x32xf32>
    %111 = arith.mulf %110, %109 : vector<2x32xf32>
    %112 = math.tanh %111 : vector<2x32xf32>
    %cst_53 = arith.constant 1.000000e+00 : f32
    %113 = vector.broadcast %cst_53 : f32 to vector<2x32xf32>
    %114 = arith.addf %112, %113 : vector<2x32xf32>
    %cst_54 = arith.constant 5.000000e-01 : f32
    %115 = vector.broadcast %cst_54 : f32 to vector<2x32xf32>
    %116 = arith.mulf %115, %114 : vector<2x32xf32>
    %117 = vector.extract_strided_slice %100 {offsets = [0, 64], sizes = [2, 32], strides = [1, 1]} : vector<2x128xf32> to vector<2x32xf32>
    %118 = math.tanh %117 : vector<2x32xf32>
    %119 = vector.extract_strided_slice %100 {offsets = [0, 96], sizes = [2, 32], strides = [1, 1]} : vector<2x128xf32> to vector<2x32xf32>
    %cst_55 = arith.constant 5.000000e-01 : f32
    %120 = vector.broadcast %cst_55 : f32 to vector<2x32xf32>
    %121 = arith.mulf %120, %119 : vector<2x32xf32>
    %122 = math.tanh %121 : vector<2x32xf32>
    %cst_56 = arith.constant 1.000000e+00 : f32
    %123 = vector.broadcast %cst_56 : f32 to vector<2x32xf32>
    %124 = arith.addf %122, %123 : vector<2x32xf32>
    %cst_57 = arith.constant 5.000000e-01 : f32
    %125 = vector.broadcast %cst_57 : f32 to vector<2x32xf32>
    %126 = arith.mulf %125, %124 : vector<2x32xf32>
    %127 = arith.mulf %116, %89 : vector<2x32xf32>
    %128 = arith.mulf %108, %118 : vector<2x32xf32>
    %129 = arith.addf %127, %128 : vector<2x32xf32>
    %130 = math.tanh %129 : vector<2x32xf32>
    %131 = arith.mulf %126, %130 : vector<2x32xf32>
    %132 = arith.index_cast %c2_i32_45 : i32 to index
    %c0_58 = arith.constant 0 : index
    %c0_59 = arith.constant 0 : index
    %133 = vector.load %arg13[%132, %c0_58, %c0_59] : memref<8x2x32xf32, #tpu.memory_space<vmem>>, vector<1x2x32xf32>
    %134 = vector.shape_cast %133 : vector<1x2x32xf32> to vector<2x32xf32>
    %135 = vector.shape_cast %131 : vector<2x32xf32> to vector<1x2x32xf32>
    tpu.vector_store %arg13[%132, %c0_58, %c0_59], %135 {strides = array<i32>} : memref<8x2x32xf32, #tpu.memory_space<vmem>>, vector<1x2x32xf32>,
    %c3_i32 = arith.constant 3 : i32
    %c2_i32_60 = arith.constant 2 : i32
    %136 = arith.muli %c3_i32, %c2_i32_60 : i32
    %137 = arith.index_cast %136 : i32 to index
    %c0_61 = arith.constant 0 : index
    %138 = vector.load %arg12[%137, %c0_61] : memref<16x128xf32, #tpu.memory_space<vmem>>, vector<2x128xf32>
    %cst_62 = arith.constant dense<0.000000e+00> : vector<2x128xf32>
    %139 = tpu.matmul %131, %4, %cst_62 {dimension_numbers = #tpu.dot_dimension_numbers<[1], [0], [0], [1], [0, 0, 1, 1], [], []>} : vector<2x32xf32>, vector<32x128xf32>, vector<2x128xf32> -> vector<2x128xf32>
    %140 = arith.addf %138, %139 : vector<2x128xf32>
    %141 = vector.extract_strided_slice %140 {offsets = [0, 0], sizes = [2, 32], strides = [1, 1]} : vector<2x128xf32> to vector<2x32xf32>
    %cst_63 = arith.constant 5.000000e-01 : f32
    %142 = vector.broadcast %cst_63 : f32 to vector<2x32xf32>
    %143 = arith.mulf %142, %141 : vector<2x32xf32>
    %144 = math.tanh %143 : vector<2x32xf32>
    %cst_64 = arith.constant 1.000000e+00 : f32
    %145 = vector.broadcast %cst_64 : f32 to vector<2x32xf32>
    %146 = arith.addf %144, %145 : vector<2x32xf32>
    %cst_65 = arith.constant 5.000000e-01 : f32
    %147 = vector.broadcast %cst_65 : f32 to vector<2x32xf32>
    %148 = arith.mulf %147, %146 : vector<2x32xf32>
    %149 = vector.extract_strided_slice %140 {offsets = [0, 32], sizes = [2, 32], strides = [1, 1]} : vector<2x128xf32> to vector<2x32xf32>
    %cst_66 = arith.constant 5.000000e-01 : f32
    %150 = vector.broadcast %cst_66 : f32 to vector<2x32xf32>
    %151 = arith.mulf %150, %149 : vector<2x32xf32>
    %152 = math.tanh %151 : vector<2x32xf32>
    %cst_67 = arith.constant 1.000000e+00 : f32
    %153 = vector.broadcast %cst_67 : f32 to vector<2x32xf32>
    %154 = arith.addf %152, %153 : vector<2x32xf32>
    %cst_68 = arith.constant 5.000000e-01 : f32
    %155 = vector.broadcast %cst_68 : f32 to vector<2x32xf32>
    %156 = arith.mulf %155, %154 : vector<2x32xf32>
    %157 = vector.extract_strided_slice %140 {offsets = [0, 64], sizes = [2, 32], strides = [1, 1]} : vector<2x128xf32> to vector<2x32xf32>
    %158 = math.tanh %157 : vector<2x32xf32>
    %159 = vector.extract_strided_slice %140 {offsets = [0, 96], sizes = [2, 32], strides = [1, 1]} : vector<2x128xf32> to vector<2x32xf32>
    %cst_69 = arith.constant 5.000000e-01 : f32
    %160 = vector.broadcast %cst_69 : f32 to vector<2x32xf32>
    %161 = arith.mulf %160, %159 : vector<2x32xf32>
    %162 = math.tanh %161 : vector<2x32xf32>
    %cst_70 = arith.constant 1.000000e+00 : f32
    %163 = vector.broadcast %cst_70 : f32 to vector<2x32xf32>
    %164 = arith.addf %162, %163 : vector<2x32xf32>
    %cst_71 = arith.constant 5.000000e-01 : f32
    %165 = vector.broadcast %cst_71 : f32 to vector<2x32xf32>
    %166 = arith.mulf %165, %164 : vector<2x32xf32>
    %167 = arith.mulf %156, %129 : vector<2x32xf32>
    %168 = arith.mulf %148, %158 : vector<2x32xf32>
    %169 = arith.addf %167, %168 : vector<2x32xf32>
    %170 = math.tanh %169 : vector<2x32xf32>
    %171 = arith.mulf %166, %170 : vector<2x32xf32>
    %172 = arith.index_cast %c3_i32 : i32 to index
    %c0_72 = arith.constant 0 : index
    %c0_73 = arith.constant 0 : index
    %173 = vector.load %arg13[%172, %c0_72, %c0_73] : memref<8x2x32xf32, #tpu.memory_space<vmem>>, vector<1x2x32xf32>
    %174 = vector.shape_cast %173 : vector<1x2x32xf32> to vector<2x32xf32>
    %175 = vector.shape_cast %171 : vector<2x32xf32> to vector<1x2x32xf32>
    tpu.vector_store %arg13[%172, %c0_72, %c0_73], %175 {strides = array<i32>} : memref<8x2x32xf32, #tpu.memory_space<vmem>>, vector<1x2x32xf32>,
    %c4_i32 = arith.constant 4 : i32
    %c2_i32_74 = arith.constant 2 : i32
    %176 = arith.muli %c4_i32, %c2_i32_74 : i32
    %177 = arith.index_cast %176 : i32 to index
    %c0_75 = arith.constant 0 : index
    %178 = vector.load %arg12[%177, %c0_75] : memref<16x128xf32, #tpu.memory_space<vmem>>, vector<2x128xf32>
    %cst_76 = arith.constant dense<0.000000e+00> : vector<2x128xf32>
    %179 = tpu.matmul %171, %4, %cst_76 {dimension_numbers = #tpu.dot_dimension_numbers<[1], [0], [0], [1], [0, 0, 1, 1], [], []>} : vector<2x32xf32>, vector<32x128xf32>, vector<2x128xf32> -> vector<2x128xf32>
    %180 = arith.addf %178, %179 : vector<2x128xf32>
    %181 = vector.extract_strided_slice %180 {offsets = [0, 0], sizes = [2, 32], strides = [1, 1]} : vector<2x128xf32> to vector<2x32xf32>
    %cst_77 = arith.constant 5.000000e-01 : f32
    %182 = vector.broadcast %cst_77 : f32 to vector<2x32xf32>
    %183 = arith.mulf %182, %181 : vector<2x32xf32>
    %184 = math.tanh %183 : vector<2x32xf32>
    %cst_78 = arith.constant 1.000000e+00 : f32
    %185 = vector.broadcast %cst_78 : f32 to vector<2x32xf32>
    %186 = arith.addf %184, %185 : vector<2x32xf32>
    %cst_79 = arith.constant 5.000000e-01 : f32
    %187 = vector.broadcast %cst_79 : f32 to vector<2x32xf32>
    %188 = arith.mulf %187, %186 : vector<2x32xf32>
    %189 = vector.extract_strided_slice %180 {offsets = [0, 32], sizes = [2, 32], strides = [1, 1]} : vector<2x128xf32> to vector<2x32xf32>
    %cst_80 = arith.constant 5.000000e-01 : f32
    %190 = vector.broadcast %cst_80 : f32 to vector<2x32xf32>
    %191 = arith.mulf %190, %189 : vector<2x32xf32>
    %192 = math.tanh %191 : vector<2x32xf32>
    %cst_81 = arith.constant 1.000000e+00 : f32
    %193 = vector.broadcast %cst_81 : f32 to vector<2x32xf32>
    %194 = arith.addf %192, %193 : vector<2x32xf32>
    %cst_82 = arith.constant 5.000000e-01 : f32
    %195 = vector.broadcast %cst_82 : f32 to vector<2x32xf32>
    %196 = arith.mulf %195, %194 : vector<2x32xf32>
    %197 = vector.extract_strided_slice %180 {offsets = [0, 64], sizes = [2, 32], strides = [1, 1]} : vector<2x128xf32> to vector<2x32xf32>
    %198 = math.tanh %197 : vector<2x32xf32>
    %199 = vector.extract_strided_slice %180 {offsets = [0, 96], sizes = [2, 32], strides = [1, 1]} : vector<2x128xf32> to vector<2x32xf32>
    %cst_83 = arith.constant 5.000000e-01 : f32
    %200 = vector.broadcast %cst_83 : f32 to vector<2x32xf32>
    %201 = arith.mulf %200, %199 : vector<2x32xf32>
    %202 = math.tanh %201 : vector<2x32xf32>
    %cst_84 = arith.constant 1.000000e+00 : f32
    %203 = vector.broadcast %cst_84 : f32 to vector<2x32xf32>
    %204 = arith.addf %202, %203 : vector<2x32xf32>
    %cst_85 = arith.constant 5.000000e-01 : f32
    %205 = vector.broadcast %cst_85 : f32 to vector<2x32xf32>
    %206 = arith.mulf %205, %204 : vector<2x32xf32>
    %207 = arith.mulf %196, %169 : vector<2x32xf32>
    %208 = arith.mulf %188, %198 : vector<2x32xf32>
    %209 = arith.addf %207, %208 : vector<2x32xf32>
    %210 = math.tanh %209 : vector<2x32xf32>
    %211 = arith.mulf %206, %210 : vector<2x32xf32>
    %212 = arith.index_cast %c4_i32 : i32 to index
    %c0_86 = arith.constant 0 : index
    %c0_87 = arith.constant 0 : index
    %213 = vector.load %arg13[%212, %c0_86, %c0_87] : memref<8x2x32xf32, #tpu.memory_space<vmem>>, vector<1x2x32xf32>
    %214 = vector.shape_cast %213 : vector<1x2x32xf32> to vector<2x32xf32>
    %215 = vector.shape_cast %211 : vector<2x32xf32> to vector<1x2x32xf32>
    tpu.vector_store %arg13[%212, %c0_86, %c0_87], %215 {strides = array<i32>} : memref<8x2x32xf32, #tpu.memory_space<vmem>>, vector<1x2x32xf32>,
    %c5_i32 = arith.constant 5 : i32
    %c2_i32_88 = arith.constant 2 : i32
    %216 = arith.muli %c5_i32, %c2_i32_88 : i32
    %217 = arith.index_cast %216 : i32 to index
    %c0_89 = arith.constant 0 : index
    %218 = vector.load %arg12[%217, %c0_89] : memref<16x128xf32, #tpu.memory_space<vmem>>, vector<2x128xf32>
    %cst_90 = arith.constant dense<0.000000e+00> : vector<2x128xf32>
    %219 = tpu.matmul %211, %4, %cst_90 {dimension_numbers = #tpu.dot_dimension_numbers<[1], [0], [0], [1], [0, 0, 1, 1], [], []>} : vector<2x32xf32>, vector<32x128xf32>, vector<2x128xf32> -> vector<2x128xf32>
    %220 = arith.addf %218, %219 : vector<2x128xf32>
    %221 = vector.extract_strided_slice %220 {offsets = [0, 0], sizes = [2, 32], strides = [1, 1]} : vector<2x128xf32> to vector<2x32xf32>
    %cst_91 = arith.constant 5.000000e-01 : f32
    %222 = vector.broadcast %cst_91 : f32 to vector<2x32xf32>
    %223 = arith.mulf %222, %221 : vector<2x32xf32>
    %224 = math.tanh %223 : vector<2x32xf32>
    %cst_92 = arith.constant 1.000000e+00 : f32
    %225 = vector.broadcast %cst_92 : f32 to vector<2x32xf32>
    %226 = arith.addf %224, %225 : vector<2x32xf32>
    %cst_93 = arith.constant 5.000000e-01 : f32
    %227 = vector.broadcast %cst_93 : f32 to vector<2x32xf32>
    %228 = arith.mulf %227, %226 : vector<2x32xf32>
    %229 = vector.extract_strided_slice %220 {offsets = [0, 32], sizes = [2, 32], strides = [1, 1]} : vector<2x128xf32> to vector<2x32xf32>
    %cst_94 = arith.constant 5.000000e-01 : f32
    %230 = vector.broadcast %cst_94 : f32 to vector<2x32xf32>
    %231 = arith.mulf %230, %229 : vector<2x32xf32>
    %232 = math.tanh %231 : vector<2x32xf32>
    %cst_95 = arith.constant 1.000000e+00 : f32
    %233 = vector.broadcast %cst_95 : f32 to vector<2x32xf32>
    %234 = arith.addf %232, %233 : vector<2x32xf32>
    %cst_96 = arith.constant 5.000000e-01 : f32
    %235 = vector.broadcast %cst_96 : f32 to vector<2x32xf32>
    %236 = arith.mulf %235, %234 : vector<2x32xf32>
    %237 = vector.extract_strided_slice %220 {offsets = [0, 64], sizes = [2, 32], strides = [1, 1]} : vector<2x128xf32> to vector<2x32xf32>
    %238 = math.tanh %237 : vector<2x32xf32>
    %239 = vector.extract_strided_slice %220 {offsets = [0, 96], sizes = [2, 32], strides = [1, 1]} : vector<2x128xf32> to vector<2x32xf32>
    %cst_97 = arith.constant 5.000000e-01 : f32
    %240 = vector.broadcast %cst_97 : f32 to vector<2x32xf32>
    %241 = arith.mulf %240, %239 : vector<2x32xf32>
    %242 = math.tanh %241 : vector<2x32xf32>
    %cst_98 = arith.constant 1.000000e+00 : f32
    %243 = vector.broadcast %cst_98 : f32 to vector<2x32xf32>
    %244 = arith.addf %242, %243 : vector<2x32xf32>
    %cst_99 = arith.constant 5.000000e-01 : f32
    %245 = vector.broadcast %cst_99 : f32 to vector<2x32xf32>
    %246 = arith.mulf %245, %244 : vector<2x32xf32>
    %247 = arith.mulf %236, %209 : vector<2x32xf32>
    %248 = arith.mulf %228, %238 : vector<2x32xf32>
    %249 = arith.addf %247, %248 : vector<2x32xf32>
    %250 = math.tanh %249 : vector<2x32xf32>
    %251 = arith.mulf %246, %250 : vector<2x32xf32>
    %252 = arith.index_cast %c5_i32 : i32 to index
    %c0_100 = arith.constant 0 : index
    %c0_101 = arith.constant 0 : index
    %253 = vector.load %arg13[%252, %c0_100, %c0_101] : memref<8x2x32xf32, #tpu.memory_space<vmem>>, vector<1x2x32xf32>
    %254 = vector.shape_cast %253 : vector<1x2x32xf32> to vector<2x32xf32>
    %255 = vector.shape_cast %251 : vector<2x32xf32> to vector<1x2x32xf32>
    tpu.vector_store %arg13[%252, %c0_100, %c0_101], %255 {strides = array<i32>} : memref<8x2x32xf32, #tpu.memory_space<vmem>>, vector<1x2x32xf32>,
    %c6_i32 = arith.constant 6 : i32
    %c2_i32_102 = arith.constant 2 : i32
    %256 = arith.muli %c6_i32, %c2_i32_102 : i32
    %257 = arith.index_cast %256 : i32 to index
    %c0_103 = arith.constant 0 : index
    %258 = vector.load %arg12[%257, %c0_103] : memref<16x128xf32, #tpu.memory_space<vmem>>, vector<2x128xf32>
    %cst_104 = arith.constant dense<0.000000e+00> : vector<2x128xf32>
    %259 = tpu.matmul %251, %4, %cst_104 {dimension_numbers = #tpu.dot_dimension_numbers<[1], [0], [0], [1], [0, 0, 1, 1], [], []>} : vector<2x32xf32>, vector<32x128xf32>, vector<2x128xf32> -> vector<2x128xf32>
    %260 = arith.addf %258, %259 : vector<2x128xf32>
    %261 = vector.extract_strided_slice %260 {offsets = [0, 0], sizes = [2, 32], strides = [1, 1]} : vector<2x128xf32> to vector<2x32xf32>
    %cst_105 = arith.constant 5.000000e-01 : f32
    %262 = vector.broadcast %cst_105 : f32 to vector<2x32xf32>
    %263 = arith.mulf %262, %261 : vector<2x32xf32>
    %264 = math.tanh %263 : vector<2x32xf32>
    %cst_106 = arith.constant 1.000000e+00 : f32
    %265 = vector.broadcast %cst_106 : f32 to vector<2x32xf32>
    %266 = arith.addf %264, %265 : vector<2x32xf32>
    %cst_107 = arith.constant 5.000000e-01 : f32
    %267 = vector.broadcast %cst_107 : f32 to vector<2x32xf32>
    %268 = arith.mulf %267, %266 : vector<2x32xf32>
    %269 = vector.extract_strided_slice %260 {offsets = [0, 32], sizes = [2, 32], strides = [1, 1]} : vector<2x128xf32> to vector<2x32xf32>
    %cst_108 = arith.constant 5.000000e-01 : f32
    %270 = vector.broadcast %cst_108 : f32 to vector<2x32xf32>
    %271 = arith.mulf %270, %269 : vector<2x32xf32>
    %272 = math.tanh %271 : vector<2x32xf32>
    %cst_109 = arith.constant 1.000000e+00 : f32
    %273 = vector.broadcast %cst_109 : f32 to vector<2x32xf32>
    %274 = arith.addf %272, %273 : vector<2x32xf32>
    %cst_110 = arith.constant 5.000000e-01 : f32
    %275 = vector.broadcast %cst_110 : f32 to vector<2x32xf32>
    %276 = arith.mulf %275, %274 : vector<2x32xf32>
    %277 = vector.extract_strided_slice %260 {offsets = [0, 64], sizes = [2, 32], strides = [1, 1]} : vector<2x128xf32> to vector<2x32xf32>
    %278 = math.tanh %277 : vector<2x32xf32>
    %279 = vector.extract_strided_slice %260 {offsets = [0, 96], sizes = [2, 32], strides = [1, 1]} : vector<2x128xf32> to vector<2x32xf32>
    %cst_111 = arith.constant 5.000000e-01 : f32
    %280 = vector.broadcast %cst_111 : f32 to vector<2x32xf32>
    %281 = arith.mulf %280, %279 : vector<2x32xf32>
    %282 = math.tanh %281 : vector<2x32xf32>
    %cst_112 = arith.constant 1.000000e+00 : f32
    %283 = vector.broadcast %cst_112 : f32 to vector<2x32xf32>
    %284 = arith.addf %282, %283 : vector<2x32xf32>
    %cst_113 = arith.constant 5.000000e-01 : f32
    %285 = vector.broadcast %cst_113 : f32 to vector<2x32xf32>
    %286 = arith.mulf %285, %284 : vector<2x32xf32>
    %287 = arith.mulf %276, %249 : vector<2x32xf32>
    %288 = arith.mulf %268, %278 : vector<2x32xf32>
    %289 = arith.addf %287, %288 : vector<2x32xf32>
    %290 = math.tanh %289 : vector<2x32xf32>
    %291 = arith.mulf %286, %290 : vector<2x32xf32>
    %292 = arith.index_cast %c6_i32 : i32 to index
    %c0_114 = arith.constant 0 : index
    %c0_115 = arith.constant 0 : index
    %293 = vector.load %arg13[%292, %c0_114, %c0_115] : memref<8x2x32xf32, #tpu.memory_space<vmem>>, vector<1x2x32xf32>
    %294 = vector.shape_cast %293 : vector<1x2x32xf32> to vector<2x32xf32>
    %295 = vector.shape_cast %291 : vector<2x32xf32> to vector<1x2x32xf32>
    tpu.vector_store %arg13[%292, %c0_114, %c0_115], %295 {strides = array<i32>} : memref<8x2x32xf32, #tpu.memory_space<vmem>>, vector<1x2x32xf32>,
    %c7_i32 = arith.constant 7 : i32
    %c2_i32_116 = arith.constant 2 : i32
    %296 = arith.muli %c7_i32, %c2_i32_116 : i32
    %297 = arith.index_cast %296 : i32 to index
    %c0_117 = arith.constant 0 : index
    %298 = vector.load %arg12[%297, %c0_117] : memref<16x128xf32, #tpu.memory_space<vmem>>, vector<2x128xf32>
    %cst_118 = arith.constant dense<0.000000e+00> : vector<2x128xf32>
    %299 = tpu.matmul %291, %4, %cst_118 {dimension_numbers = #tpu.dot_dimension_numbers<[1], [0], [0], [1], [0, 0, 1, 1], [], []>} : vector<2x32xf32>, vector<32x128xf32>, vector<2x128xf32> -> vector<2x128xf32>
    %300 = arith.addf %298, %299 : vector<2x128xf32>
    %301 = vector.extract_strided_slice %300 {offsets = [0, 0], sizes = [2, 32], strides = [1, 1]} : vector<2x128xf32> to vector<2x32xf32>
    %cst_119 = arith.constant 5.000000e-01 : f32
    %302 = vector.broadcast %cst_119 : f32 to vector<2x32xf32>
    %303 = arith.mulf %302, %301 : vector<2x32xf32>
    %304 = math.tanh %303 : vector<2x32xf32>
    %cst_120 = arith.constant 1.000000e+00 : f32
    %305 = vector.broadcast %cst_120 : f32 to vector<2x32xf32>
    %306 = arith.addf %304, %305 : vector<2x32xf32>
    %cst_121 = arith.constant 5.000000e-01 : f32
    %307 = vector.broadcast %cst_121 : f32 to vector<2x32xf32>
    %308 = arith.mulf %307, %306 : vector<2x32xf32>
    %309 = vector.extract_strided_slice %300 {offsets = [0, 32], sizes = [2, 32], strides = [1, 1]} : vector<2x128xf32> to vector<2x32xf32>
    %cst_122 = arith.constant 5.000000e-01 : f32
    %310 = vector.broadcast %cst_122 : f32 to vector<2x32xf32>
    %311 = arith.mulf %310, %309 : vector<2x32xf32>
    %312 = math.tanh %311 : vector<2x32xf32>
    %cst_123 = arith.constant 1.000000e+00 : f32
    %313 = vector.broadcast %cst_123 : f32 to vector<2x32xf32>
    %314 = arith.addf %312, %313 : vector<2x32xf32>
    %cst_124 = arith.constant 5.000000e-01 : f32
    %315 = vector.broadcast %cst_124 : f32 to vector<2x32xf32>
    %316 = arith.mulf %315, %314 : vector<2x32xf32>
    %317 = vector.extract_strided_slice %300 {offsets = [0, 64], sizes = [2, 32], strides = [1, 1]} : vector<2x128xf32> to vector<2x32xf32>
    %318 = math.tanh %317 : vector<2x32xf32>
    %319 = vector.extract_strided_slice %300 {offsets = [0, 96], sizes = [2, 32], strides = [1, 1]} : vector<2x128xf32> to vector<2x32xf32>
    %cst_125 = arith.constant 5.000000e-01 : f32
    %320 = vector.broadcast %cst_125 : f32 to vector<2x32xf32>
    %321 = arith.mulf %320, %319 : vector<2x32xf32>
    %322 = math.tanh %321 : vector<2x32xf32>
    %cst_126 = arith.constant 1.000000e+00 : f32
    %323 = vector.broadcast %cst_126 : f32 to vector<2x32xf32>
    %324 = arith.addf %322, %323 : vector<2x32xf32>
    %cst_127 = arith.constant 5.000000e-01 : f32
    %325 = vector.broadcast %cst_127 : f32 to vector<2x32xf32>
    %326 = arith.mulf %325, %324 : vector<2x32xf32>
    %327 = arith.mulf %316, %289 : vector<2x32xf32>
    %328 = arith.mulf %308, %318 : vector<2x32xf32>
    %329 = arith.addf %327, %328 : vector<2x32xf32>
    %330 = math.tanh %329 : vector<2x32xf32>
    %331 = arith.mulf %326, %330 : vector<2x32xf32>
    %332 = arith.index_cast %c7_i32 : i32 to index
    %c0_128 = arith.constant 0 : index
    %c0_129 = arith.constant 0 : index
    %333 = vector.load %arg13[%332, %c0_128, %c0_129] : memref<8x2x32xf32, #tpu.memory_space<vmem>>, vector<1x2x32xf32>
    %334 = vector.shape_cast %333 : vector<1x2x32xf32> to vector<2x32xf32>
    %335 = vector.shape_cast %331 : vector<2x32xf32> to vector<1x2x32xf32>
    tpu.vector_store %arg13[%332, %c0_128, %c0_129], %335 {strides = array<i32>} : memref<8x2x32xf32, #tpu.memory_space<vmem>>, vector<1x2x32xf32>,
    %c8_i32 = arith.constant 8 : i32
    %c0_130 = arith.constant 0 : index
    %c0_131 = arith.constant 0 : index
    %c0_132 = arith.constant 0 : index
    %336 = vector.load %arg10[%c0_130, %c0_131, %c0_132] : memref<2x2x32xf32, #tpu.memory_space<vmem>>, vector<1x2x32xf32>
    %337 = vector.shape_cast %336 : vector<1x2x32xf32> to vector<2x32xf32>
    %338 = vector.shape_cast %331 : vector<2x32xf32> to vector<1x2x32xf32>
    tpu.vector_store %arg10[%c0_130, %c0_131, %c0_132], %338 {strides = array<i32>} : memref<2x2x32xf32, #tpu.memory_space<vmem>>, vector<1x2x32xf32>,
    %c0_133 = arith.constant 0 : index
    %c0_134 = arith.constant 0 : index
    %c0_135 = arith.constant 0 : index
    %339 = vector.load %arg11[%c0_133, %c0_134, %c0_135] : memref<2x2x32xf32, #tpu.memory_space<vmem>>, vector<1x2x32xf32>
    %340 = vector.shape_cast %339 : vector<1x2x32xf32> to vector<2x32xf32>
    %341 = vector.shape_cast %329 : vector<2x32xf32> to vector<1x2x32xf32>
    tpu.vector_store %arg11[%c0_133, %c0_134, %c0_135], %341 {strides = array<i32>} : memref<2x2x32xf32, #tpu.memory_space<vmem>>, vector<1x2x32xf32>,
    %c0_136 = arith.constant 0 : index
    %c0_137 = arith.constant 0 : index
    %342 = vector.load %arg5[%c0_136, %c0_137] : memref<32x128xf32, #tpu.memory_space<vmem>>, vector<32x128xf32>
    %c0_138 = arith.constant 0 : index
    %c0_139 = arith.constant 0 : index
    %343 = vector.load %arg6[%c0_138, %c0_139] : memref<32x128xf32, #tpu.memory_space<vmem>>, vector<32x128xf32>
    %c0_140 = arith.constant 0 : index
    %c0_141 = arith.constant 0 : index
    %344 = vector.load %arg7[%c0_140, %c0_141] : memref<1x128xf32, #tpu.memory_space<vmem>>, vector<1x128xf32>
    %c0_142 = arith.constant 0 : index
    %c0_143 = arith.constant 0 : index
    %c0_144 = arith.constant 0 : index
    %345 = vector.load %arg13[%c0_142, %c0_143, %c0_144] : memref<8x2x32xf32, #tpu.memory_space<vmem>>, vector<8x2x32xf32>
    %346 = vector.shape_cast %345 : vector<8x2x32xf32> to vector<16x32xf32>
    %cst_145 = arith.constant dense<0.000000e+00> : vector<16x128xf32>
    %347 = tpu.matmul %346, %342, %cst_145 {dimension_numbers = #tpu.dot_dimension_numbers<[1], [0], [0], [1], [0, 0, 1, 1], [], []>} : vector<16x32xf32>, vector<32x128xf32>, vector<16x128xf32> -> vector<16x128xf32>
    %348 = vector.broadcast %344 : vector<1x128xf32> to vector<16x128xf32>
    %349 = arith.addf %347, %348 : vector<16x128xf32>
    %c0_146 = arith.constant 0 : index
    %c0_147 = arith.constant 0 : index
    %350 = vector.load %arg12[%c0_146, %c0_147] : memref<16x128xf32, #tpu.memory_space<vmem>>, vector<16x128xf32>
    tpu.vector_store %arg12[%c0_146, %c0_147], %349 {strides = array<i32>} : memref<16x128xf32, #tpu.memory_space<vmem>>, vector<16x128xf32>,
    %c1 = arith.constant 1 : index
    %c0_148 = arith.constant 0 : index
    %c0_149 = arith.constant 0 : index
    %351 = vector.load %arg10[%c1, %c0_148, %c0_149] : memref<2x2x32xf32, #tpu.memory_space<vmem>>, vector<1x2x32xf32>
    %352 = vector.shape_cast %351 : vector<1x2x32xf32> to vector<2x32xf32>
    %c1_150 = arith.constant 1 : index
    %c0_151 = arith.constant 0 : index
    %c0_152 = arith.constant 0 : index
    %353 = vector.load %arg11[%c1_150, %c0_151, %c0_152] : memref<2x2x32xf32, #tpu.memory_space<vmem>>, vector<1x2x32xf32>
    %354 = vector.shape_cast %353 : vector<1x2x32xf32> to vector<2x32xf32>
    %c0_i32_153 = arith.constant 0 : i32
    %c2_i32_154 = arith.constant 2 : i32
    %355 = arith.muli %c0_i32_153, %c2_i32_154 : i32
    %356 = arith.index_cast %355 : i32 to index
    %c0_155 = arith.constant 0 : index
    %357 = vector.load %arg12[%356, %c0_155] : memref<16x128xf32, #tpu.memory_space<vmem>>, vector<2x128xf32>
    %cst_156 = arith.constant dense<0.000000e+00> : vector<2x128xf32>
    %358 = tpu.matmul %352, %343, %cst_156 {dimension_numbers = #tpu.dot_dimension_numbers<[1], [0], [0], [1], [0, 0, 1, 1], [], []>} : vector<2x32xf32>, vector<32x128xf32>, vector<2x128xf32> -> vector<2x128xf32>
    %359 = arith.addf %357, %358 : vector<2x128xf32>
    %360 = vector.extract_strided_slice %359 {offsets = [0, 0], sizes = [2, 32], strides = [1, 1]} : vector<2x128xf32> to vector<2x32xf32>
    %cst_157 = arith.constant 5.000000e-01 : f32
    %361 = vector.broadcast %cst_157 : f32 to vector<2x32xf32>
    %362 = arith.mulf %361, %360 : vector<2x32xf32>
    %363 = math.tanh %362 : vector<2x32xf32>
    %cst_158 = arith.constant 1.000000e+00 : f32
    %364 = vector.broadcast %cst_158 : f32 to vector<2x32xf32>
    %365 = arith.addf %363, %364 : vector<2x32xf32>
    %cst_159 = arith.constant 5.000000e-01 : f32
    %366 = vector.broadcast %cst_159 : f32 to vector<2x32xf32>
    %367 = arith.mulf %366, %365 : vector<2x32xf32>
    %368 = vector.extract_strided_slice %359 {offsets = [0, 32], sizes = [2, 32], strides = [1, 1]} : vector<2x128xf32> to vector<2x32xf32>
    %cst_160 = arith.constant 5.000000e-01 : f32
    %369 = vector.broadcast %cst_160 : f32 to vector<2x32xf32>
    %370 = arith.mulf %369, %368 : vector<2x32xf32>
    %371 = math.tanh %370 : vector<2x32xf32>
    %cst_161 = arith.constant 1.000000e+00 : f32
    %372 = vector.broadcast %cst_161 : f32 to vector<2x32xf32>
    %373 = arith.addf %371, %372 : vector<2x32xf32>
    %cst_162 = arith.constant 5.000000e-01 : f32
    %374 = vector.broadcast %cst_162 : f32 to vector<2x32xf32>
    %375 = arith.mulf %374, %373 : vector<2x32xf32>
    %376 = vector.extract_strided_slice %359 {offsets = [0, 64], sizes = [2, 32], strides = [1, 1]} : vector<2x128xf32> to vector<2x32xf32>
    %377 = math.tanh %376 : vector<2x32xf32>
    %378 = vector.extract_strided_slice %359 {offsets = [0, 96], sizes = [2, 32], strides = [1, 1]} : vector<2x128xf32> to vector<2x32xf32>
    %cst_163 = arith.constant 5.000000e-01 : f32
    %379 = vector.broadcast %cst_163 : f32 to vector<2x32xf32>
    %380 = arith.mulf %379, %378 : vector<2x32xf32>
    %381 = math.tanh %380 : vector<2x32xf32>
    %cst_164 = arith.constant 1.000000e+00 : f32
    %382 = vector.broadcast %cst_164 : f32 to vector<2x32xf32>
    %383 = arith.addf %381, %382 : vector<2x32xf32>
    %cst_165 = arith.constant 5.000000e-01 : f32
    %384 = vector.broadcast %cst_165 : f32 to vector<2x32xf32>
    %385 = arith.mulf %384, %383 : vector<2x32xf32>
    %386 = arith.mulf %375, %354 : vector<2x32xf32>
    %387 = arith.mulf %367, %377 : vector<2x32xf32>
    %388 = arith.addf %386, %387 : vector<2x32xf32>
    %389 = math.tanh %388 : vector<2x32xf32>
    %390 = arith.mulf %385, %389 : vector<2x32xf32>
    %391 = arith.index_cast %c0_i32_153 : i32 to index
    %c0_166 = arith.constant 0 : index
    %c0_167 = arith.constant 0 : index
    %392 = vector.load %arg8[%391, %c0_166, %c0_167] : memref<8x2x32xf32, #tpu.memory_space<vmem>>, vector<1x2x32xf32>
    %393 = vector.shape_cast %392 : vector<1x2x32xf32> to vector<2x32xf32>
    %394 = arith.mulf %390, %393 : vector<2x32xf32>
    %395 = arith.index_cast %c0_i32_153 : i32 to index
    %c0_168 = arith.constant 0 : index
    %c0_169 = arith.constant 0 : index
    %396 = vector.load %arg9[%395, %c0_168, %c0_169] : memref<8x2x32xf32, #tpu.memory_space<vmem>>, vector<1x2x32xf32>
    %397 = vector.shape_cast %396 : vector<1x2x32xf32> to vector<2x32xf32>
    %398 = vector.shape_cast %394 : vector<2x32xf32> to vector<1x2x32xf32>
    tpu.vector_store %arg9[%395, %c0_168, %c0_169], %398 {strides = array<i32>} : memref<8x2x32xf32, #tpu.memory_space<vmem>>, vector<1x2x32xf32>,
    %c1_i32_170 = arith.constant 1 : i32
    %c2_i32_171 = arith.constant 2 : i32
    %399 = arith.muli %c1_i32_170, %c2_i32_171 : i32
    %400 = arith.index_cast %399 : i32 to index
    %c0_172 = arith.constant 0 : index
    %401 = vector.load %arg12[%400, %c0_172] : memref<16x128xf32, #tpu.memory_space<vmem>>, vector<2x128xf32>
    %cst_173 = arith.constant dense<0.000000e+00> : vector<2x128xf32>
    %402 = tpu.matmul %390, %343, %cst_173 {dimension_numbers = #tpu.dot_dimension_numbers<[1], [0], [0], [1], [0, 0, 1, 1], [], []>} : vector<2x32xf32>, vector<32x128xf32>, vector<2x128xf32> -> vector<2x128xf32>
    %403 = arith.addf %401, %402 : vector<2x128xf32>
    %404 = vector.extract_strided_slice %403 {offsets = [0, 0], sizes = [2, 32], strides = [1, 1]} : vector<2x128xf32> to vector<2x32xf32>
    %cst_174 = arith.constant 5.000000e-01 : f32
    %405 = vector.broadcast %cst_174 : f32 to vector<2x32xf32>
    %406 = arith.mulf %405, %404 : vector<2x32xf32>
    %407 = math.tanh %406 : vector<2x32xf32>
    %cst_175 = arith.constant 1.000000e+00 : f32
    %408 = vector.broadcast %cst_175 : f32 to vector<2x32xf32>
    %409 = arith.addf %407, %408 : vector<2x32xf32>
    %cst_176 = arith.constant 5.000000e-01 : f32
    %410 = vector.broadcast %cst_176 : f32 to vector<2x32xf32>
    %411 = arith.mulf %410, %409 : vector<2x32xf32>
    %412 = vector.extract_strided_slice %403 {offsets = [0, 32], sizes = [2, 32], strides = [1, 1]} : vector<2x128xf32> to vector<2x32xf32>
    %cst_177 = arith.constant 5.000000e-01 : f32
    %413 = vector.broadcast %cst_177 : f32 to vector<2x32xf32>
    %414 = arith.mulf %413, %412 : vector<2x32xf32>
    %415 = math.tanh %414 : vector<2x32xf32>
    %cst_178 = arith.constant 1.000000e+00 : f32
    %416 = vector.broadcast %cst_178 : f32 to vector<2x32xf32>
    %417 = arith.addf %415, %416 : vector<2x32xf32>
    %cst_179 = arith.constant 5.000000e-01 : f32
    %418 = vector.broadcast %cst_179 : f32 to vector<2x32xf32>
    %419 = arith.mulf %418, %417 : vector<2x32xf32>
    %420 = vector.extract_strided_slice %403 {offsets = [0, 64], sizes = [2, 32], strides = [1, 1]} : vector<2x128xf32> to vector<2x32xf32>
    %421 = math.tanh %420 : vector<2x32xf32>
    %422 = vector.extract_strided_slice %403 {offsets = [0, 96], sizes = [2, 32], strides = [1, 1]} : vector<2x128xf32> to vector<2x32xf32>
    %cst_180 = arith.constant 5.000000e-01 : f32
    %423 = vector.broadcast %cst_180 : f32 to vector<2x32xf32>
    %424 = arith.mulf %423, %422 : vector<2x32xf32>
    %425 = math.tanh %424 : vector<2x32xf32>
    %cst_181 = arith.constant 1.000000e+00 : f32
    %426 = vector.broadcast %cst_181 : f32 to vector<2x32xf32>
    %427 = arith.addf %425, %426 : vector<2x32xf32>
    %cst_182 = arith.constant 5.000000e-01 : f32
    %428 = vector.broadcast %cst_182 : f32 to vector<2x32xf32>
    %429 = arith.mulf %428, %427 : vector<2x32xf32>
    %430 = arith.mulf %419, %388 : vector<2x32xf32>
    %431 = arith.mulf %411, %421 : vector<2x32xf32>
    %432 = arith.addf %430, %431 : vector<2x32xf32>
    %433 = math.tanh %432 : vector<2x32xf32>
    %434 = arith.mulf %429, %433 : vector<2x32xf32>
    %435 = arith.index_cast %c1_i32_170 : i32 to index
    %c0_183 = arith.constant 0 : index
    %c0_184 = arith.constant 0 : index
    %436 = vector.load %arg8[%435, %c0_183, %c0_184] : memref<8x2x32xf32, #tpu.memory_space<vmem>>, vector<1x2x32xf32>
    %437 = vector.shape_cast %436 : vector<1x2x32xf32> to vector<2x32xf32>
    %438 = arith.mulf %434, %437 : vector<2x32xf32>
    %439 = arith.index_cast %c1_i32_170 : i32 to index
    %c0_185 = arith.constant 0 : index
    %c0_186 = arith.constant 0 : index
    %440 = vector.load %arg9[%439, %c0_185, %c0_186] : memref<8x2x32xf32, #tpu.memory_space<vmem>>, vector<1x2x32xf32>
    %441 = vector.shape_cast %440 : vector<1x2x32xf32> to vector<2x32xf32>
    %442 = vector.shape_cast %438 : vector<2x32xf32> to vector<1x2x32xf32>
    tpu.vector_store %arg9[%439, %c0_185, %c0_186], %442 {strides = array<i32>} : memref<8x2x32xf32, #tpu.memory_space<vmem>>, vector<1x2x32xf32>,
    %c2_i32_187 = arith.constant 2 : i32
    %c2_i32_188 = arith.constant 2 : i32
    %443 = arith.muli %c2_i32_187, %c2_i32_188 : i32
    %444 = arith.index_cast %443 : i32 to index
    %c0_189 = arith.constant 0 : index
    %445 = vector.load %arg12[%444, %c0_189] : memref<16x128xf32, #tpu.memory_space<vmem>>, vector<2x128xf32>
    %cst_190 = arith.constant dense<0.000000e+00> : vector<2x128xf32>
    %446 = tpu.matmul %434, %343, %cst_190 {dimension_numbers = #tpu.dot_dimension_numbers<[1], [0], [0], [1], [0, 0, 1, 1], [], []>} : vector<2x32xf32>, vector<32x128xf32>, vector<2x128xf32> -> vector<2x128xf32>
    %447 = arith.addf %445, %446 : vector<2x128xf32>
    %448 = vector.extract_strided_slice %447 {offsets = [0, 0], sizes = [2, 32], strides = [1, 1]} : vector<2x128xf32> to vector<2x32xf32>
    %cst_191 = arith.constant 5.000000e-01 : f32
    %449 = vector.broadcast %cst_191 : f32 to vector<2x32xf32>
    %450 = arith.mulf %449, %448 : vector<2x32xf32>
    %451 = math.tanh %450 : vector<2x32xf32>
    %cst_192 = arith.constant 1.000000e+00 : f32
    %452 = vector.broadcast %cst_192 : f32 to vector<2x32xf32>
    %453 = arith.addf %451, %452 : vector<2x32xf32>
    %cst_193 = arith.constant 5.000000e-01 : f32
    %454 = vector.broadcast %cst_193 : f32 to vector<2x32xf32>
    %455 = arith.mulf %454, %453 : vector<2x32xf32>
    %456 = vector.extract_strided_slice %447 {offsets = [0, 32], sizes = [2, 32], strides = [1, 1]} : vector<2x128xf32> to vector<2x32xf32>
    %cst_194 = arith.constant 5.000000e-01 : f32
    %457 = vector.broadcast %cst_194 : f32 to vector<2x32xf32>
    %458 = arith.mulf %457, %456 : vector<2x32xf32>
    %459 = math.tanh %458 : vector<2x32xf32>
    %cst_195 = arith.constant 1.000000e+00 : f32
    %460 = vector.broadcast %cst_195 : f32 to vector<2x32xf32>
    %461 = arith.addf %459, %460 : vector<2x32xf32>
    %cst_196 = arith.constant 5.000000e-01 : f32
    %462 = vector.broadcast %cst_196 : f32 to vector<2x32xf32>
    %463 = arith.mulf %462, %461 : vector<2x32xf32>
    %464 = vector.extract_strided_slice %447 {offsets = [0, 64], sizes = [2, 32], strides = [1, 1]} : vector<2x128xf32> to vector<2x32xf32>
    %465 = math.tanh %464 : vector<2x32xf32>
    %466 = vector.extract_strided_slice %447 {offsets = [0, 96], sizes = [2, 32], strides = [1, 1]} : vector<2x128xf32> to vector<2x32xf32>
    %cst_197 = arith.constant 5.000000e-01 : f32
    %467 = vector.broadcast %cst_197 : f32 to vector<2x32xf32>
    %468 = arith.mulf %467, %466 : vector<2x32xf32>
    %469 = math.tanh %468 : vector<2x32xf32>
    %cst_198 = arith.constant 1.000000e+00 : f32
    %470 = vector.broadcast %cst_198 : f32 to vector<2x32xf32>
    %471 = arith.addf %469, %470 : vector<2x32xf32>
    %cst_199 = arith.constant 5.000000e-01 : f32
    %472 = vector.broadcast %cst_199 : f32 to vector<2x32xf32>
    %473 = arith.mulf %472, %471 : vector<2x32xf32>
    %474 = arith.mulf %463, %432 : vector<2x32xf32>
    %475 = arith.mulf %455, %465 : vector<2x32xf32>
    %476 = arith.addf %474, %475 : vector<2x32xf32>
    %477 = math.tanh %476 : vector<2x32xf32>
    %478 = arith.mulf %473, %477 : vector<2x32xf32>
    %479 = arith.index_cast %c2_i32_187 : i32 to index
    %c0_200 = arith.constant 0 : index
    %c0_201 = arith.constant 0 : index
    %480 = vector.load %arg8[%479, %c0_200, %c0_201] : memref<8x2x32xf32, #tpu.memory_space<vmem>>, vector<1x2x32xf32>
    %481 = vector.shape_cast %480 : vector<1x2x32xf32> to vector<2x32xf32>
    %482 = arith.mulf %478, %481 : vector<2x32xf32>
    %483 = arith.index_cast %c2_i32_187 : i32 to index
    %c0_202 = arith.constant 0 : index
    %c0_203 = arith.constant 0 : index
    %484 = vector.load %arg9[%483, %c0_202, %c0_203] : memref<8x2x32xf32, #tpu.memory_space<vmem>>, vector<1x2x32xf32>
    %485 = vector.shape_cast %484 : vector<1x2x32xf32> to vector<2x32xf32>
    %486 = vector.shape_cast %482 : vector<2x32xf32> to vector<1x2x32xf32>
    tpu.vector_store %arg9[%483, %c0_202, %c0_203], %486 {strides = array<i32>} : memref<8x2x32xf32, #tpu.memory_space<vmem>>, vector<1x2x32xf32>,
    %c3_i32_204 = arith.constant 3 : i32
    %c2_i32_205 = arith.constant 2 : i32
    %487 = arith.muli %c3_i32_204, %c2_i32_205 : i32
    %488 = arith.index_cast %487 : i32 to index
    %c0_206 = arith.constant 0 : index
    %489 = vector.load %arg12[%488, %c0_206] : memref<16x128xf32, #tpu.memory_space<vmem>>, vector<2x128xf32>
    %cst_207 = arith.constant dense<0.000000e+00> : vector<2x128xf32>
    %490 = tpu.matmul %478, %343, %cst_207 {dimension_numbers = #tpu.dot_dimension_numbers<[1], [0], [0], [1], [0, 0, 1, 1], [], []>} : vector<2x32xf32>, vector<32x128xf32>, vector<2x128xf32> -> vector<2x128xf32>
    %491 = arith.addf %489, %490 : vector<2x128xf32>
    %492 = vector.extract_strided_slice %491 {offsets = [0, 0], sizes = [2, 32], strides = [1, 1]} : vector<2x128xf32> to vector<2x32xf32>
    %cst_208 = arith.constant 5.000000e-01 : f32
    %493 = vector.broadcast %cst_208 : f32 to vector<2x32xf32>
    %494 = arith.mulf %493, %492 : vector<2x32xf32>
    %495 = math.tanh %494 : vector<2x32xf32>
    %cst_209 = arith.constant 1.000000e+00 : f32
    %496 = vector.broadcast %cst_209 : f32 to vector<2x32xf32>
    %497 = arith.addf %495, %496 : vector<2x32xf32>
    %cst_210 = arith.constant 5.000000e-01 : f32
    %498 = vector.broadcast %cst_210 : f32 to vector<2x32xf32>
    %499 = arith.mulf %498, %497 : vector<2x32xf32>
    %500 = vector.extract_strided_slice %491 {offsets = [0, 32], sizes = [2, 32], strides = [1, 1]} : vector<2x128xf32> to vector<2x32xf32>
    %cst_211 = arith.constant 5.000000e-01 : f32
    %501 = vector.broadcast %cst_211 : f32 to vector<2x32xf32>
    %502 = arith.mulf %501, %500 : vector<2x32xf32>
    %503 = math.tanh %502 : vector<2x32xf32>
    %cst_212 = arith.constant 1.000000e+00 : f32
    %504 = vector.broadcast %cst_212 : f32 to vector<2x32xf32>
    %505 = arith.addf %503, %504 : vector<2x32xf32>
    %cst_213 = arith.constant 5.000000e-01 : f32
    %506 = vector.broadcast %cst_213 : f32 to vector<2x32xf32>
    %507 = arith.mulf %506, %505 : vector<2x32xf32>
    %508 = vector.extract_strided_slice %491 {offsets = [0, 64], sizes = [2, 32], strides = [1, 1]} : vector<2x128xf32> to vector<2x32xf32>
    %509 = math.tanh %508 : vector<2x32xf32>
    %510 = vector.extract_strided_slice %491 {offsets = [0, 96], sizes = [2, 32], strides = [1, 1]} : vector<2x128xf32> to vector<2x32xf32>
    %cst_214 = arith.constant 5.000000e-01 : f32
    %511 = vector.broadcast %cst_214 : f32 to vector<2x32xf32>
    %512 = arith.mulf %511, %510 : vector<2x32xf32>
    %513 = math.tanh %512 : vector<2x32xf32>
    %cst_215 = arith.constant 1.000000e+00 : f32
    %514 = vector.broadcast %cst_215 : f32 to vector<2x32xf32>
    %515 = arith.addf %513, %514 : vector<2x32xf32>
    %cst_216 = arith.constant 5.000000e-01 : f32
    %516 = vector.broadcast %cst_216 : f32 to vector<2x32xf32>
    %517 = arith.mulf %516, %515 : vector<2x32xf32>
    %518 = arith.mulf %507, %476 : vector<2x32xf32>
    %519 = arith.mulf %499, %509 : vector<2x32xf32>
    %520 = arith.addf %518, %519 : vector<2x32xf32>
    %521 = math.tanh %520 : vector<2x32xf32>
    %522 = arith.mulf %517, %521 : vector<2x32xf32>
    %523 = arith.index_cast %c3_i32_204 : i32 to index
    %c0_217 = arith.constant 0 : index
    %c0_218 = arith.constant 0 : index
    %524 = vector.load %arg8[%523, %c0_217, %c0_218] : memref<8x2x32xf32, #tpu.memory_space<vmem>>, vector<1x2x32xf32>
    %525 = vector.shape_cast %524 : vector<1x2x32xf32> to vector<2x32xf32>
    %526 = arith.mulf %522, %525 : vector<2x32xf32>
    %527 = arith.index_cast %c3_i32_204 : i32 to index
    %c0_219 = arith.constant 0 : index
    %c0_220 = arith.constant 0 : index
    %528 = vector.load %arg9[%527, %c0_219, %c0_220] : memref<8x2x32xf32, #tpu.memory_space<vmem>>, vector<1x2x32xf32>
    %529 = vector.shape_cast %528 : vector<1x2x32xf32> to vector<2x32xf32>
    %530 = vector.shape_cast %526 : vector<2x32xf32> to vector<1x2x32xf32>
    tpu.vector_store %arg9[%527, %c0_219, %c0_220], %530 {strides = array<i32>} : memref<8x2x32xf32, #tpu.memory_space<vmem>>, vector<1x2x32xf32>,
    %c4_i32_221 = arith.constant 4 : i32
    %c2_i32_222 = arith.constant 2 : i32
    %531 = arith.muli %c4_i32_221, %c2_i32_222 : i32
    %532 = arith.index_cast %531 : i32 to index
    %c0_223 = arith.constant 0 : index
    %533 = vector.load %arg12[%532, %c0_223] : memref<16x128xf32, #tpu.memory_space<vmem>>, vector<2x128xf32>
    %cst_224 = arith.constant dense<0.000000e+00> : vector<2x128xf32>
    %534 = tpu.matmul %522, %343, %cst_224 {dimension_numbers = #tpu.dot_dimension_numbers<[1], [0], [0], [1], [0, 0, 1, 1], [], []>} : vector<2x32xf32>, vector<32x128xf32>, vector<2x128xf32> -> vector<2x128xf32>
    %535 = arith.addf %533, %534 : vector<2x128xf32>
    %536 = vector.extract_strided_slice %535 {offsets = [0, 0], sizes = [2, 32], strides = [1, 1]} : vector<2x128xf32> to vector<2x32xf32>
    %cst_225 = arith.constant 5.000000e-01 : f32
    %537 = vector.broadcast %cst_225 : f32 to vector<2x32xf32>
    %538 = arith.mulf %537, %536 : vector<2x32xf32>
    %539 = math.tanh %538 : vector<2x32xf32>
    %cst_226 = arith.constant 1.000000e+00 : f32
    %540 = vector.broadcast %cst_226 : f32 to vector<2x32xf32>
    %541 = arith.addf %539, %540 : vector<2x32xf32>
    %cst_227 = arith.constant 5.000000e-01 : f32
    %542 = vector.broadcast %cst_227 : f32 to vector<2x32xf32>
    %543 = arith.mulf %542, %541 : vector<2x32xf32>
    %544 = vector.extract_strided_slice %535 {offsets = [0, 32], sizes = [2, 32], strides = [1, 1]} : vector<2x128xf32> to vector<2x32xf32>
    %cst_228 = arith.constant 5.000000e-01 : f32
    %545 = vector.broadcast %cst_228 : f32 to vector<2x32xf32>
    %546 = arith.mulf %545, %544 : vector<2x32xf32>
    %547 = math.tanh %546 : vector<2x32xf32>
    %cst_229 = arith.constant 1.000000e+00 : f32
    %548 = vector.broadcast %cst_229 : f32 to vector<2x32xf32>
    %549 = arith.addf %547, %548 : vector<2x32xf32>
    %cst_230 = arith.constant 5.000000e-01 : f32
    %550 = vector.broadcast %cst_230 : f32 to vector<2x32xf32>
    %551 = arith.mulf %550, %549 : vector<2x32xf32>
    %552 = vector.extract_strided_slice %535 {offsets = [0, 64], sizes = [2, 32], strides = [1, 1]} : vector<2x128xf32> to vector<2x32xf32>
    %553 = math.tanh %552 : vector<2x32xf32>
    %554 = vector.extract_strided_slice %535 {offsets = [0, 96], sizes = [2, 32], strides = [1, 1]} : vector<2x128xf32> to vector<2x32xf32>
    %cst_231 = arith.constant 5.000000e-01 : f32
    %555 = vector.broadcast %cst_231 : f32 to vector<2x32xf32>
    %556 = arith.mulf %555, %554 : vector<2x32xf32>
    %557 = math.tanh %556 : vector<2x32xf32>
    %cst_232 = arith.constant 1.000000e+00 : f32
    %558 = vector.broadcast %cst_232 : f32 to vector<2x32xf32>
    %559 = arith.addf %557, %558 : vector<2x32xf32>
    %cst_233 = arith.constant 5.000000e-01 : f32
    %560 = vector.broadcast %cst_233 : f32 to vector<2x32xf32>
    %561 = arith.mulf %560, %559 : vector<2x32xf32>
    %562 = arith.mulf %551, %520 : vector<2x32xf32>
    %563 = arith.mulf %543, %553 : vector<2x32xf32>
    %564 = arith.addf %562, %563 : vector<2x32xf32>
    %565 = math.tanh %564 : vector<2x32xf32>
    %566 = arith.mulf %561, %565 : vector<2x32xf32>
    %567 = arith.index_cast %c4_i32_221 : i32 to index
    %c0_234 = arith.constant 0 : index
    %c0_235 = arith.constant 0 : index
    %568 = vector.load %arg8[%567, %c0_234, %c0_235] : memref<8x2x32xf32, #tpu.memory_space<vmem>>, vector<1x2x32xf32>
    %569 = vector.shape_cast %568 : vector<1x2x32xf32> to vector<2x32xf32>
    %570 = arith.mulf %566, %569 : vector<2x32xf32>
    %571 = arith.index_cast %c4_i32_221 : i32 to index
    %c0_236 = arith.constant 0 : index
    %c0_237 = arith.constant 0 : index
    %572 = vector.load %arg9[%571, %c0_236, %c0_237] : memref<8x2x32xf32, #tpu.memory_space<vmem>>, vector<1x2x32xf32>
    %573 = vector.shape_cast %572 : vector<1x2x32xf32> to vector<2x32xf32>
    %574 = vector.shape_cast %570 : vector<2x32xf32> to vector<1x2x32xf32>
    tpu.vector_store %arg9[%571, %c0_236, %c0_237], %574 {strides = array<i32>} : memref<8x2x32xf32, #tpu.memory_space<vmem>>, vector<1x2x32xf32>,
    %c5_i32_238 = arith.constant 5 : i32
    %c2_i32_239 = arith.constant 2 : i32
    %575 = arith.muli %c5_i32_238, %c2_i32_239 : i32
    %576 = arith.index_cast %575 : i32 to index
    %c0_240 = arith.constant 0 : index
    %577 = vector.load %arg12[%576, %c0_240] : memref<16x128xf32, #tpu.memory_space<vmem>>, vector<2x128xf32>
    %cst_241 = arith.constant dense<0.000000e+00> : vector<2x128xf32>
    %578 = tpu.matmul %566, %343, %cst_241 {dimension_numbers = #tpu.dot_dimension_numbers<[1], [0], [0], [1], [0, 0, 1, 1], [], []>} : vector<2x32xf32>, vector<32x128xf32>, vector<2x128xf32> -> vector<2x128xf32>
    %579 = arith.addf %577, %578 : vector<2x128xf32>
    %580 = vector.extract_strided_slice %579 {offsets = [0, 0], sizes = [2, 32], strides = [1, 1]} : vector<2x128xf32> to vector<2x32xf32>
    %cst_242 = arith.constant 5.000000e-01 : f32
    %581 = vector.broadcast %cst_242 : f32 to vector<2x32xf32>
    %582 = arith.mulf %581, %580 : vector<2x32xf32>
    %583 = math.tanh %582 : vector<2x32xf32>
    %cst_243 = arith.constant 1.000000e+00 : f32
    %584 = vector.broadcast %cst_243 : f32 to vector<2x32xf32>
    %585 = arith.addf %583, %584 : vector<2x32xf32>
    %cst_244 = arith.constant 5.000000e-01 : f32
    %586 = vector.broadcast %cst_244 : f32 to vector<2x32xf32>
    %587 = arith.mulf %586, %585 : vector<2x32xf32>
    %588 = vector.extract_strided_slice %579 {offsets = [0, 32], sizes = [2, 32], strides = [1, 1]} : vector<2x128xf32> to vector<2x32xf32>
    %cst_245 = arith.constant 5.000000e-01 : f32
    %589 = vector.broadcast %cst_245 : f32 to vector<2x32xf32>
    %590 = arith.mulf %589, %588 : vector<2x32xf32>
    %591 = math.tanh %590 : vector<2x32xf32>
    %cst_246 = arith.constant 1.000000e+00 : f32
    %592 = vector.broadcast %cst_246 : f32 to vector<2x32xf32>
    %593 = arith.addf %591, %592 : vector<2x32xf32>
    %cst_247 = arith.constant 5.000000e-01 : f32
    %594 = vector.broadcast %cst_247 : f32 to vector<2x32xf32>
    %595 = arith.mulf %594, %593 : vector<2x32xf32>
    %596 = vector.extract_strided_slice %579 {offsets = [0, 64], sizes = [2, 32], strides = [1, 1]} : vector<2x128xf32> to vector<2x32xf32>
    %597 = math.tanh %596 : vector<2x32xf32>
    %598 = vector.extract_strided_slice %579 {offsets = [0, 96], sizes = [2, 32], strides = [1, 1]} : vector<2x128xf32> to vector<2x32xf32>
    %cst_248 = arith.constant 5.000000e-01 : f32
    %599 = vector.broadcast %cst_248 : f32 to vector<2x32xf32>
    %600 = arith.mulf %599, %598 : vector<2x32xf32>
    %601 = math.tanh %600 : vector<2x32xf32>
    %cst_249 = arith.constant 1.000000e+00 : f32
    %602 = vector.broadcast %cst_249 : f32 to vector<2x32xf32>
    %603 = arith.addf %601, %602 : vector<2x32xf32>
    %cst_250 = arith.constant 5.000000e-01 : f32
    %604 = vector.broadcast %cst_250 : f32 to vector<2x32xf32>
    %605 = arith.mulf %604, %603 : vector<2x32xf32>
    %606 = arith.mulf %595, %564 : vector<2x32xf32>
    %607 = arith.mulf %587, %597 : vector<2x32xf32>
    %608 = arith.addf %606, %607 : vector<2x32xf32>
    %609 = math.tanh %608 : vector<2x32xf32>
    %610 = arith.mulf %605, %609 : vector<2x32xf32>
    %611 = arith.index_cast %c5_i32_238 : i32 to index
    %c0_251 = arith.constant 0 : index
    %c0_252 = arith.constant 0 : index
    %612 = vector.load %arg8[%611, %c0_251, %c0_252] : memref<8x2x32xf32, #tpu.memory_space<vmem>>, vector<1x2x32xf32>
    %613 = vector.shape_cast %612 : vector<1x2x32xf32> to vector<2x32xf32>
    %614 = arith.mulf %610, %613 : vector<2x32xf32>
    %615 = arith.index_cast %c5_i32_238 : i32 to index
    %c0_253 = arith.constant 0 : index
    %c0_254 = arith.constant 0 : index
    %616 = vector.load %arg9[%615, %c0_253, %c0_254] : memref<8x2x32xf32, #tpu.memory_space<vmem>>, vector<1x2x32xf32>
    %617 = vector.shape_cast %616 : vector<1x2x32xf32> to vector<2x32xf32>
    %618 = vector.shape_cast %614 : vector<2x32xf32> to vector<1x2x32xf32>
    tpu.vector_store %arg9[%615, %c0_253, %c0_254], %618 {strides = array<i32>} : memref<8x2x32xf32, #tpu.memory_space<vmem>>, vector<1x2x32xf32>,
    %c6_i32_255 = arith.constant 6 : i32
    %c2_i32_256 = arith.constant 2 : i32
    %619 = arith.muli %c6_i32_255, %c2_i32_256 : i32
    %620 = arith.index_cast %619 : i32 to index
    %c0_257 = arith.constant 0 : index
    %621 = vector.load %arg12[%620, %c0_257] : memref<16x128xf32, #tpu.memory_space<vmem>>, vector<2x128xf32>
    %cst_258 = arith.constant dense<0.000000e+00> : vector<2x128xf32>
    %622 = tpu.matmul %610, %343, %cst_258 {dimension_numbers = #tpu.dot_dimension_numbers<[1], [0], [0], [1], [0, 0, 1, 1], [], []>} : vector<2x32xf32>, vector<32x128xf32>, vector<2x128xf32> -> vector<2x128xf32>
    %623 = arith.addf %621, %622 : vector<2x128xf32>
    %624 = vector.extract_strided_slice %623 {offsets = [0, 0], sizes = [2, 32], strides = [1, 1]} : vector<2x128xf32> to vector<2x32xf32>
    %cst_259 = arith.constant 5.000000e-01 : f32
    %625 = vector.broadcast %cst_259 : f32 to vector<2x32xf32>
    %626 = arith.mulf %625, %624 : vector<2x32xf32>
    %627 = math.tanh %626 : vector<2x32xf32>
    %cst_260 = arith.constant 1.000000e+00 : f32
    %628 = vector.broadcast %cst_260 : f32 to vector<2x32xf32>
    %629 = arith.addf %627, %628 : vector<2x32xf32>
    %cst_261 = arith.constant 5.000000e-01 : f32
    %630 = vector.broadcast %cst_261 : f32 to vector<2x32xf32>
    %631 = arith.mulf %630, %629 : vector<2x32xf32>
    %632 = vector.extract_strided_slice %623 {offsets = [0, 32], sizes = [2, 32], strides = [1, 1]} : vector<2x128xf32> to vector<2x32xf32>
    %cst_262 = arith.constant 5.000000e-01 : f32
    %633 = vector.broadcast %cst_262 : f32 to vector<2x32xf32>
    %634 = arith.mulf %633, %632 : vector<2x32xf32>
    %635 = math.tanh %634 : vector<2x32xf32>
    %cst_263 = arith.constant 1.000000e+00 : f32
    %636 = vector.broadcast %cst_263 : f32 to vector<2x32xf32>
    %637 = arith.addf %635, %636 : vector<2x32xf32>
    %cst_264 = arith.constant 5.000000e-01 : f32
    %638 = vector.broadcast %cst_264 : f32 to vector<2x32xf32>
    %639 = arith.mulf %638, %637 : vector<2x32xf32>
    %640 = vector.extract_strided_slice %623 {offsets = [0, 64], sizes = [2, 32], strides = [1, 1]} : vector<2x128xf32> to vector<2x32xf32>
    %641 = math.tanh %640 : vector<2x32xf32>
    %642 = vector.extract_strided_slice %623 {offsets = [0, 96], sizes = [2, 32], strides = [1, 1]} : vector<2x128xf32> to vector<2x32xf32>
    %cst_265 = arith.constant 5.000000e-01 : f32
    %643 = vector.broadcast %cst_265 : f32 to vector<2x32xf32>
    %644 = arith.mulf %643, %642 : vector<2x32xf32>
    %645 = math.tanh %644 : vector<2x32xf32>
    %cst_266 = arith.constant 1.000000e+00 : f32
    %646 = vector.broadcast %cst_266 : f32 to vector<2x32xf32>
    %647 = arith.addf %645, %646 : vector<2x32xf32>
    %cst_267 = arith.constant 5.000000e-01 : f32
    %648 = vector.broadcast %cst_267 : f32 to vector<2x32xf32>
    %649 = arith.mulf %648, %647 : vector<2x32xf32>
    %650 = arith.mulf %639, %608 : vector<2x32xf32>
    %651 = arith.mulf %631, %641 : vector<2x32xf32>
    %652 = arith.addf %650, %651 : vector<2x32xf32>
    %653 = math.tanh %652 : vector<2x32xf32>
    %654 = arith.mulf %649, %653 : vector<2x32xf32>
    %655 = arith.index_cast %c6_i32_255 : i32 to index
    %c0_268 = arith.constant 0 : index
    %c0_269 = arith.constant 0 : index
    %656 = vector.load %arg8[%655, %c0_268, %c0_269] : memref<8x2x32xf32, #tpu.memory_space<vmem>>, vector<1x2x32xf32>
    %657 = vector.shape_cast %656 : vector<1x2x32xf32> to vector<2x32xf32>
    %658 = arith.mulf %654, %657 : vector<2x32xf32>
    %659 = arith.index_cast %c6_i32_255 : i32 to index
    %c0_270 = arith.constant 0 : index
    %c0_271 = arith.constant 0 : index
    %660 = vector.load %arg9[%659, %c0_270, %c0_271] : memref<8x2x32xf32, #tpu.memory_space<vmem>>, vector<1x2x32xf32>
    %661 = vector.shape_cast %660 : vector<1x2x32xf32> to vector<2x32xf32>
    %662 = vector.shape_cast %658 : vector<2x32xf32> to vector<1x2x32xf32>
    tpu.vector_store %arg9[%659, %c0_270, %c0_271], %662 {strides = array<i32>} : memref<8x2x32xf32, #tpu.memory_space<vmem>>, vector<1x2x32xf32>,
    %c7_i32_272 = arith.constant 7 : i32
    %c2_i32_273 = arith.constant 2 : i32
    %663 = arith.muli %c7_i32_272, %c2_i32_273 : i32
    %664 = arith.index_cast %663 : i32 to index
    %c0_274 = arith.constant 0 : index
    %665 = vector.load %arg12[%664, %c0_274] : memref<16x128xf32, #tpu.memory_space<vmem>>, vector<2x128xf32>
    %cst_275 = arith.constant dense<0.000000e+00> : vector<2x128xf32>
    %666 = tpu.matmul %654, %343, %cst_275 {dimension_numbers = #tpu.dot_dimension_numbers<[1], [0], [0], [1], [0, 0, 1, 1], [], []>} : vector<2x32xf32>, vector<32x128xf32>, vector<2x128xf32> -> vector<2x128xf32>
    %667 = arith.addf %665, %666 : vector<2x128xf32>
    %668 = vector.extract_strided_slice %667 {offsets = [0, 0], sizes = [2, 32], strides = [1, 1]} : vector<2x128xf32> to vector<2x32xf32>
    %cst_276 = arith.constant 5.000000e-01 : f32
    %669 = vector.broadcast %cst_276 : f32 to vector<2x32xf32>
    %670 = arith.mulf %669, %668 : vector<2x32xf32>
    %671 = math.tanh %670 : vector<2x32xf32>
    %cst_277 = arith.constant 1.000000e+00 : f32
    %672 = vector.broadcast %cst_277 : f32 to vector<2x32xf32>
    %673 = arith.addf %671, %672 : vector<2x32xf32>
    %cst_278 = arith.constant 5.000000e-01 : f32
    %674 = vector.broadcast %cst_278 : f32 to vector<2x32xf32>
    %675 = arith.mulf %674, %673 : vector<2x32xf32>
    %676 = vector.extract_strided_slice %667 {offsets = [0, 32], sizes = [2, 32], strides = [1, 1]} : vector<2x128xf32> to vector<2x32xf32>
    %cst_279 = arith.constant 5.000000e-01 : f32
    %677 = vector.broadcast %cst_279 : f32 to vector<2x32xf32>
    %678 = arith.mulf %677, %676 : vector<2x32xf32>
    %679 = math.tanh %678 : vector<2x32xf32>
    %cst_280 = arith.constant 1.000000e+00 : f32
    %680 = vector.broadcast %cst_280 : f32 to vector<2x32xf32>
    %681 = arith.addf %679, %680 : vector<2x32xf32>
    %cst_281 = arith.constant 5.000000e-01 : f32
    %682 = vector.broadcast %cst_281 : f32 to vector<2x32xf32>
    %683 = arith.mulf %682, %681 : vector<2x32xf32>
    %684 = vector.extract_strided_slice %667 {offsets = [0, 64], sizes = [2, 32], strides = [1, 1]} : vector<2x128xf32> to vector<2x32xf32>
    %685 = math.tanh %684 : vector<2x32xf32>
    %686 = vector.extract_strided_slice %667 {offsets = [0, 96], sizes = [2, 32], strides = [1, 1]} : vector<2x128xf32> to vector<2x32xf32>
    %cst_282 = arith.constant 5.000000e-01 : f32
    %687 = vector.broadcast %cst_282 : f32 to vector<2x32xf32>
    %688 = arith.mulf %687, %686 : vector<2x32xf32>
    %689 = math.tanh %688 : vector<2x32xf32>
    %cst_283 = arith.constant 1.000000e+00 : f32
    %690 = vector.broadcast %cst_283 : f32 to vector<2x32xf32>
    %691 = arith.addf %689, %690 : vector<2x32xf32>
    %cst_284 = arith.constant 5.000000e-01 : f32
    %692 = vector.broadcast %cst_284 : f32 to vector<2x32xf32>
    %693 = arith.mulf %692, %691 : vector<2x32xf32>
    %694 = arith.mulf %683, %652 : vector<2x32xf32>
    %695 = arith.mulf %675, %685 : vector<2x32xf32>
    %696 = arith.addf %694, %695 : vector<2x32xf32>
    %697 = math.tanh %696 : vector<2x32xf32>
    %698 = arith.mulf %693, %697 : vector<2x32xf32>
    %699 = arith.index_cast %c7_i32_272 : i32 to index
    %c0_285 = arith.constant 0 : index
    %c0_286 = arith.constant 0 : index
    %700 = vector.load %arg8[%699, %c0_285, %c0_286] : memref<8x2x32xf32, #tpu.memory_space<vmem>>, vector<1x2x32xf32>
    %701 = vector.shape_cast %700 : vector<1x2x32xf32> to vector<2x32xf32>
    %702 = arith.mulf %698, %701 : vector<2x32xf32>
    %703 = arith.index_cast %c7_i32_272 : i32 to index
    %c0_287 = arith.constant 0 : index
    %c0_288 = arith.constant 0 : index
    %704 = vector.load %arg9[%703, %c0_287, %c0_288] : memref<8x2x32xf32, #tpu.memory_space<vmem>>, vector<1x2x32xf32>
    %705 = vector.shape_cast %704 : vector<1x2x32xf32> to vector<2x32xf32>
    %706 = vector.shape_cast %702 : vector<2x32xf32> to vector<1x2x32xf32>
    tpu.vector_store %arg9[%703, %c0_287, %c0_288], %706 {strides = array<i32>} : memref<8x2x32xf32, #tpu.memory_space<vmem>>, vector<1x2x32xf32>,
    %c8_i32_289 = arith.constant 8 : i32
    %c1_290 = arith.constant 1 : index
    %c0_291 = arith.constant 0 : index
    %c0_292 = arith.constant 0 : index
    %707 = vector.load %arg10[%c1_290, %c0_291, %c0_292] : memref<2x2x32xf32, #tpu.memory_space<vmem>>, vector<1x2x32xf32>
    %708 = vector.shape_cast %707 : vector<1x2x32xf32> to vector<2x32xf32>
    %709 = vector.shape_cast %698 : vector<2x32xf32> to vector<1x2x32xf32>
    tpu.vector_store %arg10[%c1_290, %c0_291, %c0_292], %709 {strides = array<i32>} : memref<2x2x32xf32, #tpu.memory_space<vmem>>, vector<1x2x32xf32>,
    %c1_293 = arith.constant 1 : index
    %c0_294 = arith.constant 0 : index
    %c0_295 = arith.constant 0 : index
    %710 = vector.load %arg11[%c1_293, %c0_294, %c0_295] : memref<2x2x32xf32, #tpu.memory_space<vmem>>, vector<1x2x32xf32>
    %711 = vector.shape_cast %710 : vector<1x2x32xf32> to vector<2x32xf32>
    %712 = vector.shape_cast %696 : vector<2x32xf32> to vector<1x2x32xf32>
    tpu.vector_store %arg11[%c1_293, %c0_294, %c0_295], %712 {strides = array<i32>} : memref<2x2x32xf32, #tpu.memory_space<vmem>>, vector<1x2x32xf32>,
    return
  }
  func.func @transform_0(%arg0: i32) -> (i32, i32, i32) {
    %c0_i32 = arith.constant 0 : i32
    %c0_i32_0 = arith.constant 0 : i32
    %c0_i32_1 = arith.constant 0 : i32
    return %arg0, %c0_i32, %c0_i32_0 : i32, i32, i32
  }
  func.func @transform_1(%arg0: i32) -> (i32, i32) {
    %c0_i32 = arith.constant 0 : i32
    %c0_i32_0 = arith.constant 0 : i32
    %c0_i32_1 = arith.constant 0 : i32
    return %c0_i32, %c0_i32_0 : i32, i32
  }
  func.func @transform_2(%arg0: i32) -> (i32, i32) {
    %c0_i32 = arith.constant 0 : i32
    %c0_i32_0 = arith.constant 0 : i32
    %c0_i32_1 = arith.constant 0 : i32
    return %c0_i32, %c0_i32_0 : i32, i32
  }
  func.func @transform_3(%arg0: i32) -> (i32, i32) {
    %c0_i32 = arith.constant 0 : i32
    %c0_i32_0 = arith.constant 0 : i32
    %c0_i32_1 = arith.constant 0 : i32
    return %c0_i32, %c0_i32_0 : i32, i32
  }
  func.func @transform_4(%arg0: i32) -> (i32, i32) {
    %c0_i32 = arith.constant 0 : i32
    %c0_i32_0 = arith.constant 0 : i32
    %c0_i32_1 = arith.constant 0 : i32
    return %c0_i32, %c0_i32_0 : i32, i32
  }
  func.func @transform_5(%arg0: i32) -> (i32, i32) {
    %c0_i32 = arith.constant 0 : i32
    %c0_i32_0 = arith.constant 0 : i32
    %c0_i32_1 = arith.constant 0 : i32
    return %c0_i32, %c0_i32_0 : i32, i32
  }
  func.func @transform_6(%arg0: i32) -> (i32, i32) {
    %c0_i32 = arith.constant 0 : i32
    %c0_i32_0 = arith.constant 0 : i32
    %c0_i32_1 = arith.constant 0 : i32
    return %c0_i32, %c0_i32_0 : i32, i32
  }
  func.func @transform_7(%arg0: i32) -> (i32, i32, i32) {
    %c0_i32 = arith.constant 0 : i32
    %c0_i32_0 = arith.constant 0 : i32
    %c0_i32_1 = arith.constant 0 : i32
    return %arg0, %c0_i32, %c0_i32_0 : i32, i32, i32
  }
  func.func @transform_8(%arg0: i32) -> (i32, i32, i32) {
    %c0_i32 = arith.constant 0 : i32
    %c0_i32_0 = arith.constant 0 : i32
    %c0_i32_1 = arith.constant 0 : i32
    return %arg0, %c0_i32, %c0_i32_0 : i32, i32, i32
  }
}

</mosaic_0001>

<llo_original>
// kernel: tpu_custom_call.1
$region0: #{tpu_custom_call.1}
  #allocation0 [shape = 'u32[]', space=smem, size = 0x4, offset = 0x4, fixed_abs, tag = 'smem constant byte address 0x4 - core index']
  #allocation1 [shape = 'u32[144,128]{1,0:T(1,128)}', space=vmem, size = 0x12000, scoped, tag = 'internal scratch']
  #allocation2 [shape = 'f32[2,2,32]{2,1,0:T(2,128)}', space=vmem, size = 0x800, scoped, tag = 'scratch operand']
  #allocation3 [shape = 'f32[2,2,32]{2,1,0:T(2,128)}', space=vmem, size = 0x800, scoped, tag = 'scratch operand']
  #allocation4 [shape = 'f32[16,128]{1,0:T(8,128)}', space=vmem, size = 0x2000, scoped, tag = 'scratch operand']
  #allocation5 [shape = 'f32[8,2,32]{2,1,0:T(2,128)}', space=vmem, size = 0x2000, scoped, tag = 'scratch operand']
  %s0 = inlined_call_operand.vmem [shape: f32[8,2,4], index: 0, kind: input, shape index: {}]
  %s1 = inlined_call_operand.hbm [shape: f32[4,128], index: 1, kind: input, shape index: {}]
  %s2 = inlined_call_operand.hbm [shape: f32[32,128], index: 2, kind: input, shape index: {}]
  %s3 = inlined_call_operand.vmem [shape: f32[1,128], index: 3, kind: input, shape index: {}]
  %s4 = inlined_call_operand.hbm [shape: f32[32,128], index: 4, kind: input, shape index: {}]
  %s5 = inlined_call_operand.vmem [shape: f32[32,128], index: 5, kind: input, shape index: {}]
  %s6 = inlined_call_operand.vmem [shape: f32[1,128], index: 6, kind: input, shape index: {}]
  %s7 = inlined_call_operand.hbm [shape: f32[8,2,32], index: 7, kind: input, shape index: {}]
  %s8 = inlined_call_operand.hbm [shape: f32[8,2,32], index: 8, kind: output, shape index: {}]
  %s9 = sld [smem:[#allocation0]]
  $region62: #{tpu_custom_call.1} parent=0
    _
  %s11 = ssub.s32 1, %s9
  %s12 = scalar_select 0, %s11, %s9
  $region1: #{tpu_custom_call.1} parent=0
    #allocation6 [shape = 'u8[2048]{0}', space=vmem, size = 0x800, scoped, tag = 'input window, operand 1, single buffered']
    #allocation7 [shape = 's32[1]{0}', space=sflag, size = 0x4, scoped, tag = 'scoped memory for tpu_custom_call.1']
    #allocation8 [shape = 's32[1]{0}', space=sflag, size = 0x4, scoped, tag = 'scoped memory for tpu_custom_call.1']
    #allocation9 [shape = 'u8[16384]{0}', space=vmem, size = 0x4000, scoped, tag = 'input window, operand 2, single buffered']
    #allocation10 [shape = 's32[1]{0}', space=sflag, size = 0x4, scoped, tag = 'scoped memory for tpu_custom_call.1']
    #allocation11 [shape = 'u8[16384]{0}', space=vmem, size = 0x4000, scoped, tag = 'input window, operand 4, single buffered']
    #allocation12 [shape = 'u8[8192]{0}', space=vmem, size = 0x2000, scoped, tag = 'input window, operand 7, single buffered']
    #allocation13 [shape = 's32[1]{0}', space=sflag, size = 0x4, scoped, tag = 'scoped memory for tpu_custom_call.1']
    #allocation14 [shape = 'u8[8192]{0}', space=vmem, size = 0x2000, scoped, tag = 'output window, operand 0, single buffered']
    %13 = vsyncpa [#allocation7], 0
    %14 = vsyncpa [#allocation10], 0
    %15 = vsyncpa [#allocation13], 0
    %16 = vsyncpa [#allocation8], 0
    // Predicated region
    $region2: #{tpu_custom_call.1} parent=1 // pred_check
      _
    $region3: #{tpu_custom_call.1} parent=1 // pred_check_branch
      %18 = sbr.rel (0) target = $region5
    $region4: #{tpu_custom_call.1} parent=1 // pred_region
      _
    $region5: #{tpu_custom_call.1} parent=1 // pred_fallthru
      _
    // Predicated region
    $region6: #{tpu_custom_call.1} parent=1 // pred_check
      _
    $region7: #{tpu_custom_call.1} parent=1 // pred_check_branch
      %20 = sbr.rel (0) target = $region9
    $region8: #{tpu_custom_call.1} parent=1 // pred_region
      %s22 = ssub.s32 64, 64
      %23 = vsyncadd [#allocation7], %s22
      %s25 = sshll.u32 [#allocation6], 4
      %s26 = int_to_ptr.vmem [resolvable:$true] %s25
      %28 = dma.hbm_to_vmem [thread:$0]  %s1, 64, %s26, [#allocation7]
    $region9: #{tpu_custom_call.1} parent=1 // pred_fallthru
      _
    // Predicated region
    $region10: #{tpu_custom_call.1} parent=1 // pred_check
      _
    $region11: #{tpu_custom_call.1} parent=1 // pred_check_branch
      %30 = sbr.rel (0) target = $region13
    $region12: #{tpu_custom_call.1} parent=1 // pred_region
      %s32 = ssub.s32 512, 512
      %33 = vsyncadd [#allocation10], %s32
      %s34 = sshll.u32 [#allocation9], 4
      %s35 = int_to_ptr.vmem [resolvable:$true] %s34
      %40 = dma.hbm_to_vmem [thread:$0]  %s2, 512, %s35, [#allocation10], 128, 128, 8
    $region13: #{tpu_custom_call.1} parent=1 // pred_fallthru
      _
    // Predicated region
    $region14: #{tpu_custom_call.1} parent=1 // pred_check
      _
    $region15: #{tpu_custom_call.1} parent=1 // pred_check_branch
      %42 = sbr.rel (0) target = $region17
    $region16: #{tpu_custom_call.1} parent=1 // pred_region
      _
    $region17: #{tpu_custom_call.1} parent=1 // pred_fallthru
      _
    // Predicated region
    $region18: #{tpu_custom_call.1} parent=1 // pred_check
      _
    $region19: #{tpu_custom_call.1} parent=1 // pred_check_branch
      %44 = sbr.rel (0) target = $region21
    $region20: #{tpu_custom_call.1} parent=1 // pred_region
      %s46 = ssub.s32 512, 512
      %47 = vsyncadd [#allocation10], %s46
      %s48 = sshll.u32 [#allocation11], 4
      %s49 = int_to_ptr.vmem [resolvable:$true] %s48
      %54 = dma.hbm_to_vmem [thread:$0]  %s4, 512, %s49, [#allocation10], 128, 128, 8
    $region21: #{tpu_custom_call.1} parent=1 // pred_fallthru
      _
    // Predicated region
    $region22: #{tpu_custom_call.1} parent=1 // pred_check
      _
    $region23: #{tpu_custom_call.1} parent=1 // pred_check_branch
      %56 = sbr.rel (0) target = $region25
    $region24: #{tpu_custom_call.1} parent=1 // pred_region
      _
    $region25: #{tpu_custom_call.1} parent=1 // pred_fallthru
      _
    // Predicated region
    $region26: #{tpu_custom_call.1} parent=1 // pred_check
      _
    $region27: #{tpu_custom_call.1} parent=1 // pred_check_branch
      %58 = sbr.rel (0) target = $region29
    $region28: #{tpu_custom_call.1} parent=1 // pred_region
      _
    $region29: #{tpu_custom_call.1} parent=1 // pred_fallthru
      _
    // Predicated region
    $region30: #{tpu_custom_call.1} parent=1 // pred_check
      _
    $region31: #{tpu_custom_call.1} parent=1 // pred_check_branch
      %60 = sbr.rel (0) target = $region33
    $region32: #{tpu_custom_call.1} parent=1 // pred_region
      %s62 = ssub.s32 256, 256
      %63 = vsyncadd [#allocation13], %s62
      %s64 = sshll.u32 [#allocation12], 4
      %s65 = int_to_ptr.vmem [resolvable:$true] %s64
      %70 = dma.hbm_to_vmem [thread:$0]  %s7, 256, %s65, [#allocation13], 32, 32, 2
    $region33: #{tpu_custom_call.1} parent=1 // pred_fallthru
      _
    // Predicated region
    $region34: #{tpu_custom_call.1} parent=1 // pred_check
      _
    $region35: #{tpu_custom_call.1} parent=1 // pred_check_branch
      %72 = sbr.rel (0) target = $region37
    $region36: #{tpu_custom_call.1} parent=1 // pred_region
      %73 = dma.done [#allocation7], 64
    $region37: #{tpu_custom_call.1} parent=1 // pred_fallthru
      _
    // Predicated region
    $region38: #{tpu_custom_call.1} parent=1 // pred_check
      _
    $region39: #{tpu_custom_call.1} parent=1 // pred_check_branch
      %75 = sbr.rel (0) target = $region41
    $region40: #{tpu_custom_call.1} parent=1 // pred_region
      %76 = dma.done [#allocation10], 512
    $region41: #{tpu_custom_call.1} parent=1 // pred_fallthru
      _
    // Predicated region
    $region42: #{tpu_custom_call.1} parent=1 // pred_check
      _
    $region43: #{tpu_custom_call.1} parent=1 // pred_check_branch
      %78 = sbr.rel (0) target = $region45
    $region44: #{tpu_custom_call.1} parent=1 // pred_region
      %79 = dma.done [#allocation10], 512
    $region45: #{tpu_custom_call.1} parent=1 // pred_fallthru
      _
    // Predicated region
    $region46: #{tpu_custom_call.1} parent=1 // pred_check
      _
    $region47: #{tpu_custom_call.1} parent=1 // pred_check_branch
      %81 = sbr.rel (0) target = $region49
    $region48: #{tpu_custom_call.1} parent=1 // pred_region
      %82 = dma.done [#allocation13], 256
    $region49: #{tpu_custom_call.1} parent=1 // pred_fallthru
      _
    %p83 = scmp.eq.s32.totalorder 0, 0
    // Predicated region
    $region50: #{tpu_custom_call.1} parent=1 // pred_check
      %p84 = pneg %p83
    $region51: #{tpu_custom_call.1} parent=1 // pred_check_branch
      %86 = sbr.rel (%p84) target = $region53
    $region52: #{tpu_custom_call.1} parent=1 // pred_region
      %vm87 = vcmask 254976
      %88 = vst.msk [vmem:[#allocation2] sm:$0x3] %vm87, 0.0
      %89 = vst.msk [vmem:[#allocation2 + $0x2] sm:$0x3] %vm87, 0.0
      %90 = vst.msk [vmem:[#allocation3] sm:$0x3] %vm87, 0.0
      %91 = vst.msk [vmem:[#allocation3 + $0x2] sm:$0x3] %vm87, 0.0
    $region53: #{tpu_custom_call.1} parent=1 // pred_fallthru
      _
    %v92 = vld [vmem:[#allocation6] sm:$0xf]
    %v93 = vld [vmem:[#allocation9] sm:$0xff]
    %v94 = vld [vmem:[#allocation9 + $0x8] sm:$0xff]
    %v95 = vld [vmem:[#allocation9 + $0x10] sm:$0xff]
    %v96 = vld [vmem:[#allocation9 + $0x18] sm:$0xff]
    %v97 = vld [vmem:[%s3] sm:$0x1]
    %v98 = vld [vmem:[%s0] sm:$0x3]
    %v99 = vld [vmem:[%s0 + $0x2] sm:$0x3]
    %v100 = vld [vmem:[%s0 + $0x4] sm:$0x3]
    %v101 = vld [vmem:[%s0 + $0x6] sm:$0x3]
    %v102 = vld [vmem:[%s0 + $0x8] sm:$0x3]
    %v103 = vld [vmem:[%s0 + $0xa] sm:$0x3]
    %v104 = vld [vmem:[%s0 + $0xc] sm:$0x3]
    %v105 = vld [vmem:[%s0 + $0xe] sm:$0x3]
    %v107 = vlaneseq
    %v108 = vshrl.u32 %v107, 7
    %v109 = vsub.s32 0, %v108
    %v110 = vrot.slane %v97, %v109
    %v120 = vcombine.low %v98, %v99
    %v121 = vcombine.low %v100, %v101
    %v123 = vunpack.c.l.s4 1983009808
    %v124 = vunpack.c.0.s8 %v123
    %v125 = vlaneseq
    %v126 = vshrl.u32 %v125, 7
    %v127 = vsub.s32 %v124, %v126
    %v128 = vrot.slane %v120, %v127
    %v130 = vunpack.c.l.s4 1983009808
    %v131 = vunpack.c.0.s8 %v130
    %v132 = vlaneseq
    %v133 = vshrl.u32 %v132, 7
    %v134 = vsub.s32 %v131, %v133
    %v135 = vrot.slane %v121, %v134
    %v136 = vcombine.low %v128, %v135
    %v137 = vcombine.low %v102, %v103
    %v138 = vcombine.low %v104, %v105
    %v140 = vunpack.c.l.s4 1983009808
    %v141 = vunpack.c.0.s8 %v140
    %v142 = vlaneseq
    %v143 = vshrl.u32 %v142, 7
    %v144 = vsub.s32 %v141, %v143
    %v145 = vrot.slane %v137, %v144
    %v147 = vunpack.c.l.s4 1983009808
    %v148 = vunpack.c.0.s8 %v147
    %v149 = vlaneseq
    %v150 = vshrl.u32 %v149, 7
    %v151 = vsub.s32 %v148, %v150
    %v152 = vrot.slane %v138, %v151
    %v153 = vcombine.low %v145, %v152
    %vm154 = vcmask 31744
    %v155 = vsel %vm154, %v136, 0
    %v157 = vsel %vm154, %v153, 0
    %vm159 = vcmask 1043456
    %v161 = vsel %vm159, %v92, 0
    %163 = vmatprep.subr.mxu0 0.0
    %164 = vmatpush1.msra.mxu0 0.0
    %165 = vmatprep.subr.mxu0 0.0
    %166 = vmatpush1.msra.mxu0 0.0
    %167 = vmatprep.subr.mxu0 0.0
    %168 = vmatpush1.msra.mxu0 0.0
    %169 = vmatprep.subr.mxu0 0.0
    %170 = vmatpush1.msra.mxu0 0.0
    %171 = vmatprep.subr.mxu0 0.0
    %172 = vmatpush1.msra.mxu0 0.0
    %173 = vmatprep.subr.mxu0 0.0
    %174 = vmatpush1.msra.mxu0 0.0
    %175 = vmatprep.subr.mxu0 0.0
    %176 = vmatpush1.msra.mxu0 0.0
    %177 = vmatprep.subr.mxu0 0.0
    %178 = vmatpush1.msra.mxu0 0.0
    %179 = vmatprep.subr.mxu0 0.0
    %180 = vmatpush1.msra.mxu0 0.0
    %181 = vmatprep.subr.mxu0 0.0
    %182 = vmatpush1.msra.mxu0 0.0
    %183 = vmatprep.subr.mxu0 0.0
    %184 = vmatpush1.msra.mxu0 0.0
    %185 = vmatprep.subr.mxu0 0.0
    %186 = vmatpush1.msra.mxu0 0.0
    %187 = vmatprep.subr.mxu0 0.0
    %188 = vmatpush1.msra.mxu0 0.0
    %189 = vmatprep.subr.mxu0 0.0
    %190 = vmatpush1.msra.mxu0 0.0
    %191 = vmatprep.subr.mxu0 0.0
    %192 = vmatpush1.msra.mxu0 0.0
    %193 = vmatprep.subr.mxu0 0.0
    %194 = vmatpush1.msra.mxu0 %v161
    %195 = vmatprep.subr.mxu0 0.0
    %196 = vmatpush2.msra.mxu0 0.0
    %197 = vmatprep.subr.mxu0 0.0
    %198 = vmatpush2.msra.mxu0 0.0
    %199 = vmatprep.subr.mxu0 0.0
    %200 = vmatpush2.msra.mxu0 0.0
    %201 = vmatprep.subr.mxu0 0.0
    %202 = vmatpush2.msra.mxu0 0.0
    %203 = vmatprep.subr.mxu0 0.0
    %204 = vmatpush2.msra.mxu0 0.0
    %205 = vmatprep.subr.mxu0 0.0
    %206 = vmatpush2.msra.mxu0 0.0
    %207 = vmatprep.subr.mxu0 0.0
    %208 = vmatpush2.msra.mxu0 0.0
    %209 = vmatprep.subr.mxu0 0.0
    %210 = vmatpush2.msra.mxu0 0.0
    %211 = vmatprep.subr.mxu0 0.0
    %212 = vmatpush2.msra.mxu0 0.0
    %213 = vmatprep.subr.mxu0 0.0
    %214 = vmatpush2.msra.mxu0 0.0
    %215 = vmatprep.subr.mxu0 0.0
    %216 = vmatpush2.msra.mxu0 0.0
    %217 = vmatprep.subr.mxu0 0.0
    %218 = vmatpush2.msra.mxu0 0.0
    %219 = vmatprep.subr.mxu0 0.0
    %220 = vmatpush2.msra.mxu0 0.0
    %221 = vmatprep.subr.mxu0 0.0
    %222 = vmatpush2.msra.mxu0 0.0
    %223 = vmatprep.subr.mxu0 0.0
    %224 = vmatpush2.msra.mxu0 0.0
    %225 = vmatprep.subr.mxu0 0.0
    %226 = vmatpush2.msra.mxu0 0.0
    %227 = vmatprep.mubr.f32.mxu0 0.0
    %228 = vmatmul.mubr.f32.gmra.mxu0 %v155
    %v229 = vpop.f32.mrf.mxu0
    %v230 = vadd.f32 %v110, %v229
    %v231 = vpop.f32.mrf.mxu0
    %232 = vmatprep.mubr.f32.mxu0 0.0
    %233 = vmatmul.mubr.f32.gmra.mxu0 %v157
    %v234 = vpop.f32.mrf.mxu0
    %v235 = vadd.f32 %v110, %v234
    %v236 = vpop.f32.mrf.mxu0
    %237 = vdwg.mxu0
    %238 = vst [vmem:[#allocation4] sm:$0xff] %v230
    %239 = vst [vmem:[#allocation4 + $0x8] sm:$0xff] %v235
    %v240 = vld [vmem:[#allocation2] sm:$0x3]
    %v241 = vld [vmem:[#allocation3] sm:$0x3]
    %v242 = vld [vmem:[#allocation4] sm:$0x3]
    %vm243 = vcmask 261120
    %v245 = vsel %vm243, %v240, 0
    %247 = vmatprep.subr.mxu0 0.0
    %248 = vmatpush1.msra.mxu0 0.0
    %249 = vmatprep.subr.mxu0 0.0
    %250 = vmatpush1.msra.mxu0 0.0
    %251 = vmatprep.subr.mxu0 0.0
    %252 = vmatpush1.msra.mxu0 0.0
    %253 = vmatprep.subr.mxu0 0.0
    %254 = vmatpush1.msra.mxu0 0.0
    %255 = vmatprep.subr.mxu0 0.0
    %256 = vmatpush1.msra.mxu0 0.0
    %257 = vmatprep.subr.mxu0 0.0
    %258 = vmatpush1.msra.mxu0 0.0
    %259 = vmatprep.subr.mxu0 0.0
    %260 = vmatpush1.msra.mxu0 0.0
    %261 = vmatprep.subr.mxu0 0.0
    %262 = vmatpush1.msra.mxu0 0.0
    %263 = vmatprep.subr.mxu0 0.0
    %264 = vmatpush1.msra.mxu0 0.0
    %265 = vmatprep.subr.mxu0 0.0
    %266 = vmatpush1.msra.mxu0 0.0
    %267 = vmatprep.subr.mxu0 0.0
    %268 = vmatpush1.msra.mxu0 0.0
    %269 = vmatprep.subr.mxu0 0.0
    %270 = vmatpush1.msra.mxu0 0.0
    %271 = vmatprep.subr.mxu0 0.0
    %272 = vmatpush1.msra.mxu0 %v96
    %273 = vmatprep.subr.mxu0 0.0
    %274 = vmatpush1.msra.mxu0 %v95
    %275 = vmatprep.subr.mxu0 0.0
    %276 = vmatpush1.msra.mxu0 %v94
    %277 = vmatprep.subr.mxu0 0.0
    %278 = vmatpush1.msra.mxu0 %v93
    %279 = vmatprep.subr.mxu0 0.0
    %280 = vmatpush2.msra.mxu0 0.0
    %281 = vmatprep.subr.mxu0 0.0
    %282 = vmatpush2.msra.mxu0 0.0
    %283 = vmatprep.subr.mxu0 0.0
    %284 = vmatpush2.msra.mxu0 0.0
    %285 = vmatprep.subr.mxu0 0.0
    %286 = vmatpush2.msra.mxu0 0.0
    %287 = vmatprep.subr.mxu0 0.0
    %288 = vmatpush2.msra.mxu0 0.0
    %289 = vmatprep.subr.mxu0 0.0
    %290 = vmatpush2.msra.mxu0 0.0
    %291 = vmatprep.subr.mxu0 0.0
    %292 = vmatpush2.msra.mxu0 0.0
    %293 = vmatprep.subr.mxu0 0.0
    %294 = vmatpush2.msra.mxu0 0.0
    %295 = vmatprep.subr.mxu0 0.0
    %296 = vmatpush2.msra.mxu0 0.0
    %297 = vmatprep.subr.mxu0 0.0
    %298 = vmatpush2.msra.mxu0 0.0
    %299 = vmatprep.subr.mxu0 0.0
    %300 = vmatpush2.msra.mxu0 0.0
    %301 = vmatprep.subr.mxu0 0.0
    %302 = vmatpush2.msra.mxu0 0.0
    %303 = vmatprep.subr.mxu0 0.0
    %304 = vmatpush2.msra.mxu0 0.0
    %305 = vmatprep.subr.mxu0 0.0
    %306 = vmatpush2.msra.mxu0 0.0
    %307 = vmatprep.subr.mxu0 0.0
    %308 = vmatpush2.msra.mxu0 0.0
    %309 = vmatprep.subr.mxu0 0.0
    %310 = vmatpush2.msra.mxu0 0.0
    %311 = vmatprep.mubr.f32.mxu0 0.0
    %312 = vmatmul.mubr.f32.gmra.mxu0 %v245
    %v313 = vpop.f32.mrf.mxu0
    %v314 = vadd.f32 0.0, %v313
    %v315 = vpop.f32.mrf.mxu0
    %316 = vdwg.mxu0
    %v317 = vadd.f32 %v242, %v314
    %v318 = vmul.f32 %v317, 0.5
    %v319 = vtanh.pop %v318
    %v320 = vadd.f32 %v319, 1.0
    %v321 = vmul.f32 %v320, 0.5
    %v322 = vtanh.pop %v317
    %324 = vrot.lane.b32.xlu0 %v241, 32
    %v325 = vpop.permute.xlu0 %324
    %v327 = vmul.f32 %v321, %v325
    %329 = vrot.lane.b32.xlu0 %v322, 64
    %v330 = vpop.permute.xlu0 %329
    %v332 = vmul.f32 %v321, %v330
    %334 = vrot.lane.b32.xlu0 %v332, 32
    %v335 = vpop.permute.xlu0 %334
    %v337 = vadd.f32 %v327, %v335
    %v338 = vtanh.pop %v337
    %340 = vrot.lane.b32.xlu0 %v338, 64
    %v341 = vpop.permute.xlu0 %340
    %v343 = vmul.f32 %v321, %v341
    %345 = vrot.lane.b32.xlu0 %v343, 32
    %v346 = vpop.permute.xlu0 %345
    %vm348 = vcmask 254976
    %349 = vst.msk [vmem:[#allocation5] sm:$0x3] %vm348, %v346
    %v350 = vld [vmem:[#allocation4 + $0x2] sm:$0x3]
    %v351 = vsel %vm243, %v346, 0
    %353 = vmatprep.subr.mxu0 0.0
    %354 = vmatpush1.msra.mxu0 0.0
    %355 = vmatprep.subr.mxu0 0.0
    %356 = vmatpush1.msra.mxu0 0.0
    %357 = vmatprep.subr.mxu0 0.0
    %358 = vmatpush1.msra.mxu0 0.0
    %359 = vmatprep.subr.mxu0 0.0
    %360 = vmatpush1.msra.mxu0 0.0
    %361 = vmatprep.subr.mxu0 0.0
    %362 = vmatpush1.msra.mxu0 0.0
    %363 = vmatprep.subr.mxu0 0.0
    %364 = vmatpush1.msra.mxu0 0.0
    %365 = vmatprep.subr.mxu0 0.0
    %366 = vmatpush1.msra.mxu0 0.0
    %367 = vmatprep.subr.mxu0 0.0
    %368 = vmatpush1.msra.mxu0 0.0
    %369 = vmatprep.subr.mxu0 0.0
    %370 = vmatpush1.msra.mxu0 0.0
    %371 = vmatprep.subr.mxu0 0.0
    %372 = vmatpush1.msra.mxu0 0.0
    %373 = vmatprep.subr.mxu0 0.0
    %374 = vmatpush1.msra.mxu0 0.0
    %375 = vmatprep.subr.mxu0 0.0
    %376 = vmatpush1.msra.mxu0 0.0
    %377 = vmatprep.subr.mxu0 0.0
    %378 = vmatpush1.msra.mxu0 %v96
    %379 = vmatprep.subr.mxu0 0.0
    %380 = vmatpush1.msra.mxu0 %v95
    %381 = vmatprep.subr.mxu0 0.0
    %382 = vmatpush1.msra.mxu0 %v94
    %383 = vmatprep.subr.mxu0 0.0
    %384 = vmatpush1.msra.mxu0 %v93
    %385 = vmatprep.subr.mxu0 0.0
    %386 = vmatpush2.msra.mxu0 0.0
    %387 = vmatprep.subr.mxu0 0.0
    %388 = vmatpush2.msra.mxu0 0.0
    %389 = vmatprep.subr.mxu0 0.0
    %390 = vmatpush2.msra.mxu0 0.0
    %391 = vmatprep.subr.mxu0 0.0
    %392 = vmatpush2.msra.mxu0 0.0
    %393 = vmatprep.subr.mxu0 0.0
    %394 = vmatpush2.msra.mxu0 0.0
    %395 = vmatprep.subr.mxu0 0.0
    %396 = vmatpush2.msra.mxu0 0.0
    %397 = vmatprep.subr.mxu0 0.0
    %398 = vmatpush2.msra.mxu0 0.0
    %399 = vmatprep.subr.mxu0 0.0
    %400 = vmatpush2.msra.mxu0 0.0
    %401 = vmatprep.subr.mxu0 0.0
    %402 = vmatpush2.msra.mxu0 0.0
    %403 = vmatprep.subr.mxu0 0.0
    %404 = vmatpush2.msra.mxu0 0.0
    %405 = vmatprep.subr.mxu0 0.0
    %406 = vmatpush2.msra.mxu0 0.0
    %407 = vmatprep.subr.mxu0 0.0
    %408 = vmatpush2.msra.mxu0 0.0
    %409 = vmatprep.subr.mxu0 0.0
    %410 = vmatpush2.msra.mxu0 0.0
    %411 = vmatprep.subr.mxu0 0.0
    %412 = vmatpush2.msra.mxu0 0.0
    %413 = vmatprep.subr.mxu0 0.0
    %414 = vmatpush2.msra.mxu0 0.0
    %415 = vmatprep.subr.mxu0 0.0
    %416 = vmatpush2.msra.mxu0 0.0
    %417 = vmatprep.mubr.f32.mxu0 0.0
    %418 = vmatmul.mubr.f32.gmra.mxu0 %v351
    %v419 = vpop.f32.mrf.mxu0
    %v420 = vadd.f32 0.0, %v419
    %v421 = vpop.f32.mrf.mxu0
    %422 = vdwg.mxu0
    %v423 = vadd.f32 %v350, %v420
    %v424 = vmul.f32 %v423, 0.5
    %v425 = vtanh.pop %v424
    %v426 = vadd.f32 %v425, 1.0
    %v427 = vmul.f32 %v426, 0.5
    %v428 = vtanh.pop %v423
    %v429 = vmul.f32 %v427, %v337
    %431 = vrot.lane.b32.xlu0 %v428, 64
    %v432 = vpop.permute.xlu0 %431
    %v434 = vmul.f32 %v427, %v432
    %436 = vrot.lane.b32.xlu0 %v434, 32
    %v437 = vpop.permute.xlu0 %436
    %v439 = vadd.f32 %v429, %v437
    %v440 = vtanh.pop %v439
    %442 = vrot.lane.b32.xlu0 %v440, 64
    %v443 = vpop.permute.xlu0 %442
    %v445 = vmul.f32 %v427, %v443
    %447 = vrot.lane.b32.xlu0 %v445, 32
    %v448 = vpop.permute.xlu0 %447
    %s450 = scalar_lea.vmem [#allocation5], 2
    %451 = vst.msk [vmem:[%s450] sm:$0x3] %vm348, %v448
    %v452 = vld [vmem:[#allocation4 + $0x4] sm:$0x3]
    %v453 = vsel %vm243, %v448, 0
    %455 = vmatprep.subr.mxu0 0.0
    %456 = vmatpush1.msra.mxu0 0.0
    %457 = vmatprep.subr.mxu0 0.0
    %458 = vmatpush1.msra.mxu0 0.0
    %459 = vmatprep.subr.mxu0 0.0
    %460 = vmatpush1.msra.mxu0 0.0
    %461 = vmatprep.subr.mxu0 0.0
    %462 = vmatpush1.msra.mxu0 0.0
    %463 = vmatprep.subr.mxu0 0.0
    %464 = vmatpush1.msra.mxu0 0.0
    %465 = vmatprep.subr.mxu0 0.0
    %466 = vmatpush1.msra.mxu0 0.0
    %467 = vmatprep.subr.mxu0 0.0
    %468 = vmatpush1.msra.mxu0 0.0
    %469 = vmatprep.subr.mxu0 0.0
    %470 = vmatpush1.msra.mxu0 0.0
    %471 = vmatprep.subr.mxu0 0.0
    %472 = vmatpush1.msra.mxu0 0.0
    %473 = vmatprep.subr.mxu0 0.0
    %474 = vmatpush1.msra.mxu0 0.0
    %475 = vmatprep.subr.mxu0 0.0
    %476 = vmatpush1.msra.mxu0 0.0
    %477 = vmatprep.subr.mxu0 0.0
    %478 = vmatpush1.msra.mxu0 0.0
    %479 = vmatprep.subr.mxu0 0.0
    %480 = vmatpush1.msra.mxu0 %v96
    %481 = vmatprep.subr.mxu0 0.0
    %482 = vmatpush1.msra.mxu0 %v95
    %483 = vmatprep.subr.mxu0 0.0
    %484 = vmatpush1.msra.mxu0 %v94
    %485 = vmatprep.subr.mxu0 0.0
    %486 = vmatpush1.msra.mxu0 %v93
    %487 = vmatprep.subr.mxu0 0.0
    %488 = vmatpush2.msra.mxu0 0.0
    %489 = vmatprep.subr.mxu0 0.0
    %490 = vmatpush2.msra.mxu0 0.0
    %491 = vmatprep.subr.mxu0 0.0
    %492 = vmatpush2.msra.mxu0 0.0
    %493 = vmatprep.subr.mxu0 0.0
    %494 = vmatpush2.msra.mxu0 0.0
    %495 = vmatprep.subr.mxu0 0.0
    %496 = vmatpush2.msra.mxu0 0.0
    %497 = vmatprep.subr.mxu0 0.0
    %498 = vmatpush2.msra.mxu0 0.0
    %499 = vmatprep.subr.mxu0 0.0
    %500 = vmatpush2.msra.mxu0 0.0
    %501 = vmatprep.subr.mxu0 0.0
    %502 = vmatpush2.msra.mxu0 0.0
    %503 = vmatprep.subr.mxu0 0.0
    %504 = vmatpush2.msra.mxu0 0.0
    %505 = vmatprep.subr.mxu0 0.0
    %506 = vmatpush2.msra.mxu0 0.0
    %507 = vmatprep.subr.mxu0 0.0
    %508 = vmatpush2.msra.mxu0 0.0
    %509 = vmatprep.subr.mxu0 0.0
    %510 = vmatpush2.msra.mxu0 0.0
    %511 = vmatprep.subr.mxu0 0.0
    %512 = vmatpush2.msra.mxu0 0.0
    %513 = vmatprep.subr.mxu0 0.0
    %514 = vmatpush2.msra.mxu0 0.0
    %515 = vmatprep.subr.mxu0 0.0
    %516 = vmatpush2.msra.mxu0 0.0
    %517 = vmatprep.subr.mxu0 0.0
    %518 = vmatpush2.msra.mxu0 0.0
    %519 = vmatprep.mubr.f32.mxu0 0.0
    %520 = vmatmul.mubr.f32.gmra.mxu0 %v453
    %v521 = vpop.f32.mrf.mxu0
    %v522 = vadd.f32 0.0, %v521
    %v523 = vpop.f32.mrf.mxu0
    %524 = vdwg.mxu0
    %v525 = vadd.f32 %v452, %v522
    %v526 = vmul.f32 %v525, 0.5
    %v527 = vtanh.pop %v526
    %v528 = vadd.f32 %v527, 1.0
    %v529 = vmul.f32 %v528, 0.5
    %v530 = vtanh.pop %v525
    %v531 = vmul.f32 %v529, %v439
    %533 = vrot.lane.b32.xlu0 %v530, 64
    %v534 = vpop.permute.xlu0 %533
    %v536 = vmul.f32 %v529, %v534
    %538 = vrot.lane.b32.xlu0 %v536, 32
    %v539 = vpop.permute.xlu0 %538
    %v541 = vadd.f32 %v531, %v539
    %v542 = vtanh.pop %v541
    %544 = vrot.lane.b32.xlu0 %v542, 64
    %v545 = vpop.permute.xlu0 %544
    %v547 = vmul.f32 %v529, %v545
    %549 = vrot.lane.b32.xlu0 %v547, 32
    %v550 = vpop.permute.xlu0 %549
    %s552 = scalar_lea.vmem [#allocation5], 4
    %553 = vst.msk [vmem:[%s552] sm:$0x3] %vm348, %v550
    %v554 = vld [vmem:[#allocation4 + $0x6] sm:$0x3]
    %v555 = vsel %vm243, %v550, 0
    %557 = vmatprep.subr.mxu0 0.0
    %558 = vmatpush1.msra.mxu0 0.0
    %559 = vmatprep.subr.mxu0 0.0
    %560 = vmatpush1.msra.mxu0 0.0
    %561 = vmatprep.subr.mxu0 0.0
    %562 = vmatpush1.msra.mxu0 0.0
    %563 = vmatprep.subr.mxu0 0.0
    %564 = vmatpush1.msra.mxu0 0.0
    %565 = vmatprep.subr.mxu0 0.0
    %566 = vmatpush1.msra.mxu0 0.0
    %567 = vmatprep.subr.mxu0 0.0
    %568 = vmatpush1.msra.mxu0 0.0
    %569 = vmatprep.subr.mxu0 0.0
    %570 = vmatpush1.msra.mxu0 0.0
    %571 = vmatprep.subr.mxu0 0.0
    %572 = vmatpush1.msra.mxu0 0.0
    %573 = vmatprep.subr.mxu0 0.0
    %574 = vmatpush1.msra.mxu0 0.0
    %575 = vmatprep.subr.mxu0 0.0
    %576 = vmatpush1.msra.mxu0 0.0
    %577 = vmatprep.subr.mxu0 0.0
    %578 = vmatpush1.msra.mxu0 0.0
    %579 = vmatprep.subr.mxu0 0.0
    %580 = vmatpush1.msra.mxu0 0.0
    %581 = vmatprep.subr.mxu0 0.0
    %582 = vmatpush1.msra.mxu0 %v96
    %583 = vmatprep.subr.mxu0 0.0
    %584 = vmatpush1.msra.mxu0 %v95
    %585 = vmatprep.subr.mxu0 0.0
    %586 = vmatpush1.msra.mxu0 %v94
    %587 = vmatprep.subr.mxu0 0.0
    %588 = vmatpush1.msra.mxu0 %v93
    %589 = vmatprep.subr.mxu0 0.0
    %590 = vmatpush2.msra.mxu0 0.0
    %591 = vmatprep.subr.mxu0 0.0
    %592 = vmatpush2.msra.mxu0 0.0
    %593 = vmatprep.subr.mxu0 0.0
    %594 = vmatpush2.msra.mxu0 0.0
    %595 = vmatprep.subr.mxu0 0.0
    %596 = vmatpush2.msra.mxu0 0.0
    %597 = vmatprep.subr.mxu0 0.0
    %598 = vmatpush2.msra.mxu0 0.0
    %599 = vmatprep.subr.mxu0 0.0
    %600 = vmatpush2.msra.mxu0 0.0
    %601 = vmatprep.subr.mxu0 0.0
    %602 = vmatpush2.msra.mxu0 0.0
    %603 = vmatprep.subr.mxu0 0.0
    %604 = vmatpush2.msra.mxu0 0.0
    %605 = vmatprep.subr.mxu0 0.0
    %606 = vmatpush2.msra.mxu0 0.0
    %607 = vmatprep.subr.mxu0 0.0
    %608 = vmatpush2.msra.mxu0 0.0
    %609 = vmatprep.subr.mxu0 0.0
    %610 = vmatpush2.msra.mxu0 0.0
    %611 = vmatprep.subr.mxu0 0.0
    %612 = vmatpush2.msra.mxu0 0.0
    %613 = vmatprep.subr.mxu0 0.0
    %614 = vmatpush2.msra.mxu0 0.0
    %615 = vmatprep.subr.mxu0 0.0
    %616 = vmatpush2.msra.mxu0 0.0
    %617 = vmatprep.subr.mxu0 0.0
    %618 = vmatpush2.msra.mxu0 0.0
    %619 = vmatprep.subr.mxu0 0.0
    %620 = vmatpush2.msra.mxu0 0.0
    %621 = vmatprep.mubr.f32.mxu0 0.0
    %622 = vmatmul.mubr.f32.gmra.mxu0 %v555
    %v623 = vpop.f32.mrf.mxu0
    %v624 = vadd.f32 0.0, %v623
    %v625 = vpop.f32.mrf.mxu0
    %626 = vdwg.mxu0
    %v627 = vadd.f32 %v554, %v624
    %v628 = vmul.f32 %v627, 0.5
    %v629 = vtanh.pop %v628
    %v630 = vadd.f32 %v629, 1.0
    %v631 = vmul.f32 %v630, 0.5
    %v632 = vtanh.pop %v627
    %v633 = vmul.f32 %v631, %v541
    %635 = vrot.lane.b32.xlu0 %v632, 64
    %v636 = vpop.permute.xlu0 %635
    %v638 = vmul.f32 %v631, %v636
    %640 = vrot.lane.b32.xlu0 %v638, 32
    %v641 = vpop.permute.xlu0 %640
    %v643 = vadd.f32 %v633, %v641
    %v644 = vtanh.pop %v643
    %646 = vrot.lane.b32.xlu0 %v644, 64
    %v647 = vpop.permute.xlu0 %646
    %v649 = vmul.f32 %v631, %v647
    %651 = vrot.lane.b32.xlu0 %v649, 32
    %v652 = vpop.permute.xlu0 %651
    %s654 = scalar_lea.vmem [#allocation5], 6
    %655 = vst.msk [vmem:[%s654] sm:$0x3] %vm348, %v652
    %v656 = vld [vmem:[#allocation4 + $0x8] sm:$0x3]
    %v657 = vsel %vm243, %v652, 0
    %659 = vmatprep.subr.mxu0 0.0
    %660 = vmatpush1.msra.mxu0 0.0
    %661 = vmatprep.subr.mxu0 0.0
    %662 = vmatpush1.msra.mxu0 0.0
    %663 = vmatprep.subr.mxu0 0.0
    %664 = vmatpush1.msra.mxu0 0.0
    %665 = vmatprep.subr.mxu0 0.0
    %666 = vmatpush1.msra.mxu0 0.0
    %667 = vmatprep.subr.mxu0 0.0
    %668 = vmatpush1.msra.mxu0 0.0
    %669 = vmatprep.subr.mxu0 0.0
    %670 = vmatpush1.msra.mxu0 0.0
    %671 = vmatprep.subr.mxu0 0.0
    %672 = vmatpush1.msra.mxu0 0.0
    %673 = vmatprep.subr.mxu0 0.0
    %674 = vmatpush1.msra.mxu0 0.0
    %675 = vmatprep.subr.mxu0 0.0
    %676 = vmatpush1.msra.mxu0 0.0
    %677 = vmatprep.subr.mxu0 0.0
    %678 = vmatpush1.msra.mxu0 0.0
    %679 = vmatprep.subr.mxu0 0.0
    %680 = vmatpush1.msra.mxu0 0.0
    %681 = vmatprep.subr.mxu0 0.0
    %682 = vmatpush1.msra.mxu0 0.0
    %683 = vmatprep.subr.mxu0 0.0
    %684 = vmatpush1.msra.mxu0 %v96
    %685 = vmatprep.subr.mxu0 0.0
    %686 = vmatpush1.msra.mxu0 %v95
    %687 = vmatprep.subr.mxu0 0.0
    %688 = vmatpush1.msra.mxu0 %v94
    %689 = vmatprep.subr.mxu0 0.0
    %690 = vmatpush1.msra.mxu0 %v93
    %691 = vmatprep.subr.mxu0 0.0
    %692 = vmatpush2.msra.mxu0 0.0
    %693 = vmatprep.subr.mxu0 0.0
    %694 = vmatpush2.msra.mxu0 0.0
    %695 = vmatprep.subr.mxu0 0.0
    %696 = vmatpush2.msra.mxu0 0.0
    %697 = vmatprep.subr.mxu0 0.0
    %698 = vmatpush2.msra.mxu0 0.0
    %699 = vmatprep.subr.mxu0 0.0
    %700 = vmatpush2.msra.mxu0 0.0
    %701 = vmatprep.subr.mxu0 0.0
    %702 = vmatpush2.msra.mxu0 0.0
    %703 = vmatprep.subr.mxu0 0.0
    %704 = vmatpush2.msra.mxu0 0.0
    %705 = vmatprep.subr.mxu0 0.0
    %706 = vmatpush2.msra.mxu0 0.0
    %707 = vmatprep.subr.mxu0 0.0
    %708 = vmatpush2.msra.mxu0 0.0
    %709 = vmatprep.subr.mxu0 0.0
    %710 = vmatpush2.msra.mxu0 0.0
    %711 = vmatprep.subr.mxu0 0.0
    %712 = vmatpush2.msra.mxu0 0.0
    %713 = vmatprep.subr.mxu0 0.0
    %714 = vmatpush2.msra.mxu0 0.0
    %715 = vmatprep.subr.mxu0 0.0
    %716 = vmatpush2.msra.mxu0 0.0
    %717 = vmatprep.subr.mxu0 0.0
    %718 = vmatpush2.msra.mxu0 0.0
    %719 = vmatprep.subr.mxu0 0.0
    %720 = vmatpush2.msra.mxu0 0.0
    %721 = vmatprep.subr.mxu0 0.0
    %722 = vmatpush2.msra.mxu0 0.0
    %723 = vmatprep.mubr.f32.mxu0 0.0
    %724 = vmatmul.mubr.f32.gmra.mxu0 %v657
    %v725 = vpop.f32.mrf.mxu0
    %v726 = vadd.f32 0.0, %v725
    %v727 = vpop.f32.mrf.mxu0
    %728 = vdwg.mxu0
    %v729 = vadd.f32 %v656, %v726
    %v730 = vmul.f32 %v729, 0.5
    %v731 = vtanh.pop %v730
    %v732 = vadd.f32 %v731, 1.0
    %v733 = vmul.f32 %v732, 0.5
    %v734 = vtanh.pop %v729
    %v735 = vmul.f32 %v733, %v643
    %737 = vrot.lane.b32.xlu0 %v734, 64
    %v738 = vpop.permute.xlu0 %737
    %v740 = vmul.f32 %v733, %v738
    %742 = vrot.lane.b32.xlu0 %v740, 32
    %v743 = vpop.permute.xlu0 %742
    %v745 = vadd.f32 %v735, %v743
    %v746 = vtanh.pop %v745
    %748 = vrot.lane.b32.xlu0 %v746, 64
    %v749 = vpop.permute.xlu0 %748
    %v751 = vmul.f32 %v733, %v749
    %753 = vrot.lane.b32.xlu0 %v751, 32
    %v754 = vpop.permute.xlu0 %753
    %s756 = scalar_lea.vmem [#allocation5], 8
    %757 = vst.msk [vmem:[%s756] sm:$0x3] %vm348, %v754
    %v758 = vld [vmem:[#allocation4 + $0xa] sm:$0x3]
    %v759 = vsel %vm243, %v754, 0
    %761 = vmatprep.subr.mxu0 0.0
    %762 = vmatpush1.msra.mxu0 0.0
    %763 = vmatprep.subr.mxu0 0.0
    %764 = vmatpush1.msra.mxu0 0.0
    %765 = vmatprep.subr.mxu0 0.0
    %766 = vmatpush1.msra.mxu0 0.0
    %767 = vmatprep.subr.mxu0 0.0
    %768 = vmatpush1.msra.mxu0 0.0
    %769 = vmatprep.subr.mxu0 0.0
    %770 = vmatpush1.msra.mxu0 0.0
    %771 = vmatprep.subr.mxu0 0.0
    %772 = vmatpush1.msra.mxu0 0.0
    %773 = vmatprep.subr.mxu0 0.0
    %774 = vmatpush1.msra.mxu0 0.0
    %775 = vmatprep.subr.mxu0 0.0
    %776 = vmatpush1.msra.mxu0 0.0
    %777 = vmatprep.subr.mxu0 0.0
    %778 = vmatpush1.msra.mxu0 0.0
    %779 = vmatprep.subr.mxu0 0.0
    %780 = vmatpush1.msra.mxu0 0.0
    %781 = vmatprep.subr.mxu0 0.0
    %782 = vmatpush1.msra.mxu0 0.0
    %783 = vmatprep.subr.mxu0 0.0
    %784 = vmatpush1.msra.mxu0 0.0
    %785 = vmatprep.subr.mxu0 0.0
    %786 = vmatpush1.msra.mxu0 %v96
    %787 = vmatprep.subr.mxu0 0.0
    %788 = vmatpush1.msra.mxu0 %v95
    %789 = vmatprep.subr.mxu0 0.0
    %790 = vmatpush1.msra.mxu0 %v94
    %791 = vmatprep.subr.mxu0 0.0
    %792 = vmatpush1.msra.mxu0 %v93
    %793 = vmatprep.subr.mxu0 0.0
    %794 = vmatpush2.msra.mxu0 0.0
    %795 = vmatprep.subr.mxu0 0.0
    %796 = vmatpush2.msra.mxu0 0.0
    %797 = vmatprep.subr.mxu0 0.0
    %798 = vmatpush2.msra.mxu0 0.0
    %799 = vmatprep.subr.mxu0 0.0
    %800 = vmatpush2.msra.mxu0 0.0
    %801 = vmatprep.subr.mxu0 0.0
    %802 = vmatpush2.msra.mxu0 0.0
    %803 = vmatprep.subr.mxu0 0.0
    %804 = vmatpush2.msra.mxu0 0.0
    %805 = vmatprep.subr.mxu0 0.0
    %806 = vmatpush2.msra.mxu0 0.0
    %807 = vmatprep.subr.mxu0 0.0
    %808 = vmatpush2.msra.mxu0 0.0
    %809 = vmatprep.subr.mxu0 0.0
    %810 = vmatpush2.msra.mxu0 0.0
    %811 = vmatprep.subr.mxu0 0.0
    %812 = vmatpush2.msra.mxu0 0.0
    %813 = vmatprep.subr.mxu0 0.0
    %814 = vmatpush2.msra.mxu0 0.0
    %815 = vmatprep.subr.mxu0 0.0
    %816 = vmatpush2.msra.mxu0 0.0
    %817 = vmatprep.subr.mxu0 0.0
    %818 = vmatpush2.msra.mxu0 0.0
    %819 = vmatprep.subr.mxu0 0.0
    %820 = vmatpush2.msra.mxu0 0.0
    %821 = vmatprep.subr.mxu0 0.0
    %822 = vmatpush2.msra.mxu0 0.0
    %823 = vmatprep.subr.mxu0 0.0
    %824 = vmatpush2.msra.mxu0 0.0
    %825 = vmatprep.mubr.f32.mxu0 0.0
    %826 = vmatmul.mubr.f32.gmra.mxu0 %v759
    %v827 = vpop.f32.mrf.mxu0
    %v828 = vadd.f32 0.0, %v827
    %v829 = vpop.f32.mrf.mxu0
    %830 = vdwg.mxu0
    %v831 = vadd.f32 %v758, %v828
    %v832 = vmul.f32 %v831, 0.5
    %v833 = vtanh.pop %v832
    %v834 = vadd.f32 %v833, 1.0
    %v835 = vmul.f32 %v834, 0.5
    %v836 = vtanh.pop %v831
    %v837 = vmul.f32 %v835, %v745
    %839 = vrot.lane.b32.xlu0 %v836, 64
    %v840 = vpop.permute.xlu0 %839
    %v842 = vmul.f32 %v835, %v840
    %844 = vrot.lane.b32.xlu0 %v842, 32
    %v845 = vpop.permute.xlu0 %844
    %v847 = vadd.f32 %v837, %v845
    %v848 = vtanh.pop %v847
    %850 = vrot.lane.b32.xlu0 %v848, 64
    %v851 = vpop.permute.xlu0 %850
    %v853 = vmul.f32 %v835, %v851
    %855 = vrot.lane.b32.xlu0 %v853, 32
    %v856 = vpop.permute.xlu0 %855
    %s858 = scalar_lea.vmem [#allocation5], 10
    %859 = vst.msk [vmem:[%s858] sm:$0x3] %vm348, %v856
    %v860 = vld [vmem:[#allocation4 + $0xc] sm:$0x3]
    %v861 = vsel %vm243, %v856, 0
    %863 = vmatprep.subr.mxu0 0.0
    %864 = vmatpush1.msra.mxu0 0.0
    %865 = vmatprep.subr.mxu0 0.0
    %866 = vmatpush1.msra.mxu0 0.0
    %867 = vmatprep.subr.mxu0 0.0
    %868 = vmatpush1.msra.mxu0 0.0
    %869 = vmatprep.subr.mxu0 0.0
    %870 = vmatpush1.msra.mxu0 0.0
    %871 = vmatprep.subr.mxu0 0.0
    %872 = vmatpush1.msra.mxu0 0.0
    %873 = vmatprep.subr.mxu0 0.0
    %874 = vmatpush1.msra.mxu0 0.0
    %875 = vmatprep.subr.mxu0 0.0
    %876 = vmatpush1.msra.mxu0 0.0
    %877 = vmatprep.subr.mxu0 0.0
    %878 = vmatpush1.msra.mxu0 0.0
    %879 = vmatprep.subr.mxu0 0.0
    %880 = vmatpush1.msra.mxu0 0.0
    %881 = vmatprep.subr.mxu0 0.0
    %882 = vmatpush1.msra.mxu0 0.0
    %883 = vmatprep.subr.mxu0 0.0
    %884 = vmatpush1.msra.mxu0 0.0
    %885 = vmatprep.subr.mxu0 0.0
    %886 = vmatpush1.msra.mxu0 0.0
    %887 = vmatprep.subr.mxu0 0.0
    %888 = vmatpush1.msra.mxu0 %v96
    %889 = vmatprep.subr.mxu0 0.0
    %890 = vmatpush1.msra.mxu0 %v95
    %891 = vmatprep.subr.mxu0 0.0
    %892 = vmatpush1.msra.mxu0 %v94
    %893 = vmatprep.subr.mxu0 0.0
    %894 = vmatpush1.msra.mxu0 %v93
    %895 = vmatprep.subr.mxu0 0.0
    %896 = vmatpush2.msra.mxu0 0.0
    %897 = vmatprep.subr.mxu0 0.0
    %898 = vmatpush2.msra.mxu0 0.0
    %899 = vmatprep.subr.mxu0 0.0
    %900 = vmatpush2.msra.mxu0 0.0
    %901 = vmatprep.subr.mxu0 0.0
    %902 = vmatpush2.msra.mxu0 0.0
    %903 = vmatprep.subr.mxu0 0.0
    %904 = vmatpush2.msra.mxu0 0.0
    %905 = vmatprep.subr.mxu0 0.0
    %906 = vmatpush2.msra.mxu0 0.0
    %907 = vmatprep.subr.mxu0 0.0
    %908 = vmatpush2.msra.mxu0 0.0
    %909 = vmatprep.subr.mxu0 0.0
    %910 = vmatpush2.msra.mxu0 0.0
    %911 = vmatprep.subr.mxu0 0.0
    %912 = vmatpush2.msra.mxu0 0.0
    %913 = vmatprep.subr.mxu0 0.0
    %914 = vmatpush2.msra.mxu0 0.0
    %915 = vmatprep.subr.mxu0 0.0
    %916 = vmatpush2.msra.mxu0 0.0
    %917 = vmatprep.subr.mxu0 0.0
    %918 = vmatpush2.msra.mxu0 0.0
    %919 = vmatprep.subr.mxu0 0.0
    %920 = vmatpush2.msra.mxu0 0.0
    %921 = vmatprep.subr.mxu0 0.0
    %922 = vmatpush2.msra.mxu0 0.0
    %923 = vmatprep.subr.mxu0 0.0
    %924 = vmatpush2.msra.mxu0 0.0
    %925 = vmatprep.subr.mxu0 0.0
    %926 = vmatpush2.msra.mxu0 0.0
    %927 = vmatprep.mubr.f32.mxu0 0.0
    %928 = vmatmul.mubr.f32.gmra.mxu0 %v861
    %v929 = vpop.f32.mrf.mxu0
    %v930 = vadd.f32 0.0, %v929
    %v931 = vpop.f32.mrf.mxu0
    %932 = vdwg.mxu0
    %v933 = vadd.f32 %v860, %v930
    %v934 = vmul.f32 %v933, 0.5
    %v935 = vtanh.pop %v934
    %v936 = vadd.f32 %v935, 1.0
    %v937 = vmul.f32 %v936, 0.5
    %v938 = vtanh.pop %v933
    %v939 = vmul.f32 %v937, %v847
    %941 = vrot.lane.b32.xlu0 %v938, 64
    %v942 = vpop.permute.xlu0 %941
    %v944 = vmul.f32 %v937, %v942
    %946 = vrot.lane.b32.xlu0 %v944, 32
    %v947 = vpop.permute.xlu0 %946
    %v949 = vadd.f32 %v939, %v947
    %v950 = vtanh.pop %v949
    %952 = vrot.lane.b32.xlu0 %v950, 64
    %v953 = vpop.permute.xlu0 %952
    %v955 = vmul.f32 %v937, %v953
    %957 = vrot.lane.b32.xlu0 %v955, 32
    %v958 = vpop.permute.xlu0 %957
    %s960 = scalar_lea.vmem [#allocation5], 12
    %961 = vst.msk [vmem:[%s960] sm:$0x3] %vm348, %v958
    %v962 = vld [vmem:[#allocation4 + $0xe] sm:$0x3]
    %v963 = vsel %vm243, %v958, 0
    %965 = vmatprep.subr.mxu0 0.0
    %966 = vmatpush1.msra.mxu0 0.0
    %967 = vmatprep.subr.mxu0 0.0
    %968 = vmatpush1.msra.mxu0 0.0
    %969 = vmatprep.subr.mxu0 0.0
    %970 = vmatpush1.msra.mxu0 0.0
    %971 = vmatprep.subr.mxu0 0.0
    %972 = vmatpush1.msra.mxu0 0.0
    %973 = vmatprep.subr.mxu0 0.0
    %974 = vmatpush1.msra.mxu0 0.0
    %975 = vmatprep.subr.mxu0 0.0
    %976 = vmatpush1.msra.mxu0 0.0
    %977 = vmatprep.subr.mxu0 0.0
    %978 = vmatpush1.msra.mxu0 0.0
    %979 = vmatprep.subr.mxu0 0.0
    %980 = vmatpush1.msra.mxu0 0.0
    %981 = vmatprep.subr.mxu0 0.0
    %982 = vmatpush1.msra.mxu0 0.0
    %983 = vmatprep.subr.mxu0 0.0
    %984 = vmatpush1.msra.mxu0 0.0
    %985 = vmatprep.subr.mxu0 0.0
    %986 = vmatpush1.msra.mxu0 0.0
    %987 = vmatprep.subr.mxu0 0.0
    %988 = vmatpush1.msra.mxu0 0.0
    %989 = vmatprep.subr.mxu0 0.0
    %990 = vmatpush1.msra.mxu0 %v96
    %991 = vmatprep.subr.mxu0 0.0
    %992 = vmatpush1.msra.mxu0 %v95
    %993 = vmatprep.subr.mxu0 0.0
    %994 = vmatpush1.msra.mxu0 %v94
    %995 = vmatprep.subr.mxu0 0.0
    %996 = vmatpush1.msra.mxu0 %v93
    %997 = vmatprep.subr.mxu0 0.0
    %998 = vmatpush2.msra.mxu0 0.0
    %999 = vmatprep.subr.mxu0 0.0
    %1000 = vmatpush2.msra.mxu0 0.0
    %1001 = vmatprep.subr.mxu0 0.0
    %1002 = vmatpush2.msra.mxu0 0.0
    %1003 = vmatprep.subr.mxu0 0.0
    %1004 = vmatpush2.msra.mxu0 0.0
    %1005 = vmatprep.subr.mxu0 0.0
    %1006 = vmatpush2.msra.mxu0 0.0
    %1007 = vmatprep.subr.mxu0 0.0
    %1008 = vmatpush2.msra.mxu0 0.0
    %1009 = vmatprep.subr.mxu0 0.0
    %1010 = vmatpush2.msra.mxu0 0.0
    %1011 = vmatprep.subr.mxu0 0.0
    %1012 = vmatpush2.msra.mxu0 0.0
    %1013 = vmatprep.subr.mxu0 0.0
    %1014 = vmatpush2.msra.mxu0 0.0
    %1015 = vmatprep.subr.mxu0 0.0
    %1016 = vmatpush2.msra.mxu0 0.0
    %1017 = vmatprep.subr.mxu0 0.0
    %1018 = vmatpush2.msra.mxu0 0.0
    %1019 = vmatprep.subr.mxu0 0.0
    %1020 = vmatpush2.msra.mxu0 0.0
    %1021 = vmatprep.subr.mxu0 0.0
    %1022 = vmatpush2.msra.mxu0 0.0
    %1023 = vmatprep.subr.mxu0 0.0
    %1024 = vmatpush2.msra.mxu0 0.0
    %1025 = vmatprep.subr.mxu0 0.0
    %1026 = vmatpush2.msra.mxu0 0.0
    %1027 = vmatprep.subr.mxu0 0.0
    %1028 = vmatpush2.msra.mxu0 0.0
    %1029 = vmatprep.mubr.f32.mxu0 0.0
    %1030 = vmatmul.mubr.f32.gmra.mxu0 %v963
    %v1031 = vpop.f32.mrf.mxu0
    %v1032 = vadd.f32 0.0, %v1031
    %v1033 = vpop.f32.mrf.mxu0
    %1034 = vdwg.mxu0
    %v1035 = vadd.f32 %v962, %v1032
    %v1036 = vmul.f32 %v1035, 0.5
    %v1037 = vtanh.pop %v1036
    %v1038 = vadd.f32 %v1037, 1.0
    %v1039 = vmul.f32 %v1038, 0.5
    %v1040 = vtanh.pop %v1035
    %v1041 = vmul.f32 %v1039, %v949
    %1043 = vrot.lane.b32.xlu0 %v1040, 64
    %v1044 = vpop.permute.xlu0 %1043
    %v1046 = vmul.f32 %v1039, %v1044
    %1048 = vrot.lane.b32.xlu0 %v1046, 32
    %v1049 = vpop.permute.xlu0 %1048
    %v1051 = vadd.f32 %v1041, %v1049
    %v1052 = vtanh.pop %v1051
    %1054 = vrot.lane.b32.xlu0 %v1052, 64
    %v1055 = vpop.permute.xlu0 %1054
    %v1057 = vmul.f32 %v1039, %v1055
    %1059 = vrot.lane.b32.xlu0 %v1057, 32
    %v1060 = vpop.permute.xlu0 %1059
    %s1062 = scalar_lea.vmem [#allocation5], 14
    %1063 = vst.msk [vmem:[%s1062] sm:$0x3] %vm348, %v1060
    %1064 = vst.msk [vmem:[#allocation2] sm:$0x3] %vm348, %v1060
    %1066 = vrot.lane.b32.xlu0 %v1051, 96
    %v1067 = vpop.permute.xlu0 %1066
    %1069 = vst.msk [vmem:[#allocation3] sm:$0x3] %vm348, %v1067
    %v1070 = vld [vmem:[#allocation11] sm:$0xff]
    %v1071 = vld [vmem:[#allocation11 + $0x8] sm:$0xff]
    %v1072 = vld [vmem:[#allocation11 + $0x10] sm:$0xff]
    %v1073 = vld [vmem:[#allocation11 + $0x18] sm:$0xff]
    %v1074 = vld [vmem:[%s5] sm:$0xff]
    %v1075 = vld [vmem:[%s5 + $0x8] sm:$0xff]
    %v1076 = vld [vmem:[%s5 + $0x10] sm:$0xff]
    %v1077 = vld [vmem:[%s5 + $0x18] sm:$0xff]
    %v1078 = vld [vmem:[%s6] sm:$0x1]
    %v1079 = vld [vmem:[#allocation5] sm:$0x3]
    %v1080 = vld [vmem:[#allocation5 + $0x2] sm:$0x3]
    %v1081 = vld [vmem:[#allocation5 + $0x4] sm:$0x3]
    %v1082 = vld [vmem:[#allocation5 + $0x6] sm:$0x3]
    %v1083 = vld [vmem:[#allocation5 + $0x8] sm:$0x3]
    %v1084 = vld [vmem:[#allocation5 + $0xa] sm:$0x3]
    %v1085 = vld [vmem:[#allocation5 + $0xc] sm:$0x3]
    %v1086 = vld [vmem:[#allocation5 + $0xe] sm:$0x3]
    %v1088 = vlaneseq
    %v1089 = vshrl.u32 %v1088, 7
    %v1090 = vsub.s32 0, %v1089
    %v1091 = vrot.slane %v1078, %v1090
    %v1101 = vcombine.low %v1079, %v1080
    %v1102 = vcombine.low %v1081, %v1082
    %v1104 = vunpack.c.l.s4 1983009808
    %v1105 = vunpack.c.0.s8 %v1104
    %v1106 = vlaneseq
    %v1107 = vshrl.u32 %v1106, 7
    %v1108 = vsub.s32 %v1105, %v1107
    %v1109 = vrot.slane %v1101, %v1108
    %v1111 = vunpack.c.l.s4 1983009808
    %v1112 = vunpack.c.0.s8 %v1111
    %v1113 = vlaneseq
    %v1114 = vshrl.u32 %v1113, 7
    %v1115 = vsub.s32 %v1112, %v1114
    %v1116 = vrot.slane %v1102, %v1115
    %v1117 = vcombine.low %v1109, %v1116
    %v1118 = vcombine.low %v1083, %v1084
    %v1119 = vcombine.low %v1085, %v1086
    %v1121 = vunpack.c.l.s4 1983009808
    %v1122 = vunpack.c.0.s8 %v1121
    %v1123 = vlaneseq
    %v1124 = vshrl.u32 %v1123, 7
    %v1125 = vsub.s32 %v1122, %v1124
    %v1126 = vrot.slane %v1118, %v1125
    %v1128 = vunpack.c.l.s4 1983009808
    %v1129 = vunpack.c.0.s8 %v1128
    %v1130 = vlaneseq
    %v1131 = vshrl.u32 %v1130, 7
    %v1132 = vsub.s32 %v1129, %v1131
    %v1133 = vrot.slane %v1119, %v1132
    %v1134 = vcombine.low %v1126, %v1133
    %v1135 = vsel %vm243, %v1117, 0
    %v1137 = vsel %vm243, %v1134, 0
    %1139 = vmatprep.subr.mxu0 0.0
    %1140 = vmatpush1.msra.mxu0 0.0
    %1141 = vmatprep.subr.mxu0 0.0
    %1142 = vmatpush1.msra.mxu0 0.0
    %1143 = vmatprep.subr.mxu0 0.0
    %1144 = vmatpush1.msra.mxu0 0.0
    %1145 = vmatprep.subr.mxu0 0.0
    %1146 = vmatpush1.msra.mxu0 0.0
    %1147 = vmatprep.subr.mxu0 0.0
    %1148 = vmatpush1.msra.mxu0 0.0
    %1149 = vmatprep.subr.mxu0 0.0
    %1150 = vmatpush1.msra.mxu0 0.0
    %1151 = vmatprep.subr.mxu0 0.0
    %1152 = vmatpush1.msra.mxu0 0.0
    %1153 = vmatprep.subr.mxu0 0.0
    %1154 = vmatpush1.msra.mxu0 0.0
    %1155 = vmatprep.subr.mxu0 0.0
    %1156 = vmatpush1.msra.mxu0 0.0
    %1157 = vmatprep.subr.mxu0 0.0
    %1158 = vmatpush1.msra.mxu0 0.0
    %1159 = vmatprep.subr.mxu0 0.0
    %1160 = vmatpush1.msra.mxu0 0.0
    %1161 = vmatprep.subr.mxu0 0.0
    %1162 = vmatpush1.msra.mxu0 0.0
    %1163 = vmatprep.subr.mxu0 0.0
    %1164 = vmatpush1.msra.mxu0 %v1073
    %1165 = vmatprep.subr.mxu0 0.0
    %1166 = vmatpush1.msra.mxu0 %v1072
    %1167 = vmatprep.subr.mxu0 0.0
    %1168 = vmatpush1.msra.mxu0 %v1071
    %1169 = vmatprep.subr.mxu0 0.0
    %1170 = vmatpush1.msra.mxu0 %v1070
    %1171 = vmatprep.subr.mxu0 0.0
    %1172 = vmatpush2.msra.mxu0 0.0
    %1173 = vmatprep.subr.mxu0 0.0
    %1174 = vmatpush2.msra.mxu0 0.0
    %1175 = vmatprep.subr.mxu0 0.0
    %1176 = vmatpush2.msra.mxu0 0.0
    %1177 = vmatprep.subr.mxu0 0.0
    %1178 = vmatpush2.msra.mxu0 0.0
    %1179 = vmatprep.subr.mxu0 0.0
    %1180 = vmatpush2.msra.mxu0 0.0
    %1181 = vmatprep.subr.mxu0 0.0
    %1182 = vmatpush2.msra.mxu0 0.0
    %1183 = vmatprep.subr.mxu0 0.0
    %1184 = vmatpush2.msra.mxu0 0.0
    %1185 = vmatprep.subr.mxu0 0.0
    %1186 = vmatpush2.msra.mxu0 0.0
    %1187 = vmatprep.subr.mxu0 0.0
    %1188 = vmatpush2.msra.mxu0 0.0
    %1189 = vmatprep.subr.mxu0 0.0
    %1190 = vmatpush2.msra.mxu0 0.0
    %1191 = vmatprep.subr.mxu0 0.0
    %1192 = vmatpush2.msra.mxu0 0.0
    %1193 = vmatprep.subr.mxu0 0.0
    %1194 = vmatpush2.msra.mxu0 0.0
    %1195 = vmatprep.subr.mxu0 0.0
    %1196 = vmatpush2.msra.mxu0 0.0
    %1197 = vmatprep.subr.mxu0 0.0
    %1198 = vmatpush2.msra.mxu0 0.0
    %1199 = vmatprep.subr.mxu0 0.0
    %1200 = vmatpush2.msra.mxu0 0.0
    %1201 = vmatprep.subr.mxu0 0.0
    %1202 = vmatpush2.msra.mxu0 0.0
    %1203 = vmatprep.mubr.f32.mxu0 0.0
    %1204 = vmatmul.mubr.f32.gmra.mxu0 %v1135
    %v1205 = vpop.f32.mrf.mxu0
    %v1206 = vadd.f32 %v1091, %v1205
    %v1207 = vpop.f32.mrf.mxu0
    %1208 = vmatprep.mubr.f32.mxu0 0.0
    %1209 = vmatmul.mubr.f32.gmra.mxu0 %v1137
    %v1210 = vpop.f32.mrf.mxu0
    %v1211 = vadd.f32 %v1091, %v1210
    %v1212 = vpop.f32.mrf.mxu0
    %1213 = vdwg.mxu0
    %1214 = vst [vmem:[#allocation4] sm:$0xff] %v1206
    %1215 = vst [vmem:[#allocation4 + $0x8] sm:$0xff] %v1211
    %s1216 = scalar_lea.vmem [#allocation2], 2
    %v1217 = vld [vmem:[%s1216] sm:$0x3]
    %s1218 = scalar_lea.vmem [#allocation3], 2
    %v1219 = vld [vmem:[%s1218] sm:$0x3]
    %v1220 = vld [vmem:[#allocation4] sm:$0x3]
    %v1222 = vsel %vm243, %v1217, 0
    %1224 = vmatprep.subr.mxu0 0.0
    %1225 = vmatpush1.msra.mxu0 0.0
    %1226 = vmatprep.subr.mxu0 0.0
    %1227 = vmatpush1.msra.mxu0 0.0
    %1228 = vmatprep.subr.mxu0 0.0
    %1229 = vmatpush1.msra.mxu0 0.0
    %1230 = vmatprep.subr.mxu0 0.0
    %1231 = vmatpush1.msra.mxu0 0.0
    %1232 = vmatprep.subr.mxu0 0.0
    %1233 = vmatpush1.msra.mxu0 0.0
    %1234 = vmatprep.subr.mxu0 0.0
    %1235 = vmatpush1.msra.mxu0 0.0
    %1236 = vmatprep.subr.mxu0 0.0
    %1237 = vmatpush1.msra.mxu0 0.0
    %1238 = vmatprep.subr.mxu0 0.0
    %1239 = vmatpush1.msra.mxu0 0.0
    %1240 = vmatprep.subr.mxu0 0.0
    %1241 = vmatpush1.msra.mxu0 0.0
    %1242 = vmatprep.subr.mxu0 0.0
    %1243 = vmatpush1.msra.mxu0 0.0
    %1244 = vmatprep.subr.mxu0 0.0
    %1245 = vmatpush1.msra.mxu0 0.0
    %1246 = vmatprep.subr.mxu0 0.0
    %1247 = vmatpush1.msra.mxu0 0.0
    %1248 = vmatprep.subr.mxu0 0.0
    %1249 = vmatpush1.msra.mxu0 %v1077
    %1250 = vmatprep.subr.mxu0 0.0
    %1251 = vmatpush1.msra.mxu0 %v1076
    %1252 = vmatprep.subr.mxu0 0.0
    %1253 = vmatpush1.msra.mxu0 %v1075
    %1254 = vmatprep.subr.mxu0 0.0
    %1255 = vmatpush1.msra.mxu0 %v1074
    %1256 = vmatprep.subr.mxu0 0.0
    %1257 = vmatpush2.msra.mxu0 0.0
    %1258 = vmatprep.subr.mxu0 0.0
    %1259 = vmatpush2.msra.mxu0 0.0
    %1260 = vmatprep.subr.mxu0 0.0
    %1261 = vmatpush2.msra.mxu0 0.0
    %1262 = vmatprep.subr.mxu0 0.0
    %1263 = vmatpush2.msra.mxu0 0.0
    %1264 = vmatprep.subr.mxu0 0.0
    %1265 = vmatpush2.msra.mxu0 0.0
    %1266 = vmatprep.subr.mxu0 0.0
    %1267 = vmatpush2.msra.mxu0 0.0
    %1268 = vmatprep.subr.mxu0 0.0
    %1269 = vmatpush2.msra.mxu0 0.0
    %1270 = vmatprep.subr.mxu0 0.0
    %1271 = vmatpush2.msra.mxu0 0.0
    %1272 = vmatprep.subr.mxu0 0.0
    %1273 = vmatpush2.msra.mxu0 0.0
    %1274 = vmatprep.subr.mxu0 0.0
    %1275 = vmatpush2.msra.mxu0 0.0
    %1276 = vmatprep.subr.mxu0 0.0
    %1277 = vmatpush2.msra.mxu0 0.0
    %1278 = vmatprep.subr.mxu0 0.0
    %1279 = vmatpush2.msra.mxu0 0.0
    %1280 = vmatprep.subr.mxu0 0.0
    %1281 = vmatpush2.msra.mxu0 0.0
    %1282 = vmatprep.subr.mxu0 0.0
    %1283 = vmatpush2.msra.mxu0 0.0
    %1284 = vmatprep.subr.mxu0 0.0
    %1285 = vmatpush2.msra.mxu0 0.0
    %1286 = vmatprep.subr.mxu0 0.0
    %1287 = vmatpush2.msra.mxu0 0.0
    %1288 = vmatprep.mubr.f32.mxu0 0.0
    %1289 = vmatmul.mubr.f32.gmra.mxu0 %v1222
    %v1290 = vpop.f32.mrf.mxu0
    %v1291 = vadd.f32 0.0, %v1290
    %v1292 = vpop.f32.mrf.mxu0
    %1293 = vdwg.mxu0
    %v1294 = vadd.f32 %v1220, %v1291
    %v1295 = vmul.f32 %v1294, 0.5
    %v1296 = vtanh.pop %v1295
    %v1297 = vadd.f32 %v1296, 1.0
    %v1298 = vmul.f32 %v1297, 0.5
    %v1299 = vtanh.pop %v1294
    %1301 = vrot.lane.b32.xlu0 %v1219, 32
    %v1302 = vpop.permute.xlu0 %1301
    %v1304 = vmul.f32 %v1298, %v1302
    %1306 = vrot.lane.b32.xlu0 %v1299, 64
    %v1307 = vpop.permute.xlu0 %1306
    %v1309 = vmul.f32 %v1298, %v1307
    %1311 = vrot.lane.b32.xlu0 %v1309, 32
    %v1312 = vpop.permute.xlu0 %1311
    %v1314 = vadd.f32 %v1304, %v1312
    %v1315 = vtanh.pop %v1314
    %1317 = vrot.lane.b32.xlu0 %v1315, 64
    %v1318 = vpop.permute.xlu0 %1317
    %v1320 = vmul.f32 %v1298, %v1318
    %v1321 = vld [vmem:[#allocation12] sm:$0x3]
    %1323 = vrot.lane.b32.xlu0 %v1321, 96
    %v1324 = vpop.permute.xlu0 %1323
    %v1326 = vmul.f32 %v1320, %v1324
    %1328 = vrot.lane.b32.xlu0 %v1326, 32
    %v1329 = vpop.permute.xlu0 %1328
    %1331 = vst.msk [vmem:[#allocation14] sm:$0x3] %vm348, %v1329
    %v1332 = vld [vmem:[#allocation4 + $0x2] sm:$0x3]
    %1334 = vrot.lane.b32.xlu0 %v1320, 32
    %v1335 = vpop.permute.xlu0 %1334
    %v1336 = vsel %vm243, %v1335, 0
    %1338 = vmatprep.subr.mxu0 0.0
    %1339 = vmatpush1.msra.mxu0 0.0
    %1340 = vmatprep.subr.mxu0 0.0
    %1341 = vmatpush1.msra.mxu0 0.0
    %1342 = vmatprep.subr.mxu0 0.0
    %1343 = vmatpush1.msra.mxu0 0.0
    %1344 = vmatprep.subr.mxu0 0.0
    %1345 = vmatpush1.msra.mxu0 0.0
    %1346 = vmatprep.subr.mxu0 0.0
    %1347 = vmatpush1.msra.mxu0 0.0
    %1348 = vmatprep.subr.mxu0 0.0
    %1349 = vmatpush1.msra.mxu0 0.0
    %1350 = vmatprep.subr.mxu0 0.0
    %1351 = vmatpush1.msra.mxu0 0.0
    %1352 = vmatprep.subr.mxu0 0.0
    %1353 = vmatpush1.msra.mxu0 0.0
    %1354 = vmatprep.subr.mxu0 0.0
    %1355 = vmatpush1.msra.mxu0 0.0
    %1356 = vmatprep.subr.mxu0 0.0
    %1357 = vmatpush1.msra.mxu0 0.0
    %1358 = vmatprep.subr.mxu0 0.0
    %1359 = vmatpush1.msra.mxu0 0.0
    %1360 = vmatprep.subr.mxu0 0.0
    %1361 = vmatpush1.msra.mxu0 0.0
    %1362 = vmatprep.subr.mxu0 0.0
    %1363 = vmatpush1.msra.mxu0 %v1077
    %1364 = vmatprep.subr.mxu0 0.0
    %1365 = vmatpush1.msra.mxu0 %v1076
    %1366 = vmatprep.subr.mxu0 0.0
    %1367 = vmatpush1.msra.mxu0 %v1075
    %1368 = vmatprep.subr.mxu0 0.0
    %1369 = vmatpush1.msra.mxu0 %v1074
    %1370 = vmatprep.subr.mxu0 0.0
    %1371 = vmatpush2.msra.mxu0 0.0
    %1372 = vmatprep.subr.mxu0 0.0
    %1373 = vmatpush2.msra.mxu0 0.0
    %1374 = vmatprep.subr.mxu0 0.0
    %1375 = vmatpush2.msra.mxu0 0.0
    %1376 = vmatprep.subr.mxu0 0.0
    %1377 = vmatpush2.msra.mxu0 0.0
    %1378 = vmatprep.subr.mxu0 0.0
    %1379 = vmatpush2.msra.mxu0 0.0
    %1380 = vmatprep.subr.mxu0 0.0
    %1381 = vmatpush2.msra.mxu0 0.0
    %1382 = vmatprep.subr.mxu0 0.0
    %1383 = vmatpush2.msra.mxu0 0.0
    %1384 = vmatprep.subr.mxu0 0.0
    %1385 = vmatpush2.msra.mxu0 0.0
    %1386 = vmatprep.subr.mxu0 0.0
    %1387 = vmatpush2.msra.mxu0 0.0
    %1388 = vmatprep.subr.mxu0 0.0
    %1389 = vmatpush2.msra.mxu0 0.0
    %1390 = vmatprep.subr.mxu0 0.0
    %1391 = vmatpush2.msra.mxu0 0.0
    %1392 = vmatprep.subr.mxu0 0.0
    %1393 = vmatpush2.msra.mxu0 0.0
    %1394 = vmatprep.subr.mxu0 0.0
    %1395 = vmatpush2.msra.mxu0 0.0
    %1396 = vmatprep.subr.mxu0 0.0
    %1397 = vmatpush2.msra.mxu0 0.0
    %1398 = vmatprep.subr.mxu0 0.0
    %1399 = vmatpush2.msra.mxu0 0.0
    %1400 = vmatprep.subr.mxu0 0.0
    %1401 = vmatpush2.msra.mxu0 0.0
    %1402 = vmatprep.mubr.f32.mxu0 0.0
    %1403 = vmatmul.mubr.f32.gmra.mxu0 %v1336
    %v1404 = vpop.f32.mrf.mxu0
    %v1405 = vadd.f32 0.0, %v1404
    %v1406 = vpop.f32.mrf.mxu0
    %1407 = vdwg.mxu0
    %v1408 = vadd.f32 %v1332, %v1405
    %v1409 = vmul.f32 %v1408, 0.5
    %v1410 = vtanh.pop %v1409
    %v1411 = vadd.f32 %v1410, 1.0
    %v1412 = vmul.f32 %v1411, 0.5
    %v1413 = vtanh.pop %v1408
    %v1414 = vmul.f32 %v1412, %v1314
    %1416 = vrot.lane.b32.xlu0 %v1413, 64
    %v1417 = vpop.permute.xlu0 %1416
    %v1419 = vmul.f32 %v1412, %v1417
    %1421 = vrot.lane.b32.xlu0 %v1419, 32
    %v1422 = vpop.permute.xlu0 %1421
    %v1424 = vadd.f32 %v1414, %v1422
    %v1425 = vtanh.pop %v1424
    %1427 = vrot.lane.b32.xlu0 %v1425, 64
    %v1428 = vpop.permute.xlu0 %1427
    %v1430 = vmul.f32 %v1412, %v1428
    %s1431 = scalar_lea.vmem [#allocation12], 2
    %v1432 = vld [vmem:[%s1431] sm:$0x3]
    %1434 = vrot.lane.b32.xlu0 %v1432, 96
    %v1435 = vpop.permute.xlu0 %1434
    %v1437 = vmul.f32 %v1430, %v1435
    %1439 = vrot.lane.b32.xlu0 %v1437, 32
    %v1440 = vpop.permute.xlu0 %1439
    %s1442 = scalar_lea.vmem [#allocation14], 2
    %1443 = vst.msk [vmem:[%s1442] sm:$0x3] %vm348, %v1440
    %v1444 = vld [vmem:[#allocation4 + $0x4] sm:$0x3]
    %1446 = vrot.lane.b32.xlu0 %v1430, 32
    %v1447 = vpop.permute.xlu0 %1446
    %v1448 = vsel %vm243, %v1447, 0
    %1450 = vmatprep.subr.mxu0 0.0
    %1451 = vmatpush1.msra.mxu0 0.0
    %1452 = vmatprep.subr.mxu0 0.0
    %1453 = vmatpush1.msra.mxu0 0.0
    %1454 = vmatprep.subr.mxu0 0.0
    %1455 = vmatpush1.msra.mxu0 0.0
    %1456 = vmatprep.subr.mxu0 0.0
    %1457 = vmatpush1.msra.mxu0 0.0
    %1458 = vmatprep.subr.mxu0 0.0
    %1459 = vmatpush1.msra.mxu0 0.0
    %1460 = vmatprep.subr.mxu0 0.0
    %1461 = vmatpush1.msra.mxu0 0.0
    %1462 = vmatprep.subr.mxu0 0.0
    %1463 = vmatpush1.msra.mxu0 0.0
    %1464 = vmatprep.subr.mxu0 0.0
    %1465 = vmatpush1.msra.mxu0 0.0
    %1466 = vmatprep.subr.mxu0 0.0
    %1467 = vmatpush1.msra.mxu0 0.0
    %1468 = vmatprep.subr.mxu0 0.0
    %1469 = vmatpush1.msra.mxu0 0.0
    %1470 = vmatprep.subr.mxu0 0.0
    %1471 = vmatpush1.msra.mxu0 0.0
    %1472 = vmatprep.subr.mxu0 0.0
    %1473 = vmatpush1.msra.mxu0 0.0
    %1474 = vmatprep.subr.mxu0 0.0
    %1475 = vmatpush1.msra.mxu0 %v1077
    %1476 = vmatprep.subr.mxu0 0.0
    %1477 = vmatpush1.msra.mxu0 %v1076
    %1478 = vmatprep.subr.mxu0 0.0
    %1479 = vmatpush1.msra.mxu0 %v1075
    %1480 = vmatprep.subr.mxu0 0.0
    %1481 = vmatpush1.msra.mxu0 %v1074
    %1482 = vmatprep.subr.mxu0 0.0
    %1483 = vmatpush2.msra.mxu0 0.0
    %1484 = vmatprep.subr.mxu0 0.0
    %1485 = vmatpush2.msra.mxu0 0.0
    %1486 = vmatprep.subr.mxu0 0.0
    %1487 = vmatpush2.msra.mxu0 0.0
    %1488 = vmatprep.subr.mxu0 0.0
    %1489 = vmatpush2.msra.mxu0 0.0
    %1490 = vmatprep.subr.mxu0 0.0
    %1491 = vmatpush2.msra.mxu0 0.0
    %1492 = vmatprep.subr.mxu0 0.0
    %1493 = vmatpush2.msra.mxu0 0.0
    %1494 = vmatprep.subr.mxu0 0.0
    %1495 = vmatpush2.msra.mxu0 0.0
    %1496 = vmatprep.subr.mxu0 0.0
    %1497 = vmatpush2.msra.mxu0 0.0
    %1498 = vmatprep.subr.mxu0 0.0
    %1499 = vmatpush2.msra.mxu0 0.0
    %1500 = vmatprep.subr.mxu0 0.0
    %1501 = vmatpush2.msra.mxu0 0.0
    %1502 = vmatprep.subr.mxu0 0.0
    %1503 = vmatpush2.msra.mxu0 0.0
    %1504 = vmatprep.subr.mxu0 0.0
    %1505 = vmatpush2.msra.mxu0 0.0
    %1506 = vmatprep.subr.mxu0 0.0
    %1507 = vmatpush2.msra.mxu0 0.0
    %1508 = vmatprep.subr.mxu0 0.0
    %1509 = vmatpush2.msra.mxu0 0.0
    %1510 = vmatprep.subr.mxu0 0.0
    %1511 = vmatpush2.msra.mxu0 0.0
    %1512 = vmatprep.subr.mxu0 0.0
    %1513 = vmatpush2.msra.mxu0 0.0
    %1514 = vmatprep.mubr.f32.mxu0 0.0
    %1515 = vmatmul.mubr.f32.gmra.mxu0 %v1448
    %v1516 = vpop.f32.mrf.mxu0
    %v1517 = vadd.f32 0.0, %v1516
    %v1518 = vpop.f32.mrf.mxu0
    %1519 = vdwg.mxu0
    %v1520 = vadd.f32 %v1444, %v1517
    %v1521 = vmul.f32 %v1520, 0.5
    %v1522 = vtanh.pop %v1521
    %v1523 = vadd.f32 %v1522, 1.0
    %v1524 = vmul.f32 %v1523, 0.5
    %v1525 = vtanh.pop %v1520
    %v1526 = vmul.f32 %v1524, %v1424
    %1528 = vrot.lane.b32.xlu0 %v1525, 64
    %v1529 = vpop.permute.xlu0 %1528
    %v1531 = vmul.f32 %v1524, %v1529
    %1533 = vrot.lane.b32.xlu0 %v1531, 32
    %v1534 = vpop.permute.xlu0 %1533
    %v1536 = vadd.f32 %v1526, %v1534
    %v1537 = vtanh.pop %v1536
    %1539 = vrot.lane.b32.xlu0 %v1537, 64
    %v1540 = vpop.permute.xlu0 %1539
    %v1542 = vmul.f32 %v1524, %v1540
    %s1543 = scalar_lea.vmem [#allocation12], 4
    %v1544 = vld [vmem:[%s1543] sm:$0x3]
    %1546 = vrot.lane.b32.xlu0 %v1544, 96
    %v1547 = vpop.permute.xlu0 %1546
    %v1549 = vmul.f32 %v1542, %v1547
    %1551 = vrot.lane.b32.xlu0 %v1549, 32
    %v1552 = vpop.permute.xlu0 %1551
    %s1554 = scalar_lea.vmem [#allocation14], 4
    %1555 = vst.msk [vmem:[%s1554] sm:$0x3] %vm348, %v1552
    %v1556 = vld [vmem:[#allocation4 + $0x6] sm:$0x3]
    %1558 = vrot.lane.b32.xlu0 %v1542, 32
    %v1559 = vpop.permute.xlu0 %1558
    %v1560 = vsel %vm243, %v1559, 0
    %1562 = vmatprep.subr.mxu0 0.0
    %1563 = vmatpush1.msra.mxu0 0.0
    %1564 = vmatprep.subr.mxu0 0.0
    %1565 = vmatpush1.msra.mxu0 0.0
    %1566 = vmatprep.subr.mxu0 0.0
    %1567 = vmatpush1.msra.mxu0 0.0
    %1568 = vmatprep.subr.mxu0 0.0
    %1569 = vmatpush1.msra.mxu0 0.0
    %1570 = vmatprep.subr.mxu0 0.0
    %1571 = vmatpush1.msra.mxu0 0.0
    %1572 = vmatprep.subr.mxu0 0.0
    %1573 = vmatpush1.msra.mxu0 0.0
    %1574 = vmatprep.subr.mxu0 0.0
    %1575 = vmatpush1.msra.mxu0 0.0
    %1576 = vmatprep.subr.mxu0 0.0
    %1577 = vmatpush1.msra.mxu0 0.0
    %1578 = vmatprep.subr.mxu0 0.0
    %1579 = vmatpush1.msra.mxu0 0.0
    %1580 = vmatprep.subr.mxu0 0.0
    %1581 = vmatpush1.msra.mxu0 0.0
    %1582 = vmatprep.subr.mxu0 0.0
    %1583 = vmatpush1.msra.mxu0 0.0
    %1584 = vmatprep.subr.mxu0 0.0
    %1585 = vmatpush1.msra.mxu0 0.0
    %1586 = vmatprep.subr.mxu0 0.0
    %1587 = vmatpush1.msra.mxu0 %v1077
    %1588 = vmatprep.subr.mxu0 0.0
    %1589 = vmatpush1.msra.mxu0 %v1076
    %1590 = vmatprep.subr.mxu0 0.0
    %1591 = vmatpush1.msra.mxu0 %v1075
    %1592 = vmatprep.subr.mxu0 0.0
    %1593 = vmatpush1.msra.mxu0 %v1074
    %1594 = vmatprep.subr.mxu0 0.0
    %1595 = vmatpush2.msra.mxu0 0.0
    %1596 = vmatprep.subr.mxu0 0.0
    %1597 = vmatpush2.msra.mxu0 0.0
    %1598 = vmatprep.subr.mxu0 0.0
    %1599 = vmatpush2.msra.mxu0 0.0
    %1600 = vmatprep.subr.mxu0 0.0
    %1601 = vmatpush2.msra.mxu0 0.0
    %1602 = vmatprep.subr.mxu0 0.0
    %1603 = vmatpush2.msra.mxu0 0.0
    %1604 = vmatprep.subr.mxu0 0.0
    %1605 = vmatpush2.msra.mxu0 0.0
    %1606 = vmatprep.subr.mxu0 0.0
    %1607 = vmatpush2.msra.mxu0 0.0
    %1608 = vmatprep.subr.mxu0 0.0
    %1609 = vmatpush2.msra.mxu0 0.0
    %1610 = vmatprep.subr.mxu0 0.0
    %1611 = vmatpush2.msra.mxu0 0.0
    %1612 = vmatprep.subr.mxu0 0.0
    %1613 = vmatpush2.msra.mxu0 0.0
    %1614 = vmatprep.subr.mxu0 0.0
    %1615 = vmatpush2.msra.mxu0 0.0
    %1616 = vmatprep.subr.mxu0 0.0
    %1617 = vmatpush2.msra.mxu0 0.0
    %1618 = vmatprep.subr.mxu0 0.0
    %1619 = vmatpush2.msra.mxu0 0.0
    %1620 = vmatprep.subr.mxu0 0.0
    %1621 = vmatpush2.msra.mxu0 0.0
    %1622 = vmatprep.subr.mxu0 0.0
    %1623 = vmatpush2.msra.mxu0 0.0
    %1624 = vmatprep.subr.mxu0 0.0
    %1625 = vmatpush2.msra.mxu0 0.0
    %1626 = vmatprep.mubr.f32.mxu0 0.0
    %1627 = vmatmul.mubr.f32.gmra.mxu0 %v1560
    %v1628 = vpop.f32.mrf.mxu0
    %v1629 = vadd.f32 0.0, %v1628
    %v1630 = vpop.f32.mrf.mxu0
    %1631 = vdwg.mxu0
    %v1632 = vadd.f32 %v1556, %v1629
    %v1633 = vmul.f32 %v1632, 0.5
    %v1634 = vtanh.pop %v1633
    %v1635 = vadd.f32 %v1634, 1.0
    %v1636 = vmul.f32 %v1635, 0.5
    %v1637 = vtanh.pop %v1632
    %v1638 = vmul.f32 %v1636, %v1536
    %1640 = vrot.lane.b32.xlu0 %v1637, 64
    %v1641 = vpop.permute.xlu0 %1640
    %v1643 = vmul.f32 %v1636, %v1641
    %1645 = vrot.lane.b32.xlu0 %v1643, 32
    %v1646 = vpop.permute.xlu0 %1645
    %v1648 = vadd.f32 %v1638, %v1646
    %v1649 = vtanh.pop %v1648
    %1651 = vrot.lane.b32.xlu0 %v1649, 64
    %v1652 = vpop.permute.xlu0 %1651
    %v1654 = vmul.f32 %v1636, %v1652
    %s1655 = scalar_lea.vmem [#allocation12], 6
    %v1656 = vld [vmem:[%s1655] sm:$0x3]
    %1658 = vrot.lane.b32.xlu0 %v1656, 96
    %v1659 = vpop.permute.xlu0 %1658
    %v1661 = vmul.f32 %v1654, %v1659
    %1663 = vrot.lane.b32.xlu0 %v1661, 32
    %v1664 = vpop.permute.xlu0 %1663
    %s1666 = scalar_lea.vmem [#allocation14], 6
    %1667 = vst.msk [vmem:[%s1666] sm:$0x3] %vm348, %v1664
    %v1668 = vld [vmem:[#allocation4 + $0x8] sm:$0x3]
    %1670 = vrot.lane.b32.xlu0 %v1654, 32
    %v1671 = vpop.permute.xlu0 %1670
    %v1672 = vsel %vm243, %v1671, 0
    %1674 = vmatprep.subr.mxu0 0.0
    %1675 = vmatpush1.msra.mxu0 0.0
    %1676 = vmatprep.subr.mxu0 0.0
    %1677 = vmatpush1.msra.mxu0 0.0
    %1678 = vmatprep.subr.mxu0 0.0
    %1679 = vmatpush1.msra.mxu0 0.0
    %1680 = vmatprep.subr.mxu0 0.0
    %1681 = vmatpush1.msra.mxu0 0.0
    %1682 = vmatprep.subr.mxu0 0.0
    %1683 = vmatpush1.msra.mxu0 0.0
    %1684 = vmatprep.subr.mxu0 0.0
    %1685 = vmatpush1.msra.mxu0 0.0
    %1686 = vmatprep.subr.mxu0 0.0
    %1687 = vmatpush1.msra.mxu0 0.0
    %1688 = vmatprep.subr.mxu0 0.0
    %1689 = vmatpush1.msra.mxu0 0.0
    %1690 = vmatprep.subr.mxu0 0.0
    %1691 = vmatpush1.msra.mxu0 0.0
    %1692 = vmatprep.subr.mxu0 0.0
    %1693 = vmatpush1.msra.mxu0 0.0
    %1694 = vmatprep.subr.mxu0 0.0
    %1695 = vmatpush1.msra.mxu0 0.0
    %1696 = vmatprep.subr.mxu0 0.0
    %1697 = vmatpush1.msra.mxu0 0.0
    %1698 = vmatprep.subr.mxu0 0.0
    %1699 = vmatpush1.msra.mxu0 %v1077
    %1700 = vmatprep.subr.mxu0 0.0
    %1701 = vmatpush1.msra.mxu0 %v1076
    %1702 = vmatprep.subr.mxu0 0.0
    %1703 = vmatpush1.msra.mxu0 %v1075
    %1704 = vmatprep.subr.mxu0 0.0
    %1705 = vmatpush1.msra.mxu0 %v1074
    %1706 = vmatprep.subr.mxu0 0.0
    %1707 = vmatpush2.msra.mxu0 0.0
    %1708 = vmatprep.subr.mxu0 0.0
    %1709 = vmatpush2.msra.mxu0 0.0
    %1710 = vmatprep.subr.mxu0 0.0
    %1711 = vmatpush2.msra.mxu0 0.0
    %1712 = vmatprep.subr.mxu0 0.0
    %1713 = vmatpush2.msra.mxu0 0.0
    %1714 = vmatprep.subr.mxu0 0.0
    %1715 = vmatpush2.msra.mxu0 0.0
    %1716 = vmatprep.subr.mxu0 0.0
    %1717 = vmatpush2.msra.mxu0 0.0
    %1718 = vmatprep.subr.mxu0 0.0
    %1719 = vmatpush2.msra.mxu0 0.0
    %1720 = vmatprep.subr.mxu0 0.0
    %1721 = vmatpush2.msra.mxu0 0.0
    %1722 = vmatprep.subr.mxu0 0.0
    %1723 = vmatpush2.msra.mxu0 0.0
    %1724 = vmatprep.subr.mxu0 0.0
    %1725 = vmatpush2.msra.mxu0 0.0
    %1726 = vmatprep.subr.mxu0 0.0
    %1727 = vmatpush2.msra.mxu0 0.0
    %1728 = vmatprep.subr.mxu0 0.0
    %1729 = vmatpush2.msra.mxu0 0.0
    %1730 = vmatprep.subr.mxu0 0.0
    %1731 = vmatpush2.msra.mxu0 0.0
    %1732 = vmatprep.subr.mxu0 0.0
    %1733 = vmatpush2.msra.mxu0 0.0
    %1734 = vmatprep.subr.mxu0 0.0
    %1735 = vmatpush2.msra.mxu0 0.0
    %1736 = vmatprep.subr.mxu0 0.0
    %1737 = vmatpush2.msra.mxu0 0.0
    %1738 = vmatprep.mubr.f32.mxu0 0.0
    %1739 = vmatmul.mubr.f32.gmra.mxu0 %v1672
    %v1740 = vpop.f32.mrf.mxu0
    %v1741 = vadd.f32 0.0, %v1740
    %v1742 = vpop.f32.mrf.mxu0
    %1743 = vdwg.mxu0
    %v1744 = vadd.f32 %v1668, %v1741
    %v1745 = vmul.f32 %v1744, 0.5
    %v1746 = vtanh.pop %v1745
    %v1747 = vadd.f32 %v1746, 1.0
    %v1748 = vmul.f32 %v1747, 0.5
    %v1749 = vtanh.pop %v1744
    %v1750 = vmul.f32 %v1748, %v1648
    %1752 = vrot.lane.b32.xlu0 %v1749, 64
    %v1753 = vpop.permute.xlu0 %1752
    %v1755 = vmul.f32 %v1748, %v1753
    %1757 = vrot.lane.b32.xlu0 %v1755, 32
    %v1758 = vpop.permute.xlu0 %1757
    %v1760 = vadd.f32 %v1750, %v1758
    %v1761 = vtanh.pop %v1760
    %1763 = vrot.lane.b32.xlu0 %v1761, 64
    %v1764 = vpop.permute.xlu0 %1763
    %v1766 = vmul.f32 %v1748, %v1764
    %s1767 = scalar_lea.vmem [#allocation12], 8
    %v1768 = vld [vmem:[%s1767] sm:$0x3]
    %1770 = vrot.lane.b32.xlu0 %v1768, 96
    %v1771 = vpop.permute.xlu0 %1770
    %v1773 = vmul.f32 %v1766, %v1771
    %1775 = vrot.lane.b32.xlu0 %v1773, 32
    %v1776 = vpop.permute.xlu0 %1775
    %s1778 = scalar_lea.vmem [#allocation14], 8
    %1779 = vst.msk [vmem:[%s1778] sm:$0x3] %vm348, %v1776
    %v1780 = vld [vmem:[#allocation4 + $0xa] sm:$0x3]
    %1782 = vrot.lane.b32.xlu0 %v1766, 32
    %v1783 = vpop.permute.xlu0 %1782
    %v1784 = vsel %vm243, %v1783, 0
    %1786 = vmatprep.subr.mxu0 0.0
    %1787 = vmatpush1.msra.mxu0 0.0
    %1788 = vmatprep.subr.mxu0 0.0
    %1789 = vmatpush1.msra.mxu0 0.0
    %1790 = vmatprep.subr.mxu0 0.0
    %1791 = vmatpush1.msra.mxu0 0.0
    %1792 = vmatprep.subr.mxu0 0.0
    %1793 = vmatpush1.msra.mxu0 0.0
    %1794 = vmatprep.subr.mxu0 0.0
    %1795 = vmatpush1.msra.mxu0 0.0
    %1796 = vmatprep.subr.mxu0 0.0
    %1797 = vmatpush1.msra.mxu0 0.0
    %1798 = vmatprep.subr.mxu0 0.0
    %1799 = vmatpush1.msra.mxu0 0.0
    %1800 = vmatprep.subr.mxu0 0.0
    %1801 = vmatpush1.msra.mxu0 0.0
    %1802 = vmatprep.subr.mxu0 0.0
    %1803 = vmatpush1.msra.mxu0 0.0
    %1804 = vmatprep.subr.mxu0 0.0
    %1805 = vmatpush1.msra.mxu0 0.0
    %1806 = vmatprep.subr.mxu0 0.0
    %1807 = vmatpush1.msra.mxu0 0.0
    %1808 = vmatprep.subr.mxu0 0.0
    %1809 = vmatpush1.msra.mxu0 0.0
    %1810 = vmatprep.subr.mxu0 0.0
    %1811 = vmatpush1.msra.mxu0 %v1077
    %1812 = vmatprep.subr.mxu0 0.0
    %1813 = vmatpush1.msra.mxu0 %v1076
    %1814 = vmatprep.subr.mxu0 0.0
    %1815 = vmatpush1.msra.mxu0 %v1075
    %1816 = vmatprep.subr.mxu0 0.0
    %1817 = vmatpush1.msra.mxu0 %v1074
    %1818 = vmatprep.subr.mxu0 0.0
    %1819 = vmatpush2.msra.mxu0 0.0
    %1820 = vmatprep.subr.mxu0 0.0
    %1821 = vmatpush2.msra.mxu0 0.0
    %1822 = vmatprep.subr.mxu0 0.0
    %1823 = vmatpush2.msra.mxu0 0.0
    %1824 = vmatprep.subr.mxu0 0.0
    %1825 = vmatpush2.msra.mxu0 0.0
    %1826 = vmatprep.subr.mxu0 0.0
    %1827 = vmatpush2.msra.mxu0 0.0
    %1828 = vmatprep.subr.mxu0 0.0
    %1829 = vmatpush2.msra.mxu0 0.0
    %1830 = vmatprep.subr.mxu0 0.0
    %1831 = vmatpush2.msra.mxu0 0.0
    %1832 = vmatprep.subr.mxu0 0.0
    %1833 = vmatpush2.msra.mxu0 0.0
    %1834 = vmatprep.subr.mxu0 0.0
    %1835 = vmatpush2.msra.mxu0 0.0
    %1836 = vmatprep.subr.mxu0 0.0
    %1837 = vmatpush2.msra.mxu0 0.0
    %1838 = vmatprep.subr.mxu0 0.0
    %1839 = vmatpush2.msra.mxu0 0.0
    %1840 = vmatprep.subr.mxu0 0.0
    %1841 = vmatpush2.msra.mxu0 0.0
    %1842 = vmatprep.subr.mxu0 0.0
    %1843 = vmatpush2.msra.mxu0 0.0
    %1844 = vmatprep.subr.mxu0 0.0
    %1845 = vmatpush2.msra.mxu0 0.0
    %1846 = vmatprep.subr.mxu0 0.0
    %1847 = vmatpush2.msra.mxu0 0.0
    %1848 = vmatprep.subr.mxu0 0.0
    %1849 = vmatpush2.msra.mxu0 0.0
    %1850 = vmatprep.mubr.f32.mxu0 0.0
    %1851 = vmatmul.mubr.f32.gmra.mxu0 %v1784
    %v1852 = vpop.f32.mrf.mxu0
    %v1853 = vadd.f32 0.0, %v1852
    %v1854 = vpop.f32.mrf.mxu0
    %1855 = vdwg.mxu0
    %v1856 = vadd.f32 %v1780, %v1853
    %v1857 = vmul.f32 %v1856, 0.5
    %v1858 = vtanh.pop %v1857
    %v1859 = vadd.f32 %v1858, 1.0
    %v1860 = vmul.f32 %v1859, 0.5
    %v1861 = vtanh.pop %v1856
    %v1862 = vmul.f32 %v1860, %v1760
    %1864 = vrot.lane.b32.xlu0 %v1861, 64
    %v1865 = vpop.permute.xlu0 %1864
    %v1867 = vmul.f32 %v1860, %v1865
    %1869 = vrot.lane.b32.xlu0 %v1867, 32
    %v1870 = vpop.permute.xlu0 %1869
    %v1872 = vadd.f32 %v1862, %v1870
    %v1873 = vtanh.pop %v1872
    %1875 = vrot.lane.b32.xlu0 %v1873, 64
    %v1876 = vpop.permute.xlu0 %1875
    %v1878 = vmul.f32 %v1860, %v1876
    %s1879 = scalar_lea.vmem [#allocation12], 10
    %v1880 = vld [vmem:[%s1879] sm:$0x3]
    %1882 = vrot.lane.b32.xlu0 %v1880, 96
    %v1883 = vpop.permute.xlu0 %1882
    %v1885 = vmul.f32 %v1878, %v1883
    %1887 = vrot.lane.b32.xlu0 %v1885, 32
    %v1888 = vpop.permute.xlu0 %1887
    %s1890 = scalar_lea.vmem [#allocation14], 10
    %1891 = vst.msk [vmem:[%s1890] sm:$0x3] %vm348, %v1888
    %v1892 = vld [vmem:[#allocation4 + $0xc] sm:$0x3]
    %1894 = vrot.lane.b32.xlu0 %v1878, 32
    %v1895 = vpop.permute.xlu0 %1894
    %v1896 = vsel %vm243, %v1895, 0
    %1898 = vmatprep.subr.mxu0 0.0
    %1899 = vmatpush1.msra.mxu0 0.0
    %1900 = vmatprep.subr.mxu0 0.0
    %1901 = vmatpush1.msra.mxu0 0.0
    %1902 = vmatprep.subr.mxu0 0.0
    %1903 = vmatpush1.msra.mxu0 0.0
    %1904 = vmatprep.subr.mxu0 0.0
    %1905 = vmatpush1.msra.mxu0 0.0
    %1906 = vmatprep.subr.mxu0 0.0
    %1907 = vmatpush1.msra.mxu0 0.0
    %1908 = vmatprep.subr.mxu0 0.0
    %1909 = vmatpush1.msra.mxu0 0.0
    %1910 = vmatprep.subr.mxu0 0.0
    %1911 = vmatpush1.msra.mxu0 0.0
    %1912 = vmatprep.subr.mxu0 0.0
    %1913 = vmatpush1.msra.mxu0 0.0
    %1914 = vmatprep.subr.mxu0 0.0
    %1915 = vmatpush1.msra.mxu0 0.0
    %1916 = vmatprep.subr.mxu0 0.0
    %1917 = vmatpush1.msra.mxu0 0.0
    %1918 = vmatprep.subr.mxu0 0.0
    %1919 = vmatpush1.msra.mxu0 0.0
    %1920 = vmatprep.subr.mxu0 0.0
    %1921 = vmatpush1.msra.mxu0 0.0
    %1922 = vmatprep.subr.mxu0 0.0
    %1923 = vmatpush1.msra.mxu0 %v1077
    %1924 = vmatprep.subr.mxu0 0.0
    %1925 = vmatpush1.msra.mxu0 %v1076
    %1926 = vmatprep.subr.mxu0 0.0
    %1927 = vmatpush1.msra.mxu0 %v1075
    %1928 = vmatprep.subr.mxu0 0.0
    %1929 = vmatpush1.msra.mxu0 %v1074
    %1930 = vmatprep.subr.mxu0 0.0
    %1931 = vmatpush2.msra.mxu0 0.0
    %1932 = vmatprep.subr.mxu0 0.0
    %1933 = vmatpush2.msra.mxu0 0.0
    %1934 = vmatprep.subr.mxu0 0.0
    %1935 = vmatpush2.msra.mxu0 0.0
    %1936 = vmatprep.subr.mxu0 0.0
    %1937 = vmatpush2.msra.mxu0 0.0
    %1938 = vmatprep.subr.mxu0 0.0
    %1939 = vmatpush2.msra.mxu0 0.0
    %1940 = vmatprep.subr.mxu0 0.0
    %1941 = vmatpush2.msra.mxu0 0.0
    %1942 = vmatprep.subr.mxu0 0.0
    %1943 = vmatpush2.msra.mxu0 0.0
    %1944 = vmatprep.subr.mxu0 0.0
    %1945 = vmatpush2.msra.mxu0 0.0
    %1946 = vmatprep.subr.mxu0 0.0
    %1947 = vmatpush2.msra.mxu0 0.0
    %1948 = vmatprep.subr.mxu0 0.0
    %1949 = vmatpush2.msra.mxu0 0.0
    %1950 = vmatprep.subr.mxu0 0.0
    %1951 = vmatpush2.msra.mxu0 0.0
    %1952 = vmatprep.subr.mxu0 0.0
    %1953 = vmatpush2.msra.mxu0 0.0
    %1954 = vmatprep.subr.mxu0 0.0
    %1955 = vmatpush2.msra.mxu0 0.0
    %1956 = vmatprep.subr.mxu0 0.0
    %1957 = vmatpush2.msra.mxu0 0.0
    %1958 = vmatprep.subr.mxu0 0.0
    %1959 = vmatpush2.msra.mxu0 0.0
    %1960 = vmatprep.subr.mxu0 0.0
    %1961 = vmatpush2.msra.mxu0 0.0
    %1962 = vmatprep.mubr.f32.mxu0 0.0
    %1963 = vmatmul.mubr.f32.gmra.mxu0 %v1896
    %v1964 = vpop.f32.mrf.mxu0
    %v1965 = vadd.f32 0.0, %v1964
    %v1966 = vpop.f32.mrf.mxu0
    %1967 = vdwg.mxu0
    %v1968 = vadd.f32 %v1892, %v1965
    %v1969 = vmul.f32 %v1968, 0.5
    %v1970 = vtanh.pop %v1969
    %v1971 = vadd.f32 %v1970, 1.0
    %v1972 = vmul.f32 %v1971, 0.5
    %v1973 = vtanh.pop %v1968
    %v1974 = vmul.f32 %v1972, %v1872
    %1976 = vrot.lane.b32.xlu0 %v1973, 64
    %v1977 = vpop.permute.xlu0 %1976
    %v1979 = vmul.f32 %v1972, %v1977
    %1981 = vrot.lane.b32.xlu0 %v1979, 32
    %v1982 = vpop.permute.xlu0 %1981
    %v1984 = vadd.f32 %v1974, %v1982
    %v1985 = vtanh.pop %v1984
    %1987 = vrot.lane.b32.xlu0 %v1985, 64
    %v1988 = vpop.permute.xlu0 %1987
    %v1990 = vmul.f32 %v1972, %v1988
    %s1991 = scalar_lea.vmem [#allocation12], 12
    %v1992 = vld [vmem:[%s1991] sm:$0x3]
    %1994 = vrot.lane.b32.xlu0 %v1992, 96
    %v1995 = vpop.permute.xlu0 %1994
    %v1997 = vmul.f32 %v1990, %v1995
    %1999 = vrot.lane.b32.xlu0 %v1997, 32
    %v2000 = vpop.permute.xlu0 %1999
    %s2002 = scalar_lea.vmem [#allocation14], 12
    %2003 = vst.msk [vmem:[%s2002] sm:$0x3] %vm348, %v2000
    %v2004 = vld [vmem:[#allocation4 + $0xe] sm:$0x3]
    %2006 = vrot.lane.b32.xlu0 %v1990, 32
    %v2007 = vpop.permute.xlu0 %2006
    %v2008 = vsel %vm243, %v2007, 0
    %2010 = vmatprep.subr.mxu0 0.0
    %2011 = vmatpush1.msra.mxu0 0.0
    %2012 = vmatprep.subr.mxu0 0.0
    %2013 = vmatpush1.msra.mxu0 0.0
    %2014 = vmatprep.subr.mxu0 0.0
    %2015 = vmatpush1.msra.mxu0 0.0
    %2016 = vmatprep.subr.mxu0 0.0
    %2017 = vmatpush1.msra.mxu0 0.0
    %2018 = vmatprep.subr.mxu0 0.0
    %2019 = vmatpush1.msra.mxu0 0.0
    %2020 = vmatprep.subr.mxu0 0.0
    %2021 = vmatpush1.msra.mxu0 0.0
    %2022 = vmatprep.subr.mxu0 0.0
    %2023 = vmatpush1.msra.mxu0 0.0
    %2024 = vmatprep.subr.mxu0 0.0
    %2025 = vmatpush1.msra.mxu0 0.0
    %2026 = vmatprep.subr.mxu0 0.0
    %2027 = vmatpush1.msra.mxu0 0.0
    %2028 = vmatprep.subr.mxu0 0.0
    %2029 = vmatpush1.msra.mxu0 0.0
    %2030 = vmatprep.subr.mxu0 0.0
    %2031 = vmatpush1.msra.mxu0 0.0
    %2032 = vmatprep.subr.mxu0 0.0
    %2033 = vmatpush1.msra.mxu0 0.0
    %2034 = vmatprep.subr.mxu0 0.0
    %2035 = vmatpush1.msra.mxu0 %v1077
    %2036 = vmatprep.subr.mxu0 0.0
    %2037 = vmatpush1.msra.mxu0 %v1076
    %2038 = vmatprep.subr.mxu0 0.0
    %2039 = vmatpush1.msra.mxu0 %v1075
    %2040 = vmatprep.subr.mxu0 0.0
    %2041 = vmatpush1.msra.mxu0 %v1074
    %2042 = vmatprep.subr.mxu0 0.0
    %2043 = vmatpush2.msra.mxu0 0.0
    %2044 = vmatprep.subr.mxu0 0.0
    %2045 = vmatpush2.msra.mxu0 0.0
    %2046 = vmatprep.subr.mxu0 0.0
    %2047 = vmatpush2.msra.mxu0 0.0
    %2048 = vmatprep.subr.mxu0 0.0
    %2049 = vmatpush2.msra.mxu0 0.0
    %2050 = vmatprep.subr.mxu0 0.0
    %2051 = vmatpush2.msra.mxu0 0.0
    %2052 = vmatprep.subr.mxu0 0.0
    %2053 = vmatpush2.msra.mxu0 0.0
    %2054 = vmatprep.subr.mxu0 0.0
    %2055 = vmatpush2.msra.mxu0 0.0
    %2056 = vmatprep.subr.mxu0 0.0
    %2057 = vmatpush2.msra.mxu0 0.0
    %2058 = vmatprep.subr.mxu0 0.0
    %2059 = vmatpush2.msra.mxu0 0.0
    %2060 = vmatprep.subr.mxu0 0.0
    %2061 = vmatpush2.msra.mxu0 0.0
    %2062 = vmatprep.subr.mxu0 0.0
    %2063 = vmatpush2.msra.mxu0 0.0
    %2064 = vmatprep.subr.mxu0 0.0
    %2065 = vmatpush2.msra.mxu0 0.0
    %2066 = vmatprep.subr.mxu0 0.0
    %2067 = vmatpush2.msra.mxu0 0.0
    %2068 = vmatprep.subr.mxu0 0.0
    %2069 = vmatpush2.msra.mxu0 0.0
    %2070 = vmatprep.subr.mxu0 0.0
    %2071 = vmatpush2.msra.mxu0 0.0
    %2072 = vmatprep.subr.mxu0 0.0
    %2073 = vmatpush2.msra.mxu0 0.0
    %2074 = vmatprep.mubr.f32.mxu0 0.0
    %2075 = vmatmul.mubr.f32.gmra.mxu0 %v2008
    %v2076 = vpop.f32.mrf.mxu0
    %v2077 = vadd.f32 0.0, %v2076
    %v2078 = vpop.f32.mrf.mxu0
    %2079 = vdwg.mxu0
    %v2080 = vadd.f32 %v2004, %v2077
    %v2081 = vmul.f32 %v2080, 0.5
    %v2082 = vtanh.pop %v2081
    %v2083 = vadd.f32 %v2082, 1.0
    %v2084 = vmul.f32 %v2083, 0.5
    %v2085 = vtanh.pop %v2080
    %v2086 = vmul.f32 %v2084, %v1984
    %2088 = vrot.lane.b32.xlu0 %v2085, 64
    %v2089 = vpop.permute.xlu0 %2088
    %v2091 = vmul.f32 %v2084, %v2089
    %2093 = vrot.lane.b32.xlu0 %v2091, 32
    %v2094 = vpop.permute.xlu0 %2093
    %v2096 = vadd.f32 %v2086, %v2094
    %v2097 = vtanh.pop %v2096
    %2099 = vrot.lane.b32.xlu0 %v2097, 64
    %v2100 = vpop.permute.xlu0 %2099
    %v2102 = vmul.f32 %v2084, %v2100
    %s2103 = scalar_lea.vmem [#allocation12], 14
    %v2104 = vld [vmem:[%s2103] sm:$0x3]
    %2106 = vrot.lane.b32.xlu0 %v2104, 96
    %v2107 = vpop.permute.xlu0 %2106
    %v2109 = vmul.f32 %v2102, %v2107
    %2111 = vrot.lane.b32.xlu0 %v2109, 32
    %v2112 = vpop.permute.xlu0 %2111
    %s2114 = scalar_lea.vmem [#allocation14], 14
    %2115 = vst.msk [vmem:[%s2114] sm:$0x3] %vm348, %v2112
    %2117 = vrot.lane.b32.xlu0 %v2102, 32
    %v2118 = vpop.permute.xlu0 %2117
    %2120 = vst.msk [vmem:[%s1216] sm:$0x3] %vm348, %v2118
    %2122 = vrot.lane.b32.xlu0 %v2096, 96
    %v2123 = vpop.permute.xlu0 %2122
    %2125 = vst.msk [vmem:[%s1218] sm:$0x3] %vm348, %v2123
    // Predicated region
    $region54: #{tpu_custom_call.1} parent=1 // pred_check
      _
    $region55: #{tpu_custom_call.1} parent=1 // pred_check_branch
      %2127 = sbr.rel (0) target = $region57
    $region56: #{tpu_custom_call.1} parent=1 // pred_region
      %s2129 = ssub.s32 256, 256
      %2130 = vsyncadd [#allocation8], %s2129
      %s2131 = sshll.u32 [#allocation14], 4
      %s2132 = int_to_ptr.vmem [resolvable:$true] %s2131
      %2137 = dma.vmem_to_hbm [thread:$0]  %s2132, 256, %s8, [#allocation8], 32, 32, 2
    $region57: #{tpu_custom_call.1} parent=1 // pred_fallthru
      _
    // Predicated region
    $region58: #{tpu_custom_call.1} parent=1 // pred_check
      _
    $region59: #{tpu_custom_call.1} parent=1 // pred_check_branch
      %2139 = sbr.rel (0) target = $region61
    $region60: #{tpu_custom_call.1} parent=1 // pred_region
      %2140 = dma.done [#allocation8], 256
    $region61: #{tpu_custom_call.1} parent=1 // pred_fallthru
      _
    %2141 = vsyncpa [#allocation7], 1
    %2142 = vsyncpa [#allocation10], 1
    %2143 = vsyncpa [#allocation13], 1
    %2144 = vsyncpa [#allocation8], 1

</llo_original>
